<compile_context>
chip_gen: v7x
topology: tpu7x:2x2x1
jax: 0.10.0
libtpu: 0.0.40
codegen_flags: <defaults>
</compile_context>

<pallas_src>
import jax
import jax.numpy as jnp
from jax import lax
from jax.experimental import pallas as pl
from jax.experimental.pallas import tpu as pltpu


# ----------------------------------------------------------------------------- args
class Args:
    tok_size, tok_dim = 40, 20
    pos_size, pos_dim = 10, 6
    post_size, post_dim = 12, 6
    rnn_hidden = 16
    rnn_layers = 1          # TODO(synk): only a single LSTM layer is implemented
    bidirect = True
    hidden_dim = 32         # GCN mem_dim (== 2*rnn_hidden here)
    num_layers = 2          # number of GCN layers (kernel below is written for 2)
    num_class = 3
    input_dropout = rnn_dropout = gcn_dropout = 0.0   # eval mode -> identity
    direct = False
    loop = False


# -------------------------------------------------------------------------- kernel
def _gcn_classifier_kernel(
        embs_ref, valid_ref, adj_ref, mask_ref, sel_ref,
        wih_f_ref, whh_f_ref, b_f_ref,
        wih_b_ref, whh_b_ref, b_b_ref,
        wg0_ref, bg0_ref, wg1_ref, bg1_ref,
        wc_ref, bc_ref,
        out_ref,
        gx_f_ref, gx_b_ref, rnn_ref):
    """Fused BiLSTM + 2-layer GCN + aspect-masked mean pooling + classifier.

    embs_ref : (T, B, Din)  time-major embeddings
    valid_ref: (T, B, 1)    1.0 where t < seq_len
    adj_ref  : (B, T, T)    dependency adjacency
    mask_ref : (B*T, 1)     aspect mask, batch-major rows (row = b*T + t)
    sel_ref  : (B, B*T)     block selector, sel[b, b*T + t] = 1
    scratch  : gx_{f,b}: (T, B, 4H) hoisted input projections; rnn: (T, B, 2H)
    """
    T, B, _ = embs_ref.shape
    H = whh_f_ref.shape[0]

    # ---- hoisted input projections: one MXU call per direction replaces 2*T tiny
    #      per-step matmuls on the serial critical path; bias is folded in here too.
    embs = embs_ref[...]
    gx_f_ref[...] = (jnp.einsum('tbd,dg->tbg', embs, wih_f_ref[...],
                                preferred_element_type=jnp.float32)
                     + b_f_ref[...][None])
    gx_b_ref[...] = (jnp.einsum('tbd,dg->tbg', embs, wih_b_ref[...],
                                preferred_element_type=jnp.float32)
                     + b_b_ref[...][None])

    whh_f = whh_f_ref[...]
    whh_b = whh_b_ref[...]

    def lstm_cell(gates, c_prev):
        # gate columns stored [i, f, o, g]: one sigmoid over 3H, one tanh over H.
        sig = jax.nn.sigmoid(gates[:, :3 * H])
        i_g = sig[:, 0 * H:1 * H]
        f_g = sig[:, 1 * H:2 * H]
        o_g = sig[:, 2 * H:3 * H]
        g_g = jnp.tanh(gates[:, 3 * H:4 * H])
        c_new = f_g * c_prev + i_g * g_g
        h_new = o_g * jnp.tanh(c_new)
        return h_new, c_new

    def step(i, carry):
        hf, cf, hb, cb = carry
        tb = T - 1 - i
        m_f = valid_ref[i]                     # (B, 1)
        m_b = valid_ref[tb]
        # forward chain at time i, backward chain at time T-1-i: two independent
        # recurrences in one loop body so their matmul/EUP latencies overlap.
        gates_f = gx_f_ref[i] + jnp.dot(hf, whh_f, preferred_element_type=jnp.float32)
        gates_b = gx_b_ref[tb] + jnp.dot(hb, whh_b, preferred_element_type=jnp.float32)
        hf_new, cf_new = lstm_cell(gates_f, cf)
        hb_new, cb_new = lstm_cell(gates_b, cb)
        # pack_padded_sequence semantics: padded steps emit zeros and do not advance
        # the carries (so the backward pass effectively starts at seq_len-1).
        rnn_ref[i, :, pl.ds(0, H)] = m_f * hf_new
        rnn_ref[tb, :, pl.ds(H, H)] = m_b * hb_new
        hf = m_f * hf_new + (1.0 - m_f) * hf
        cf = m_f * cf_new + (1.0 - m_f) * cf
        hb = m_b * hb_new + (1.0 - m_b) * hb
        cb = m_b * cb_new + (1.0 - m_b) * cb
        return hf, cf, hb, cb

    z = jnp.zeros((B, H), jnp.float32)
    lax.fori_loop(0, T, step, (z, z, z, z), unroll=True)

    # ---- GCN head -----------------------------------------------------------------
    rnn = rnn_ref[...]                                           # (T, B, 2H)
    # Per-example time-major -> row-major extraction via masked sublane reduction
    # (avoids a general (T,B,2H)->(B,T,2H) transpose inside the kernel).
    b_iota = lax.broadcasted_iota(jnp.int32, (1, B, 1), 1)
    x_rows = [jnp.sum(rnn * (b_iota == b).astype(jnp.float32), axis=1)   # (T, 2H)
              for b in range(B)]
    adj_rows = [adj_ref[b] for b in range(B)]                    # (T, T) each

    # denominator reciprocal computed once (EUP), reused by both GCN layers.
    inv_denom = pl.reciprocal(
        jnp.concatenate([jnp.sum(a, axis=1, keepdims=True) + 1.0 for a in adj_rows],
                        axis=0),
        approx=True)                                             # (B*T, 1)

    def gcn_layer(h_rows, w_ref, b_ref):
        # adj bmm stays per example (true batched matmul); the Linear runs as one
        # flattened (B*T, d) @ (d, mem) MXU matmul for better row occupancy.
        ax = jnp.concatenate(
            [jnp.dot(adj_rows[b], h_rows[b], preferred_element_type=jnp.float32)
             for b in range(B)], axis=0)                         # (B*T, d)
        axw = jnp.dot(ax, w_ref[...], preferred_element_type=jnp.float32) + b_ref[...]
        return jnp.maximum(axw * inv_denom, 0.0)                 # (B*T, mem)

    h = gcn_layer(x_rows, wg0_ref, bg0_ref)
    h = gcn_layer([h[b * T:(b + 1) * T, :] for b in range(B)], wg1_ref, bg1_ref)

    # aspect-masked mean pooling as one selector matmul, then the classifier Linear.
    mask = mask_ref[...]                                         # (B*T, 1)
    sel = sel_ref[...]                                           # (B, B*T)
    pooled_sum = jnp.dot(sel, h * mask, preferred_element_type=jnp.float32)   # (B, mem)
    asp_num = jnp.dot(sel, mask, preferred_element_type=jnp.float32)          # (B, 1)
    asp_num = jnp.maximum(asp_num, 1.0)        # guard all-zero aspect masks (div-by-0)
    pooled = pooled_sum * pl.reciprocal(asp_num, approx=True)
    logits = jnp.dot(pooled, wc_ref[...], preferred_element_type=jnp.float32) + bc_ref[...]
    out_ref[...] = logits.astype(out_ref.dtype)


# ---------------------------------------------------------------------------- glue
def build_adj(dephead, seq_len, T, self_loop=False):
    # TODO(synk): head_to_tree / tree_to_adj sources are not provided; this
    # reconstructs the standard undirected dependency adjacency (edge i <-> head(i)-1).
    idx = jnp.arange(T)
    valid = (idx[None, :] < seq_len[:, None])
    has_head = (dephead > 0) & valid
    one_hot = jax.nn.one_hot(dephead - 1, T, dtype=jnp.float32)        # (B, T, T)
    adj = one_hot * has_head[:, :, None].astype(jnp.float32)
    adj = adj + jnp.swapaxes(adj, 1, 2)                                # undirected
    adj = jnp.minimum(adj, 1.0)
    if self_loop:
        eye = jnp.eye(T, dtype=jnp.float32)[None]
        adj = jnp.maximum(adj, eye * valid[:, :, None].astype(jnp.float32))
    return adj


def init_params(key, args):
    H = args.rnn_hidden
    Din = args.tok_dim + args.pos_dim + args.post_dim
    mem = args.hidden_dim
    ks = jax.random.split(key, 16)

    def norm(k, shape, scale=0.1):
        return scale * jax.random.normal(k, shape, jnp.float32)

    tok_emb = norm(ks[0], (args.tok_size, args.tok_dim)).at[0].set(0.0)   # padding_idx=0
    pos_emb = norm(ks[1], (args.pos_size, args.pos_dim)).at[0].set(0.0)
    post_emb = norm(ks[2], (args.post_size, args.post_dim)).at[0].set(0.0)
    return dict(
        tok_emb=tok_emb, pos_emb=pos_emb, post_emb=post_emb,
        # LSTM weights stored pre-transposed: (in, 4H) / (H, 4H); biases (1, 4H).
        # Gate-column order is [i, f, o, g] (permutation of PyTorch's [i, f, g, o]).
        wih_f=norm(ks[3], (Din, 4 * H)), whh_f=norm(ks[4], (H, 4 * H)), b_f=norm(ks[5], (1, 4 * H)),
        wih_b=norm(ks[6], (Din, 4 * H)), whh_b=norm(ks[7], (H, 4 * H)), b_b=norm(ks[8], (1, 4 * H)),
        # GCN MLP layers (treated as single Linear), stored as (in, out)
        # TODO(synk): MLP class source not provided; modeled as one Linear per layer.
        wg0=norm(ks[9], (2 * H, mem)), bg0=norm(ks[10], (1, mem)),
        wg1=norm(ks[11], (mem, mem)), bg1=norm(ks[12], (1, mem)),
        # classifier
        wc=norm(ks[13], (mem, args.num_class)), bc=norm(ks[14], (1, args.num_class)),
    )


def gcn_classifier_forward(params, args, aspmask, words, seq_len, dephead, pos, post):
    B, T = words.shape
    H = args.rnn_hidden
    vmem = pl.BlockSpec(memory_space=pltpu.MemorySpace.VMEM)

    # embedding lookups + concat (XLA glue); dropout layers are identity (eval)
    embs = jnp.concatenate([params['tok_emb'][words],
                            params['pos_emb'][pos],
                            params['post_emb'][post]], axis=-1).astype(jnp.float32)
    embs_tb = jnp.transpose(embs, (1, 0, 2))                           # (T, B, Din)

    idx = jnp.arange(T)
    valid_tb = (idx[:, None] < seq_len[None, :]).astype(jnp.float32)[:, :, None]   # (T,B,1)

    adj = build_adj(dephead, seq_len, T, self_loop=args.loop)          # (B, T, T)
    mask_flat = aspmask.astype(jnp.float32).reshape(B * T, 1)          # (B*T, 1)
    sel = jnp.repeat(jnp.eye(B, dtype=jnp.float32), T, axis=1)         # (B, B*T)

    # ---- single fused kernel: BiLSTM + GCN + pooling + classifier
    # TODO(synk): at production B, add a grid over batch with dimension_semantics
    # ("parallel",) so v7x's two TensorCores shard independent sequences.
    logits = pl.pallas_call(
        _gcn_classifier_kernel,
        out_shape=jax.ShapeDtypeStruct((B, args.num_class), jnp.float32),
        in_specs=[vmem] * 17,
        out_specs=vmem,
        scratch_shapes=[
            pltpu.VMEM((T, B, 4 * H), jnp.float32),   # hoisted x@Wih + b, forward
            pltpu.VMEM((T, B, 4 * H), jnp.float32),   # hoisted x@Wih + b, backward
            pltpu.VMEM((T, B, 2 * H), jnp.float32),   # BiLSTM output (fwd | bwd)
        ],
    )(embs_tb, valid_tb, adj, mask_flat, sel,
      params['wih_f'], params['whh_f'], params['b_f'],
      params['wih_b'], params['whh_b'], params['b_b'],
      params['wg0'], params['bg0'], params['wg1'], params['bg1'],
      params['wc'], params['bc'])
    return logits


# ---------------------------------------------------------------------------- main
if __name__ == "__main__":
    args = Args()
    key = jax.random.PRNGKey(0)
    kp, kw, kpos, kpost = jax.random.split(key, 4)
    params = init_params(kp, args)

    B, T = 2, 8
    seq_len = jnp.array([8, 6], jnp.int32)                 # maxlen == T
    idx = jnp.arange(T)
    valid = (idx[None, :] < seq_len[:, None])

    words = jnp.where(valid, jax.random.randint(kw, (B, T), 1, args.tok_size), 0).astype(jnp.int32)
    pos = jnp.where(valid, jax.random.randint(kpos, (B, T), 1, args.pos_size), 0).astype(jnp.int32)
    post = jnp.where(valid, jax.random.randint(kpost, (B, T), 1, args.post_size), 0).astype(jnp.int32)
    dephead = jnp.where(valid, jnp.broadcast_to(idx[None, :], (B, T)), 0).astype(jnp.int32)  # chain tree
    aspmask = jnp.zeros((B, T), jnp.float32).at[:, 2:4].set(1.0)

    out = gcn_classifier_forward(params, args, aspmask, words, seq_len, dephead, pos, post)
    out = jax.block_until_ready(out)
    assert out.shape == (B, args.num_class) and out.dtype == jnp.float32
    assert bool(jnp.all(jnp.isfinite(out)))
    print("KERNEL_OK")
</pallas_src>

<mosaic_0001>
module attributes {stable_mosaic.version = 11 : i64} {
  func.func @_gcn_classifier_kernel(%arg0: memref<8x2x32xf32, #tpu.memory_space<vmem>>, %arg1: memref<8x2x1xf32, #tpu.memory_space<vmem>>, %arg2: memref<2x8x8xf32, #tpu.memory_space<vmem>>, %arg3: memref<16x1xf32, #tpu.memory_space<vmem>>, %arg4: memref<2x16xf32, #tpu.memory_space<vmem>>, %arg5: memref<32x64xf32, #tpu.memory_space<vmem>>, %arg6: memref<16x64xf32, #tpu.memory_space<vmem>>, %arg7: memref<1x64xf32, #tpu.memory_space<vmem>>, %arg8: memref<32x64xf32, #tpu.memory_space<vmem>>, %arg9: memref<16x64xf32, #tpu.memory_space<vmem>>, %arg10: memref<1x64xf32, #tpu.memory_space<vmem>>, %arg11: memref<32x32xf32, #tpu.memory_space<vmem>>, %arg12: memref<1x32xf32, #tpu.memory_space<vmem>>, %arg13: memref<32x32xf32, #tpu.memory_space<vmem>>, %arg14: memref<1x32xf32, #tpu.memory_space<vmem>>, %arg15: memref<32x3xf32, #tpu.memory_space<vmem>>, %arg16: memref<1x3xf32, #tpu.memory_space<vmem>>, %arg17: memref<2x3xf32, #tpu.memory_space<vmem>>, %arg18: memref<8x2x64xf32, #tpu.memory_space<vmem>>, %arg19: memref<8x2x64xf32, #tpu.memory_space<vmem>>, %arg20: memref<8x2x32xf32, #tpu.memory_space<vmem>>) attributes {dimension_semantics = [], scalar_prefetch = 0 : i64, scratch_operands = 3 : i64, tpu.core_type = #tpu.core_type<tc>} {
    %c0 = arith.constant 0 : index
    %c0_0 = arith.constant 0 : index
    %c0_1 = arith.constant 0 : index
    %0 = vector.load %arg0[%c0, %c0_0, %c0_1] : memref<8x2x32xf32, #tpu.memory_space<vmem>>, vector<8x2x32xf32>
    %c0_2 = arith.constant 0 : index
    %c0_3 = arith.constant 0 : index
    %1 = vector.load %arg5[%c0_2, %c0_3] : memref<32x64xf32, #tpu.memory_space<vmem>>, vector<32x64xf32>
    "tpu.trace_start"() <{level = 10 : i32, message = "tbd,dg->tbg"}> : () -> ()
    %cst = arith.constant dense<0.000000e+00> : vector<8x2x64xf32>
    %2 = tpu.matmul %0, %1, %cst {dimension_numbers = #tpu.dot_dimension_numbers<[2], [0], [0, 1], [1], [0, 0, 0, 1, 1, 1], [], []>} : vector<8x2x32xf32>, vector<32x64xf32>, vector<8x2x64xf32> -> vector<8x2x64xf32>
    "tpu.trace_stop"() : () -> ()
    %c0_4 = arith.constant 0 : index
    %c0_5 = arith.constant 0 : index
    %3 = vector.load %arg7[%c0_4, %c0_5] : memref<1x64xf32, #tpu.memory_space<vmem>>, vector<1x64xf32>
    %4 = vector.shape_cast %3 : vector<1x64xf32> to vector<1x1x64xf32>
    %5 = vector.broadcast %4 : vector<1x1x64xf32> to vector<8x2x64xf32>
    %6 = arith.addf %2, %5 : vector<8x2x64xf32>
    %c0_6 = arith.constant 0 : index
    %c0_7 = arith.constant 0 : index
    %c0_8 = arith.constant 0 : index
    %7 = vector.load %arg18[%c0_6, %c0_7, %c0_8] : memref<8x2x64xf32, #tpu.memory_space<vmem>>, vector<8x2x64xf32>
    tpu.vector_store %arg18[%c0_6, %c0_7, %c0_8], %6 {strides = array<i32>} : memref<8x2x64xf32, #tpu.memory_space<vmem>>, vector<8x2x64xf32>,
    %c0_9 = arith.constant 0 : index
    %c0_10 = arith.constant 0 : index
    %8 = vector.load %arg8[%c0_9, %c0_10] : memref<32x64xf32, #tpu.memory_space<vmem>>, vector<32x64xf32>
    "tpu.trace_start"() <{level = 10 : i32, message = "tbd,dg->tbg"}> : () -> ()
    %cst_11 = arith.constant dense<0.000000e+00> : vector<8x2x64xf32>
    %9 = tpu.matmul %0, %8, %cst_11 {dimension_numbers = #tpu.dot_dimension_numbers<[2], [0], [0, 1], [1], [0, 0, 0, 1, 1, 1], [], []>} : vector<8x2x32xf32>, vector<32x64xf32>, vector<8x2x64xf32> -> vector<8x2x64xf32>
    "tpu.trace_stop"() : () -> ()
    %c0_12 = arith.constant 0 : index
    %c0_13 = arith.constant 0 : index
    %10 = vector.load %arg10[%c0_12, %c0_13] : memref<1x64xf32, #tpu.memory_space<vmem>>, vector<1x64xf32>
    %11 = vector.shape_cast %10 : vector<1x64xf32> to vector<1x1x64xf32>
    %12 = vector.broadcast %11 : vector<1x1x64xf32> to vector<8x2x64xf32>
    %13 = arith.addf %9, %12 : vector<8x2x64xf32>
    %c0_14 = arith.constant 0 : index
    %c0_15 = arith.constant 0 : index
    %c0_16 = arith.constant 0 : index
    %14 = vector.load %arg19[%c0_14, %c0_15, %c0_16] : memref<8x2x64xf32, #tpu.memory_space<vmem>>, vector<8x2x64xf32>
    tpu.vector_store %arg19[%c0_14, %c0_15, %c0_16], %13 {strides = array<i32>} : memref<8x2x64xf32, #tpu.memory_space<vmem>>, vector<8x2x64xf32>,
    %c0_17 = arith.constant 0 : index
    %c0_18 = arith.constant 0 : index
    %15 = vector.load %arg6[%c0_17, %c0_18] : memref<16x64xf32, #tpu.memory_space<vmem>>, vector<16x64xf32>
    %c0_19 = arith.constant 0 : index
    %c0_20 = arith.constant 0 : index
    %16 = vector.load %arg9[%c0_19, %c0_20] : memref<16x64xf32, #tpu.memory_space<vmem>>, vector<16x64xf32>
    %cst_21 = arith.constant 0.000000e+00 : f32
    %17 = vector.broadcast %cst_21 : f32 to vector<2x16xf32>
    %c0_i32 = arith.constant 0 : i32
    %c7_i32 = arith.constant 7 : i32
    %18 = arith.subi %c7_i32, %c0_i32 : i32
    %19 = arith.index_cast %c0_i32 : i32 to index
    %c0_22 = arith.constant 0 : index
    %c0_23 = arith.constant 0 : index
    %20 = vector.load %arg1[%19, %c0_22, %c0_23] : memref<8x2x1xf32, #tpu.memory_space<vmem>>, vector<1x2x1xf32>
    %21 = vector.shape_cast %20 : vector<1x2x1xf32> to vector<2x1xf32>
    %22 = arith.index_cast %18 : i32 to index
    %c0_24 = arith.constant 0 : index
    %c0_25 = arith.constant 0 : index
    %23 = vector.load %arg1[%22, %c0_24, %c0_25] : memref<8x2x1xf32, #tpu.memory_space<vmem>>, vector<1x2x1xf32>
    %24 = vector.shape_cast %23 : vector<1x2x1xf32> to vector<2x1xf32>
    %25 = arith.index_cast %c0_i32 : i32 to index
    %c0_26 = arith.constant 0 : index
    %c0_27 = arith.constant 0 : index
    %26 = vector.load %arg18[%25, %c0_26, %c0_27] : memref<8x2x64xf32, #tpu.memory_space<vmem>>, vector<1x2x64xf32>
    %27 = vector.shape_cast %26 : vector<1x2x64xf32> to vector<2x64xf32>
    %cst_28 = arith.constant dense<0.000000e+00> : vector<2x64xf32>
    %28 = tpu.matmul %17, %15, %cst_28 {dimension_numbers = #tpu.dot_dimension_numbers<[1], [0], [0], [1], [0, 0, 1, 1], [], []>} : vector<2x16xf32>, vector<16x64xf32>, vector<2x64xf32> -> vector<2x64xf32>
    %29 = arith.addf %27, %28 : vector<2x64xf32>
    %30 = arith.index_cast %18 : i32 to index
    %c0_29 = arith.constant 0 : index
    %c0_30 = arith.constant 0 : index
    %31 = vector.load %arg19[%30, %c0_29, %c0_30] : memref<8x2x64xf32, #tpu.memory_space<vmem>>, vector<1x2x64xf32>
    %32 = vector.shape_cast %31 : vector<1x2x64xf32> to vector<2x64xf32>
    %cst_31 = arith.constant dense<0.000000e+00> : vector<2x64xf32>
    %33 = tpu.matmul %17, %16, %cst_31 {dimension_numbers = #tpu.dot_dimension_numbers<[1], [0], [0], [1], [0, 0, 1, 1], [], []>} : vector<2x16xf32>, vector<16x64xf32>, vector<2x64xf32> -> vector<2x64xf32>
    %34 = arith.addf %32, %33 : vector<2x64xf32>
    %35 = vector.extract_strided_slice %29 {offsets = [0, 0], sizes = [2, 48], strides = [1, 1]} : vector<2x64xf32> to vector<2x48xf32>
    %36 = arith.negf %35 : vector<2x48xf32>
    %37 = math.exp %36 : vector<2x48xf32>
    %cst_32 = arith.constant 1.000000e+00 : f32
    %38 = vector.broadcast %cst_32 : f32 to vector<2x48xf32>
    %39 = arith.addf %38, %37 : vector<2x48xf32>
    %40 = arith.divf %38, %39 : vector<2x48xf32>
    %41 = vector.extract_strided_slice %40 {offsets = [0, 0], sizes = [2, 16], strides = [1, 1]} : vector<2x48xf32> to vector<2x16xf32>
    %42 = vector.extract_strided_slice %40 {offsets = [0, 16], sizes = [2, 16], strides = [1, 1]} : vector<2x48xf32> to vector<2x16xf32>
    %43 = vector.extract_strided_slice %40 {offsets = [0, 32], sizes = [2, 16], strides = [1, 1]} : vector<2x48xf32> to vector<2x16xf32>
    %44 = vector.extract_strided_slice %29 {offsets = [0, 48], sizes = [2, 16], strides = [1, 1]} : vector<2x64xf32> to vector<2x16xf32>
    %45 = math.tanh %44 : vector<2x16xf32>
    %46 = arith.mulf %42, %17 : vector<2x16xf32>
    %47 = arith.mulf %41, %45 : vector<2x16xf32>
    %48 = arith.addf %46, %47 : vector<2x16xf32>
    %49 = math.tanh %48 : vector<2x16xf32>
    %50 = arith.mulf %43, %49 : vector<2x16xf32>
    %51 = vector.extract_strided_slice %34 {offsets = [0, 0], sizes = [2, 48], strides = [1, 1]} : vector<2x64xf32> to vector<2x48xf32>
    %52 = arith.negf %51 : vector<2x48xf32>
    %53 = math.exp %52 : vector<2x48xf32>
    %cst_33 = arith.constant 1.000000e+00 : f32
    %54 = vector.broadcast %cst_33 : f32 to vector<2x48xf32>
    %55 = arith.addf %54, %53 : vector<2x48xf32>
    %56 = arith.divf %54, %55 : vector<2x48xf32>
    %57 = vector.extract_strided_slice %56 {offsets = [0, 0], sizes = [2, 16], strides = [1, 1]} : vector<2x48xf32> to vector<2x16xf32>
    %58 = vector.extract_strided_slice %56 {offsets = [0, 16], sizes = [2, 16], strides = [1, 1]} : vector<2x48xf32> to vector<2x16xf32>
    %59 = vector.extract_strided_slice %56 {offsets = [0, 32], sizes = [2, 16], strides = [1, 1]} : vector<2x48xf32> to vector<2x16xf32>
    %60 = vector.extract_strided_slice %34 {offsets = [0, 48], sizes = [2, 16], strides = [1, 1]} : vector<2x64xf32> to vector<2x16xf32>
    %61 = math.tanh %60 : vector<2x16xf32>
    %62 = arith.mulf %58, %17 : vector<2x16xf32>
    %63 = arith.mulf %57, %61 : vector<2x16xf32>
    %64 = arith.addf %62, %63 : vector<2x16xf32>
    %65 = math.tanh %64 : vector<2x16xf32>
    %66 = arith.mulf %59, %65 : vector<2x16xf32>
    %67 = vector.broadcast %21 : vector<2x1xf32> to vector<2x16xf32>
    %68 = arith.mulf %67, %50 : vector<2x16xf32>
    %69 = arith.index_cast %c0_i32 : i32 to index
    %c0_34 = arith.constant 0 : index
    %c0_35 = arith.constant 0 : index
    %70 = vector.load %arg20[%69, %c0_34, %c0_35] : memref<8x2x32xf32, #tpu.memory_space<vmem>>, vector<1x2x16xf32>
    %71 = vector.shape_cast %70 : vector<1x2x16xf32> to vector<2x16xf32>
    %72 = vector.shape_cast %68 : vector<2x16xf32> to vector<1x2x16xf32>
    tpu.vector_store %arg20[%69, %c0_34, %c0_35], %72 {strides = array<i32>} : memref<8x2x32xf32, #tpu.memory_space<vmem>>, vector<1x2x16xf32>,
    %73 = vector.broadcast %24 : vector<2x1xf32> to vector<2x16xf32>
    %74 = arith.mulf %73, %66 : vector<2x16xf32>
    %75 = arith.index_cast %18 : i32 to index
    %c0_36 = arith.constant 0 : index
    %c16 = arith.constant 16 : index
    %76 = vector.load %arg20[%75, %c0_36, %c16] : memref<8x2x32xf32, #tpu.memory_space<vmem>>, vector<1x2x16xf32>
    %77 = vector.shape_cast %76 : vector<1x2x16xf32> to vector<2x16xf32>
    %78 = vector.shape_cast %74 : vector<2x16xf32> to vector<1x2x16xf32>
    tpu.vector_store %arg20[%75, %c0_36, %c16], %78 {strides = array<i32>} : memref<8x2x32xf32, #tpu.memory_space<vmem>>, vector<1x2x16xf32>,
    %79 = vector.broadcast %21 : vector<2x1xf32> to vector<2x16xf32>
    %80 = arith.mulf %79, %50 : vector<2x16xf32>
    %cst_37 = arith.constant 1.000000e+00 : f32
    %81 = vector.broadcast %cst_37 : f32 to vector<2x1xf32>
    %82 = arith.subf %81, %21 : vector<2x1xf32>
    %83 = vector.broadcast %82 : vector<2x1xf32> to vector<2x16xf32>
    %84 = arith.mulf %83, %17 : vector<2x16xf32>
    %85 = arith.addf %80, %84 : vector<2x16xf32>
    %86 = vector.broadcast %21 : vector<2x1xf32> to vector<2x16xf32>
    %87 = arith.mulf %86, %48 : vector<2x16xf32>
    %cst_38 = arith.constant 1.000000e+00 : f32
    %88 = vector.broadcast %cst_38 : f32 to vector<2x1xf32>
    %89 = arith.subf %88, %21 : vector<2x1xf32>
    %90 = vector.broadcast %89 : vector<2x1xf32> to vector<2x16xf32>
    %91 = arith.mulf %90, %17 : vector<2x16xf32>
    %92 = arith.addf %87, %91 : vector<2x16xf32>
    %93 = vector.broadcast %24 : vector<2x1xf32> to vector<2x16xf32>
    %94 = arith.mulf %93, %66 : vector<2x16xf32>
    %cst_39 = arith.constant 1.000000e+00 : f32
    %95 = vector.broadcast %cst_39 : f32 to vector<2x1xf32>
    %96 = arith.subf %95, %24 : vector<2x1xf32>
    %97 = vector.broadcast %96 : vector<2x1xf32> to vector<2x16xf32>
    %98 = arith.mulf %97, %17 : vector<2x16xf32>
    %99 = arith.addf %94, %98 : vector<2x16xf32>
    %100 = vector.broadcast %24 : vector<2x1xf32> to vector<2x16xf32>
    %101 = arith.mulf %100, %64 : vector<2x16xf32>
    %cst_40 = arith.constant 1.000000e+00 : f32
    %102 = vector.broadcast %cst_40 : f32 to vector<2x1xf32>
    %103 = arith.subf %102, %24 : vector<2x1xf32>
    %104 = vector.broadcast %103 : vector<2x1xf32> to vector<2x16xf32>
    %105 = arith.mulf %104, %17 : vector<2x16xf32>
    %106 = arith.addf %101, %105 : vector<2x16xf32>
    %c1_i32 = arith.constant 1 : i32
    %c7_i32_41 = arith.constant 7 : i32
    %107 = arith.subi %c7_i32_41, %c1_i32 : i32
    %108 = arith.index_cast %c1_i32 : i32 to index
    %c0_42 = arith.constant 0 : index
    %c0_43 = arith.constant 0 : index
    %109 = vector.load %arg1[%108, %c0_42, %c0_43] : memref<8x2x1xf32, #tpu.memory_space<vmem>>, vector<1x2x1xf32>
    %110 = vector.shape_cast %109 : vector<1x2x1xf32> to vector<2x1xf32>
    %111 = arith.index_cast %107 : i32 to index
    %c0_44 = arith.constant 0 : index
    %c0_45 = arith.constant 0 : index
    %112 = vector.load %arg1[%111, %c0_44, %c0_45] : memref<8x2x1xf32, #tpu.memory_space<vmem>>, vector<1x2x1xf32>
    %113 = vector.shape_cast %112 : vector<1x2x1xf32> to vector<2x1xf32>
    %114 = arith.index_cast %c1_i32 : i32 to index
    %c0_46 = arith.constant 0 : index
    %c0_47 = arith.constant 0 : index
    %115 = vector.load %arg18[%114, %c0_46, %c0_47] : memref<8x2x64xf32, #tpu.memory_space<vmem>>, vector<1x2x64xf32>
    %116 = vector.shape_cast %115 : vector<1x2x64xf32> to vector<2x64xf32>
    %cst_48 = arith.constant dense<0.000000e+00> : vector<2x64xf32>
    %117 = tpu.matmul %85, %15, %cst_48 {dimension_numbers = #tpu.dot_dimension_numbers<[1], [0], [0], [1], [0, 0, 1, 1], [], []>} : vector<2x16xf32>, vector<16x64xf32>, vector<2x64xf32> -> vector<2x64xf32>
    %118 = arith.addf %116, %117 : vector<2x64xf32>
    %119 = arith.index_cast %107 : i32 to index
    %c0_49 = arith.constant 0 : index
    %c0_50 = arith.constant 0 : index
    %120 = vector.load %arg19[%119, %c0_49, %c0_50] : memref<8x2x64xf32, #tpu.memory_space<vmem>>, vector<1x2x64xf32>
    %121 = vector.shape_cast %120 : vector<1x2x64xf32> to vector<2x64xf32>
    %cst_51 = arith.constant dense<0.000000e+00> : vector<2x64xf32>
    %122 = tpu.matmul %99, %16, %cst_51 {dimension_numbers = #tpu.dot_dimension_numbers<[1], [0], [0], [1], [0, 0, 1, 1], [], []>} : vector<2x16xf32>, vector<16x64xf32>, vector<2x64xf32> -> vector<2x64xf32>
    %123 = arith.addf %121, %122 : vector<2x64xf32>
    %124 = vector.extract_strided_slice %118 {offsets = [0, 0], sizes = [2, 48], strides = [1, 1]} : vector<2x64xf32> to vector<2x48xf32>
    %125 = arith.negf %124 : vector<2x48xf32>
    %126 = math.exp %125 : vector<2x48xf32>
    %cst_52 = arith.constant 1.000000e+00 : f32
    %127 = vector.broadcast %cst_52 : f32 to vector<2x48xf32>
    %128 = arith.addf %127, %126 : vector<2x48xf32>
    %129 = arith.divf %127, %128 : vector<2x48xf32>
    %130 = vector.extract_strided_slice %129 {offsets = [0, 0], sizes = [2, 16], strides = [1, 1]} : vector<2x48xf32> to vector<2x16xf32>
    %131 = vector.extract_strided_slice %129 {offsets = [0, 16], sizes = [2, 16], strides = [1, 1]} : vector<2x48xf32> to vector<2x16xf32>
    %132 = vector.extract_strided_slice %129 {offsets = [0, 32], sizes = [2, 16], strides = [1, 1]} : vector<2x48xf32> to vector<2x16xf32>
    %133 = vector.extract_strided_slice %118 {offsets = [0, 48], sizes = [2, 16], strides = [1, 1]} : vector<2x64xf32> to vector<2x16xf32>
    %134 = math.tanh %133 : vector<2x16xf32>
    %135 = arith.mulf %131, %92 : vector<2x16xf32>
    %136 = arith.mulf %130, %134 : vector<2x16xf32>
    %137 = arith.addf %135, %136 : vector<2x16xf32>
    %138 = math.tanh %137 : vector<2x16xf32>
    %139 = arith.mulf %132, %138 : vector<2x16xf32>
    %140 = vector.extract_strided_slice %123 {offsets = [0, 0], sizes = [2, 48], strides = [1, 1]} : vector<2x64xf32> to vector<2x48xf32>
    %141 = arith.negf %140 : vector<2x48xf32>
    %142 = math.exp %141 : vector<2x48xf32>
    %cst_53 = arith.constant 1.000000e+00 : f32
    %143 = vector.broadcast %cst_53 : f32 to vector<2x48xf32>
    %144 = arith.addf %143, %142 : vector<2x48xf32>
    %145 = arith.divf %143, %144 : vector<2x48xf32>
    %146 = vector.extract_strided_slice %145 {offsets = [0, 0], sizes = [2, 16], strides = [1, 1]} : vector<2x48xf32> to vector<2x16xf32>
    %147 = vector.extract_strided_slice %145 {offsets = [0, 16], sizes = [2, 16], strides = [1, 1]} : vector<2x48xf32> to vector<2x16xf32>
    %148 = vector.extract_strided_slice %145 {offsets = [0, 32], sizes = [2, 16], strides = [1, 1]} : vector<2x48xf32> to vector<2x16xf32>
    %149 = vector.extract_strided_slice %123 {offsets = [0, 48], sizes = [2, 16], strides = [1, 1]} : vector<2x64xf32> to vector<2x16xf32>
    %150 = math.tanh %149 : vector<2x16xf32>
    %151 = arith.mulf %147, %106 : vector<2x16xf32>
    %152 = arith.mulf %146, %150 : vector<2x16xf32>
    %153 = arith.addf %151, %152 : vector<2x16xf32>
    %154 = math.tanh %153 : vector<2x16xf32>
    %155 = arith.mulf %148, %154 : vector<2x16xf32>
    %156 = vector.broadcast %110 : vector<2x1xf32> to vector<2x16xf32>
    %157 = arith.mulf %156, %139 : vector<2x16xf32>
    %158 = arith.index_cast %c1_i32 : i32 to index
    %c0_54 = arith.constant 0 : index
    %c0_55 = arith.constant 0 : index
    %159 = vector.load %arg20[%158, %c0_54, %c0_55] : memref<8x2x32xf32, #tpu.memory_space<vmem>>, vector<1x2x16xf32>
    %160 = vector.shape_cast %159 : vector<1x2x16xf32> to vector<2x16xf32>
    %161 = vector.shape_cast %157 : vector<2x16xf32> to vector<1x2x16xf32>
    tpu.vector_store %arg20[%158, %c0_54, %c0_55], %161 {strides = array<i32>} : memref<8x2x32xf32, #tpu.memory_space<vmem>>, vector<1x2x16xf32>,
    %162 = vector.broadcast %113 : vector<2x1xf32> to vector<2x16xf32>
    %163 = arith.mulf %162, %155 : vector<2x16xf32>
    %164 = arith.index_cast %107 : i32 to index
    %c0_56 = arith.constant 0 : index
    %c16_57 = arith.constant 16 : index
    %165 = vector.load %arg20[%164, %c0_56, %c16_57] : memref<8x2x32xf32, #tpu.memory_space<vmem>>, vector<1x2x16xf32>
    %166 = vector.shape_cast %165 : vector<1x2x16xf32> to vector<2x16xf32>
    %167 = vector.shape_cast %163 : vector<2x16xf32> to vector<1x2x16xf32>
    tpu.vector_store %arg20[%164, %c0_56, %c16_57], %167 {strides = array<i32>} : memref<8x2x32xf32, #tpu.memory_space<vmem>>, vector<1x2x16xf32>,
    %168 = vector.broadcast %110 : vector<2x1xf32> to vector<2x16xf32>
    %169 = arith.mulf %168, %139 : vector<2x16xf32>
    %cst_58 = arith.constant 1.000000e+00 : f32
    %170 = vector.broadcast %cst_58 : f32 to vector<2x1xf32>
    %171 = arith.subf %170, %110 : vector<2x1xf32>
    %172 = vector.broadcast %171 : vector<2x1xf32> to vector<2x16xf32>
    %173 = arith.mulf %172, %85 : vector<2x16xf32>
    %174 = arith.addf %169, %173 : vector<2x16xf32>
    %175 = vector.broadcast %110 : vector<2x1xf32> to vector<2x16xf32>
    %176 = arith.mulf %175, %137 : vector<2x16xf32>
    %cst_59 = arith.constant 1.000000e+00 : f32
    %177 = vector.broadcast %cst_59 : f32 to vector<2x1xf32>
    %178 = arith.subf %177, %110 : vector<2x1xf32>
    %179 = vector.broadcast %178 : vector<2x1xf32> to vector<2x16xf32>
    %180 = arith.mulf %179, %92 : vector<2x16xf32>
    %181 = arith.addf %176, %180 : vector<2x16xf32>
    %182 = vector.broadcast %113 : vector<2x1xf32> to vector<2x16xf32>
    %183 = arith.mulf %182, %155 : vector<2x16xf32>
    %cst_60 = arith.constant 1.000000e+00 : f32
    %184 = vector.broadcast %cst_60 : f32 to vector<2x1xf32>
    %185 = arith.subf %184, %113 : vector<2x1xf32>
    %186 = vector.broadcast %185 : vector<2x1xf32> to vector<2x16xf32>
    %187 = arith.mulf %186, %99 : vector<2x16xf32>
    %188 = arith.addf %183, %187 : vector<2x16xf32>
    %189 = vector.broadcast %113 : vector<2x1xf32> to vector<2x16xf32>
    %190 = arith.mulf %189, %153 : vector<2x16xf32>
    %cst_61 = arith.constant 1.000000e+00 : f32
    %191 = vector.broadcast %cst_61 : f32 to vector<2x1xf32>
    %192 = arith.subf %191, %113 : vector<2x1xf32>
    %193 = vector.broadcast %192 : vector<2x1xf32> to vector<2x16xf32>
    %194 = arith.mulf %193, %106 : vector<2x16xf32>
    %195 = arith.addf %190, %194 : vector<2x16xf32>
    %c2_i32 = arith.constant 2 : i32
    %c7_i32_62 = arith.constant 7 : i32
    %196 = arith.subi %c7_i32_62, %c2_i32 : i32
    %197 = arith.index_cast %c2_i32 : i32 to index
    %c0_63 = arith.constant 0 : index
    %c0_64 = arith.constant 0 : index
    %198 = vector.load %arg1[%197, %c0_63, %c0_64] : memref<8x2x1xf32, #tpu.memory_space<vmem>>, vector<1x2x1xf32>
    %199 = vector.shape_cast %198 : vector<1x2x1xf32> to vector<2x1xf32>
    %200 = arith.index_cast %196 : i32 to index
    %c0_65 = arith.constant 0 : index
    %c0_66 = arith.constant 0 : index
    %201 = vector.load %arg1[%200, %c0_65, %c0_66] : memref<8x2x1xf32, #tpu.memory_space<vmem>>, vector<1x2x1xf32>
    %202 = vector.shape_cast %201 : vector<1x2x1xf32> to vector<2x1xf32>
    %203 = arith.index_cast %c2_i32 : i32 to index
    %c0_67 = arith.constant 0 : index
    %c0_68 = arith.constant 0 : index
    %204 = vector.load %arg18[%203, %c0_67, %c0_68] : memref<8x2x64xf32, #tpu.memory_space<vmem>>, vector<1x2x64xf32>
    %205 = vector.shape_cast %204 : vector<1x2x64xf32> to vector<2x64xf32>
    %cst_69 = arith.constant dense<0.000000e+00> : vector<2x64xf32>
    %206 = tpu.matmul %174, %15, %cst_69 {dimension_numbers = #tpu.dot_dimension_numbers<[1], [0], [0], [1], [0, 0, 1, 1], [], []>} : vector<2x16xf32>, vector<16x64xf32>, vector<2x64xf32> -> vector<2x64xf32>
    %207 = arith.addf %205, %206 : vector<2x64xf32>
    %208 = arith.index_cast %196 : i32 to index
    %c0_70 = arith.constant 0 : index
    %c0_71 = arith.constant 0 : index
    %209 = vector.load %arg19[%208, %c0_70, %c0_71] : memref<8x2x64xf32, #tpu.memory_space<vmem>>, vector<1x2x64xf32>
    %210 = vector.shape_cast %209 : vector<1x2x64xf32> to vector<2x64xf32>
    %cst_72 = arith.constant dense<0.000000e+00> : vector<2x64xf32>
    %211 = tpu.matmul %188, %16, %cst_72 {dimension_numbers = #tpu.dot_dimension_numbers<[1], [0], [0], [1], [0, 0, 1, 1], [], []>} : vector<2x16xf32>, vector<16x64xf32>, vector<2x64xf32> -> vector<2x64xf32>
    %212 = arith.addf %210, %211 : vector<2x64xf32>
    %213 = vector.extract_strided_slice %207 {offsets = [0, 0], sizes = [2, 48], strides = [1, 1]} : vector<2x64xf32> to vector<2x48xf32>
    %214 = arith.negf %213 : vector<2x48xf32>
    %215 = math.exp %214 : vector<2x48xf32>
    %cst_73 = arith.constant 1.000000e+00 : f32
    %216 = vector.broadcast %cst_73 : f32 to vector<2x48xf32>
    %217 = arith.addf %216, %215 : vector<2x48xf32>
    %218 = arith.divf %216, %217 : vector<2x48xf32>
    %219 = vector.extract_strided_slice %218 {offsets = [0, 0], sizes = [2, 16], strides = [1, 1]} : vector<2x48xf32> to vector<2x16xf32>
    %220 = vector.extract_strided_slice %218 {offsets = [0, 16], sizes = [2, 16], strides = [1, 1]} : vector<2x48xf32> to vector<2x16xf32>
    %221 = vector.extract_strided_slice %218 {offsets = [0, 32], sizes = [2, 16], strides = [1, 1]} : vector<2x48xf32> to vector<2x16xf32>
    %222 = vector.extract_strided_slice %207 {offsets = [0, 48], sizes = [2, 16], strides = [1, 1]} : vector<2x64xf32> to vector<2x16xf32>
    %223 = math.tanh %222 : vector<2x16xf32>
    %224 = arith.mulf %220, %181 : vector<2x16xf32>
    %225 = arith.mulf %219, %223 : vector<2x16xf32>
    %226 = arith.addf %224, %225 : vector<2x16xf32>
    %227 = math.tanh %226 : vector<2x16xf32>
    %228 = arith.mulf %221, %227 : vector<2x16xf32>
    %229 = vector.extract_strided_slice %212 {offsets = [0, 0], sizes = [2, 48], strides = [1, 1]} : vector<2x64xf32> to vector<2x48xf32>
    %230 = arith.negf %229 : vector<2x48xf32>
    %231 = math.exp %230 : vector<2x48xf32>
    %cst_74 = arith.constant 1.000000e+00 : f32
    %232 = vector.broadcast %cst_74 : f32 to vector<2x48xf32>
    %233 = arith.addf %232, %231 : vector<2x48xf32>
    %234 = arith.divf %232, %233 : vector<2x48xf32>
    %235 = vector.extract_strided_slice %234 {offsets = [0, 0], sizes = [2, 16], strides = [1, 1]} : vector<2x48xf32> to vector<2x16xf32>
    %236 = vector.extract_strided_slice %234 {offsets = [0, 16], sizes = [2, 16], strides = [1, 1]} : vector<2x48xf32> to vector<2x16xf32>
    %237 = vector.extract_strided_slice %234 {offsets = [0, 32], sizes = [2, 16], strides = [1, 1]} : vector<2x48xf32> to vector<2x16xf32>
    %238 = vector.extract_strided_slice %212 {offsets = [0, 48], sizes = [2, 16], strides = [1, 1]} : vector<2x64xf32> to vector<2x16xf32>
    %239 = math.tanh %238 : vector<2x16xf32>
    %240 = arith.mulf %236, %195 : vector<2x16xf32>
    %241 = arith.mulf %235, %239 : vector<2x16xf32>
    %242 = arith.addf %240, %241 : vector<2x16xf32>
    %243 = math.tanh %242 : vector<2x16xf32>
    %244 = arith.mulf %237, %243 : vector<2x16xf32>
    %245 = vector.broadcast %199 : vector<2x1xf32> to vector<2x16xf32>
    %246 = arith.mulf %245, %228 : vector<2x16xf32>
    %247 = arith.index_cast %c2_i32 : i32 to index
    %c0_75 = arith.constant 0 : index
    %c0_76 = arith.constant 0 : index
    %248 = vector.load %arg20[%247, %c0_75, %c0_76] : memref<8x2x32xf32, #tpu.memory_space<vmem>>, vector<1x2x16xf32>
    %249 = vector.shape_cast %248 : vector<1x2x16xf32> to vector<2x16xf32>
    %250 = vector.shape_cast %246 : vector<2x16xf32> to vector<1x2x16xf32>
    tpu.vector_store %arg20[%247, %c0_75, %c0_76], %250 {strides = array<i32>} : memref<8x2x32xf32, #tpu.memory_space<vmem>>, vector<1x2x16xf32>,
    %251 = vector.broadcast %202 : vector<2x1xf32> to vector<2x16xf32>
    %252 = arith.mulf %251, %244 : vector<2x16xf32>
    %253 = arith.index_cast %196 : i32 to index
    %c0_77 = arith.constant 0 : index
    %c16_78 = arith.constant 16 : index
    %254 = vector.load %arg20[%253, %c0_77, %c16_78] : memref<8x2x32xf32, #tpu.memory_space<vmem>>, vector<1x2x16xf32>
    %255 = vector.shape_cast %254 : vector<1x2x16xf32> to vector<2x16xf32>
    %256 = vector.shape_cast %252 : vector<2x16xf32> to vector<1x2x16xf32>
    tpu.vector_store %arg20[%253, %c0_77, %c16_78], %256 {strides = array<i32>} : memref<8x2x32xf32, #tpu.memory_space<vmem>>, vector<1x2x16xf32>,
    %257 = vector.broadcast %199 : vector<2x1xf32> to vector<2x16xf32>
    %258 = arith.mulf %257, %228 : vector<2x16xf32>
    %cst_79 = arith.constant 1.000000e+00 : f32
    %259 = vector.broadcast %cst_79 : f32 to vector<2x1xf32>
    %260 = arith.subf %259, %199 : vector<2x1xf32>
    %261 = vector.broadcast %260 : vector<2x1xf32> to vector<2x16xf32>
    %262 = arith.mulf %261, %174 : vector<2x16xf32>
    %263 = arith.addf %258, %262 : vector<2x16xf32>
    %264 = vector.broadcast %199 : vector<2x1xf32> to vector<2x16xf32>
    %265 = arith.mulf %264, %226 : vector<2x16xf32>
    %cst_80 = arith.constant 1.000000e+00 : f32
    %266 = vector.broadcast %cst_80 : f32 to vector<2x1xf32>
    %267 = arith.subf %266, %199 : vector<2x1xf32>
    %268 = vector.broadcast %267 : vector<2x1xf32> to vector<2x16xf32>
    %269 = arith.mulf %268, %181 : vector<2x16xf32>
    %270 = arith.addf %265, %269 : vector<2x16xf32>
    %271 = vector.broadcast %202 : vector<2x1xf32> to vector<2x16xf32>
    %272 = arith.mulf %271, %244 : vector<2x16xf32>
    %cst_81 = arith.constant 1.000000e+00 : f32
    %273 = vector.broadcast %cst_81 : f32 to vector<2x1xf32>
    %274 = arith.subf %273, %202 : vector<2x1xf32>
    %275 = vector.broadcast %274 : vector<2x1xf32> to vector<2x16xf32>
    %276 = arith.mulf %275, %188 : vector<2x16xf32>
    %277 = arith.addf %272, %276 : vector<2x16xf32>
    %278 = vector.broadcast %202 : vector<2x1xf32> to vector<2x16xf32>
    %279 = arith.mulf %278, %242 : vector<2x16xf32>
    %cst_82 = arith.constant 1.000000e+00 : f32
    %280 = vector.broadcast %cst_82 : f32 to vector<2x1xf32>
    %281 = arith.subf %280, %202 : vector<2x1xf32>
    %282 = vector.broadcast %281 : vector<2x1xf32> to vector<2x16xf32>
    %283 = arith.mulf %282, %195 : vector<2x16xf32>
    %284 = arith.addf %279, %283 : vector<2x16xf32>
    %c3_i32 = arith.constant 3 : i32
    %c7_i32_83 = arith.constant 7 : i32
    %285 = arith.subi %c7_i32_83, %c3_i32 : i32
    %286 = arith.index_cast %c3_i32 : i32 to index
    %c0_84 = arith.constant 0 : index
    %c0_85 = arith.constant 0 : index
    %287 = vector.load %arg1[%286, %c0_84, %c0_85] : memref<8x2x1xf32, #tpu.memory_space<vmem>>, vector<1x2x1xf32>
    %288 = vector.shape_cast %287 : vector<1x2x1xf32> to vector<2x1xf32>
    %289 = arith.index_cast %285 : i32 to index
    %c0_86 = arith.constant 0 : index
    %c0_87 = arith.constant 0 : index
    %290 = vector.load %arg1[%289, %c0_86, %c0_87] : memref<8x2x1xf32, #tpu.memory_space<vmem>>, vector<1x2x1xf32>
    %291 = vector.shape_cast %290 : vector<1x2x1xf32> to vector<2x1xf32>
    %292 = arith.index_cast %c3_i32 : i32 to index
    %c0_88 = arith.constant 0 : index
    %c0_89 = arith.constant 0 : index
    %293 = vector.load %arg18[%292, %c0_88, %c0_89] : memref<8x2x64xf32, #tpu.memory_space<vmem>>, vector<1x2x64xf32>
    %294 = vector.shape_cast %293 : vector<1x2x64xf32> to vector<2x64xf32>
    %cst_90 = arith.constant dense<0.000000e+00> : vector<2x64xf32>
    %295 = tpu.matmul %263, %15, %cst_90 {dimension_numbers = #tpu.dot_dimension_numbers<[1], [0], [0], [1], [0, 0, 1, 1], [], []>} : vector<2x16xf32>, vector<16x64xf32>, vector<2x64xf32> -> vector<2x64xf32>
    %296 = arith.addf %294, %295 : vector<2x64xf32>
    %297 = arith.index_cast %285 : i32 to index
    %c0_91 = arith.constant 0 : index
    %c0_92 = arith.constant 0 : index
    %298 = vector.load %arg19[%297, %c0_91, %c0_92] : memref<8x2x64xf32, #tpu.memory_space<vmem>>, vector<1x2x64xf32>
    %299 = vector.shape_cast %298 : vector<1x2x64xf32> to vector<2x64xf32>
    %cst_93 = arith.constant dense<0.000000e+00> : vector<2x64xf32>
    %300 = tpu.matmul %277, %16, %cst_93 {dimension_numbers = #tpu.dot_dimension_numbers<[1], [0], [0], [1], [0, 0, 1, 1], [], []>} : vector<2x16xf32>, vector<16x64xf32>, vector<2x64xf32> -> vector<2x64xf32>
    %301 = arith.addf %299, %300 : vector<2x64xf32>
    %302 = vector.extract_strided_slice %296 {offsets = [0, 0], sizes = [2, 48], strides = [1, 1]} : vector<2x64xf32> to vector<2x48xf32>
    %303 = arith.negf %302 : vector<2x48xf32>
    %304 = math.exp %303 : vector<2x48xf32>
    %cst_94 = arith.constant 1.000000e+00 : f32
    %305 = vector.broadcast %cst_94 : f32 to vector<2x48xf32>
    %306 = arith.addf %305, %304 : vector<2x48xf32>
    %307 = arith.divf %305, %306 : vector<2x48xf32>
    %308 = vector.extract_strided_slice %307 {offsets = [0, 0], sizes = [2, 16], strides = [1, 1]} : vector<2x48xf32> to vector<2x16xf32>
    %309 = vector.extract_strided_slice %307 {offsets = [0, 16], sizes = [2, 16], strides = [1, 1]} : vector<2x48xf32> to vector<2x16xf32>
    %310 = vector.extract_strided_slice %307 {offsets = [0, 32], sizes = [2, 16], strides = [1, 1]} : vector<2x48xf32> to vector<2x16xf32>
    %311 = vector.extract_strided_slice %296 {offsets = [0, 48], sizes = [2, 16], strides = [1, 1]} : vector<2x64xf32> to vector<2x16xf32>
    %312 = math.tanh %311 : vector<2x16xf32>
    %313 = arith.mulf %309, %270 : vector<2x16xf32>
    %314 = arith.mulf %308, %312 : vector<2x16xf32>
    %315 = arith.addf %313, %314 : vector<2x16xf32>
    %316 = math.tanh %315 : vector<2x16xf32>
    %317 = arith.mulf %310, %316 : vector<2x16xf32>
    %318 = vector.extract_strided_slice %301 {offsets = [0, 0], sizes = [2, 48], strides = [1, 1]} : vector<2x64xf32> to vector<2x48xf32>
    %319 = arith.negf %318 : vector<2x48xf32>
    %320 = math.exp %319 : vector<2x48xf32>
    %cst_95 = arith.constant 1.000000e+00 : f32
    %321 = vector.broadcast %cst_95 : f32 to vector<2x48xf32>
    %322 = arith.addf %321, %320 : vector<2x48xf32>
    %323 = arith.divf %321, %322 : vector<2x48xf32>
    %324 = vector.extract_strided_slice %323 {offsets = [0, 0], sizes = [2, 16], strides = [1, 1]} : vector<2x48xf32> to vector<2x16xf32>
    %325 = vector.extract_strided_slice %323 {offsets = [0, 16], sizes = [2, 16], strides = [1, 1]} : vector<2x48xf32> to vector<2x16xf32>
    %326 = vector.extract_strided_slice %323 {offsets = [0, 32], sizes = [2, 16], strides = [1, 1]} : vector<2x48xf32> to vector<2x16xf32>
    %327 = vector.extract_strided_slice %301 {offsets = [0, 48], sizes = [2, 16], strides = [1, 1]} : vector<2x64xf32> to vector<2x16xf32>
    %328 = math.tanh %327 : vector<2x16xf32>
    %329 = arith.mulf %325, %284 : vector<2x16xf32>
    %330 = arith.mulf %324, %328 : vector<2x16xf32>
    %331 = arith.addf %329, %330 : vector<2x16xf32>
    %332 = math.tanh %331 : vector<2x16xf32>
    %333 = arith.mulf %326, %332 : vector<2x16xf32>
    %334 = vector.broadcast %288 : vector<2x1xf32> to vector<2x16xf32>
    %335 = arith.mulf %334, %317 : vector<2x16xf32>
    %336 = arith.index_cast %c3_i32 : i32 to index
    %c0_96 = arith.constant 0 : index
    %c0_97 = arith.constant 0 : index
    %337 = vector.load %arg20[%336, %c0_96, %c0_97] : memref<8x2x32xf32, #tpu.memory_space<vmem>>, vector<1x2x16xf32>
    %338 = vector.shape_cast %337 : vector<1x2x16xf32> to vector<2x16xf32>
    %339 = vector.shape_cast %335 : vector<2x16xf32> to vector<1x2x16xf32>
    tpu.vector_store %arg20[%336, %c0_96, %c0_97], %339 {strides = array<i32>} : memref<8x2x32xf32, #tpu.memory_space<vmem>>, vector<1x2x16xf32>,
    %340 = vector.broadcast %291 : vector<2x1xf32> to vector<2x16xf32>
    %341 = arith.mulf %340, %333 : vector<2x16xf32>
    %342 = arith.index_cast %285 : i32 to index
    %c0_98 = arith.constant 0 : index
    %c16_99 = arith.constant 16 : index
    %343 = vector.load %arg20[%342, %c0_98, %c16_99] : memref<8x2x32xf32, #tpu.memory_space<vmem>>, vector<1x2x16xf32>
    %344 = vector.shape_cast %343 : vector<1x2x16xf32> to vector<2x16xf32>
    %345 = vector.shape_cast %341 : vector<2x16xf32> to vector<1x2x16xf32>
    tpu.vector_store %arg20[%342, %c0_98, %c16_99], %345 {strides = array<i32>} : memref<8x2x32xf32, #tpu.memory_space<vmem>>, vector<1x2x16xf32>,
    %346 = vector.broadcast %288 : vector<2x1xf32> to vector<2x16xf32>
    %347 = arith.mulf %346, %317 : vector<2x16xf32>
    %cst_100 = arith.constant 1.000000e+00 : f32
    %348 = vector.broadcast %cst_100 : f32 to vector<2x1xf32>
    %349 = arith.subf %348, %288 : vector<2x1xf32>
    %350 = vector.broadcast %349 : vector<2x1xf32> to vector<2x16xf32>
    %351 = arith.mulf %350, %263 : vector<2x16xf32>
    %352 = arith.addf %347, %351 : vector<2x16xf32>
    %353 = vector.broadcast %288 : vector<2x1xf32> to vector<2x16xf32>
    %354 = arith.mulf %353, %315 : vector<2x16xf32>
    %cst_101 = arith.constant 1.000000e+00 : f32
    %355 = vector.broadcast %cst_101 : f32 to vector<2x1xf32>
    %356 = arith.subf %355, %288 : vector<2x1xf32>
    %357 = vector.broadcast %356 : vector<2x1xf32> to vector<2x16xf32>
    %358 = arith.mulf %357, %270 : vector<2x16xf32>
    %359 = arith.addf %354, %358 : vector<2x16xf32>
    %360 = vector.broadcast %291 : vector<2x1xf32> to vector<2x16xf32>
    %361 = arith.mulf %360, %333 : vector<2x16xf32>
    %cst_102 = arith.constant 1.000000e+00 : f32
    %362 = vector.broadcast %cst_102 : f32 to vector<2x1xf32>
    %363 = arith.subf %362, %291 : vector<2x1xf32>
    %364 = vector.broadcast %363 : vector<2x1xf32> to vector<2x16xf32>
    %365 = arith.mulf %364, %277 : vector<2x16xf32>
    %366 = arith.addf %361, %365 : vector<2x16xf32>
    %367 = vector.broadcast %291 : vector<2x1xf32> to vector<2x16xf32>
    %368 = arith.mulf %367, %331 : vector<2x16xf32>
    %cst_103 = arith.constant 1.000000e+00 : f32
    %369 = vector.broadcast %cst_103 : f32 to vector<2x1xf32>
    %370 = arith.subf %369, %291 : vector<2x1xf32>
    %371 = vector.broadcast %370 : vector<2x1xf32> to vector<2x16xf32>
    %372 = arith.mulf %371, %284 : vector<2x16xf32>
    %373 = arith.addf %368, %372 : vector<2x16xf32>
    %c4_i32 = arith.constant 4 : i32
    %c7_i32_104 = arith.constant 7 : i32
    %374 = arith.subi %c7_i32_104, %c4_i32 : i32
    %375 = arith.index_cast %c4_i32 : i32 to index
    %c0_105 = arith.constant 0 : index
    %c0_106 = arith.constant 0 : index
    %376 = vector.load %arg1[%375, %c0_105, %c0_106] : memref<8x2x1xf32, #tpu.memory_space<vmem>>, vector<1x2x1xf32>
    %377 = vector.shape_cast %376 : vector<1x2x1xf32> to vector<2x1xf32>
    %378 = arith.index_cast %374 : i32 to index
    %c0_107 = arith.constant 0 : index
    %c0_108 = arith.constant 0 : index
    %379 = vector.load %arg1[%378, %c0_107, %c0_108] : memref<8x2x1xf32, #tpu.memory_space<vmem>>, vector<1x2x1xf32>
    %380 = vector.shape_cast %379 : vector<1x2x1xf32> to vector<2x1xf32>
    %381 = arith.index_cast %c4_i32 : i32 to index
    %c0_109 = arith.constant 0 : index
    %c0_110 = arith.constant 0 : index
    %382 = vector.load %arg18[%381, %c0_109, %c0_110] : memref<8x2x64xf32, #tpu.memory_space<vmem>>, vector<1x2x64xf32>
    %383 = vector.shape_cast %382 : vector<1x2x64xf32> to vector<2x64xf32>
    %cst_111 = arith.constant dense<0.000000e+00> : vector<2x64xf32>
    %384 = tpu.matmul %352, %15, %cst_111 {dimension_numbers = #tpu.dot_dimension_numbers<[1], [0], [0], [1], [0, 0, 1, 1], [], []>} : vector<2x16xf32>, vector<16x64xf32>, vector<2x64xf32> -> vector<2x64xf32>
    %385 = arith.addf %383, %384 : vector<2x64xf32>
    %386 = arith.index_cast %374 : i32 to index
    %c0_112 = arith.constant 0 : index
    %c0_113 = arith.constant 0 : index
    %387 = vector.load %arg19[%386, %c0_112, %c0_113] : memref<8x2x64xf32, #tpu.memory_space<vmem>>, vector<1x2x64xf32>
    %388 = vector.shape_cast %387 : vector<1x2x64xf32> to vector<2x64xf32>
    %cst_114 = arith.constant dense<0.000000e+00> : vector<2x64xf32>
    %389 = tpu.matmul %366, %16, %cst_114 {dimension_numbers = #tpu.dot_dimension_numbers<[1], [0], [0], [1], [0, 0, 1, 1], [], []>} : vector<2x16xf32>, vector<16x64xf32>, vector<2x64xf32> -> vector<2x64xf32>
    %390 = arith.addf %388, %389 : vector<2x64xf32>
    %391 = vector.extract_strided_slice %385 {offsets = [0, 0], sizes = [2, 48], strides = [1, 1]} : vector<2x64xf32> to vector<2x48xf32>
    %392 = arith.negf %391 : vector<2x48xf32>
    %393 = math.exp %392 : vector<2x48xf32>
    %cst_115 = arith.constant 1.000000e+00 : f32
    %394 = vector.broadcast %cst_115 : f32 to vector<2x48xf32>
    %395 = arith.addf %394, %393 : vector<2x48xf32>
    %396 = arith.divf %394, %395 : vector<2x48xf32>
    %397 = vector.extract_strided_slice %396 {offsets = [0, 0], sizes = [2, 16], strides = [1, 1]} : vector<2x48xf32> to vector<2x16xf32>
    %398 = vector.extract_strided_slice %396 {offsets = [0, 16], sizes = [2, 16], strides = [1, 1]} : vector<2x48xf32> to vector<2x16xf32>
    %399 = vector.extract_strided_slice %396 {offsets = [0, 32], sizes = [2, 16], strides = [1, 1]} : vector<2x48xf32> to vector<2x16xf32>
    %400 = vector.extract_strided_slice %385 {offsets = [0, 48], sizes = [2, 16], strides = [1, 1]} : vector<2x64xf32> to vector<2x16xf32>
    %401 = math.tanh %400 : vector<2x16xf32>
    %402 = arith.mulf %398, %359 : vector<2x16xf32>
    %403 = arith.mulf %397, %401 : vector<2x16xf32>
    %404 = arith.addf %402, %403 : vector<2x16xf32>
    %405 = math.tanh %404 : vector<2x16xf32>
    %406 = arith.mulf %399, %405 : vector<2x16xf32>
    %407 = vector.extract_strided_slice %390 {offsets = [0, 0], sizes = [2, 48], strides = [1, 1]} : vector<2x64xf32> to vector<2x48xf32>
    %408 = arith.negf %407 : vector<2x48xf32>
    %409 = math.exp %408 : vector<2x48xf32>
    %cst_116 = arith.constant 1.000000e+00 : f32
    %410 = vector.broadcast %cst_116 : f32 to vector<2x48xf32>
    %411 = arith.addf %410, %409 : vector<2x48xf32>
    %412 = arith.divf %410, %411 : vector<2x48xf32>
    %413 = vector.extract_strided_slice %412 {offsets = [0, 0], sizes = [2, 16], strides = [1, 1]} : vector<2x48xf32> to vector<2x16xf32>
    %414 = vector.extract_strided_slice %412 {offsets = [0, 16], sizes = [2, 16], strides = [1, 1]} : vector<2x48xf32> to vector<2x16xf32>
    %415 = vector.extract_strided_slice %412 {offsets = [0, 32], sizes = [2, 16], strides = [1, 1]} : vector<2x48xf32> to vector<2x16xf32>
    %416 = vector.extract_strided_slice %390 {offsets = [0, 48], sizes = [2, 16], strides = [1, 1]} : vector<2x64xf32> to vector<2x16xf32>
    %417 = math.tanh %416 : vector<2x16xf32>
    %418 = arith.mulf %414, %373 : vector<2x16xf32>
    %419 = arith.mulf %413, %417 : vector<2x16xf32>
    %420 = arith.addf %418, %419 : vector<2x16xf32>
    %421 = math.tanh %420 : vector<2x16xf32>
    %422 = arith.mulf %415, %421 : vector<2x16xf32>
    %423 = vector.broadcast %377 : vector<2x1xf32> to vector<2x16xf32>
    %424 = arith.mulf %423, %406 : vector<2x16xf32>
    %425 = arith.index_cast %c4_i32 : i32 to index
    %c0_117 = arith.constant 0 : index
    %c0_118 = arith.constant 0 : index
    %426 = vector.load %arg20[%425, %c0_117, %c0_118] : memref<8x2x32xf32, #tpu.memory_space<vmem>>, vector<1x2x16xf32>
    %427 = vector.shape_cast %426 : vector<1x2x16xf32> to vector<2x16xf32>
    %428 = vector.shape_cast %424 : vector<2x16xf32> to vector<1x2x16xf32>
    tpu.vector_store %arg20[%425, %c0_117, %c0_118], %428 {strides = array<i32>} : memref<8x2x32xf32, #tpu.memory_space<vmem>>, vector<1x2x16xf32>,
    %429 = vector.broadcast %380 : vector<2x1xf32> to vector<2x16xf32>
    %430 = arith.mulf %429, %422 : vector<2x16xf32>
    %431 = arith.index_cast %374 : i32 to index
    %c0_119 = arith.constant 0 : index
    %c16_120 = arith.constant 16 : index
    %432 = vector.load %arg20[%431, %c0_119, %c16_120] : memref<8x2x32xf32, #tpu.memory_space<vmem>>, vector<1x2x16xf32>
    %433 = vector.shape_cast %432 : vector<1x2x16xf32> to vector<2x16xf32>
    %434 = vector.shape_cast %430 : vector<2x16xf32> to vector<1x2x16xf32>
    tpu.vector_store %arg20[%431, %c0_119, %c16_120], %434 {strides = array<i32>} : memref<8x2x32xf32, #tpu.memory_space<vmem>>, vector<1x2x16xf32>,
    %435 = vector.broadcast %377 : vector<2x1xf32> to vector<2x16xf32>
    %436 = arith.mulf %435, %406 : vector<2x16xf32>
    %cst_121 = arith.constant 1.000000e+00 : f32
    %437 = vector.broadcast %cst_121 : f32 to vector<2x1xf32>
    %438 = arith.subf %437, %377 : vector<2x1xf32>
    %439 = vector.broadcast %438 : vector<2x1xf32> to vector<2x16xf32>
    %440 = arith.mulf %439, %352 : vector<2x16xf32>
    %441 = arith.addf %436, %440 : vector<2x16xf32>
    %442 = vector.broadcast %377 : vector<2x1xf32> to vector<2x16xf32>
    %443 = arith.mulf %442, %404 : vector<2x16xf32>
    %cst_122 = arith.constant 1.000000e+00 : f32
    %444 = vector.broadcast %cst_122 : f32 to vector<2x1xf32>
    %445 = arith.subf %444, %377 : vector<2x1xf32>
    %446 = vector.broadcast %445 : vector<2x1xf32> to vector<2x16xf32>
    %447 = arith.mulf %446, %359 : vector<2x16xf32>
    %448 = arith.addf %443, %447 : vector<2x16xf32>
    %449 = vector.broadcast %380 : vector<2x1xf32> to vector<2x16xf32>
    %450 = arith.mulf %449, %422 : vector<2x16xf32>
    %cst_123 = arith.constant 1.000000e+00 : f32
    %451 = vector.broadcast %cst_123 : f32 to vector<2x1xf32>
    %452 = arith.subf %451, %380 : vector<2x1xf32>
    %453 = vector.broadcast %452 : vector<2x1xf32> to vector<2x16xf32>
    %454 = arith.mulf %453, %366 : vector<2x16xf32>
    %455 = arith.addf %450, %454 : vector<2x16xf32>
    %456 = vector.broadcast %380 : vector<2x1xf32> to vector<2x16xf32>
    %457 = arith.mulf %456, %420 : vector<2x16xf32>
    %cst_124 = arith.constant 1.000000e+00 : f32
    %458 = vector.broadcast %cst_124 : f32 to vector<2x1xf32>
    %459 = arith.subf %458, %380 : vector<2x1xf32>
    %460 = vector.broadcast %459 : vector<2x1xf32> to vector<2x16xf32>
    %461 = arith.mulf %460, %373 : vector<2x16xf32>
    %462 = arith.addf %457, %461 : vector<2x16xf32>
    %c5_i32 = arith.constant 5 : i32
    %c7_i32_125 = arith.constant 7 : i32
    %463 = arith.subi %c7_i32_125, %c5_i32 : i32
    %464 = arith.index_cast %c5_i32 : i32 to index
    %c0_126 = arith.constant 0 : index
    %c0_127 = arith.constant 0 : index
    %465 = vector.load %arg1[%464, %c0_126, %c0_127] : memref<8x2x1xf32, #tpu.memory_space<vmem>>, vector<1x2x1xf32>
    %466 = vector.shape_cast %465 : vector<1x2x1xf32> to vector<2x1xf32>
    %467 = arith.index_cast %463 : i32 to index
    %c0_128 = arith.constant 0 : index
    %c0_129 = arith.constant 0 : index
    %468 = vector.load %arg1[%467, %c0_128, %c0_129] : memref<8x2x1xf32, #tpu.memory_space<vmem>>, vector<1x2x1xf32>
    %469 = vector.shape_cast %468 : vector<1x2x1xf32> to vector<2x1xf32>
    %470 = arith.index_cast %c5_i32 : i32 to index
    %c0_130 = arith.constant 0 : index
    %c0_131 = arith.constant 0 : index
    %471 = vector.load %arg18[%470, %c0_130, %c0_131] : memref<8x2x64xf32, #tpu.memory_space<vmem>>, vector<1x2x64xf32>
    %472 = vector.shape_cast %471 : vector<1x2x64xf32> to vector<2x64xf32>
    %cst_132 = arith.constant dense<0.000000e+00> : vector<2x64xf32>
    %473 = tpu.matmul %441, %15, %cst_132 {dimension_numbers = #tpu.dot_dimension_numbers<[1], [0], [0], [1], [0, 0, 1, 1], [], []>} : vector<2x16xf32>, vector<16x64xf32>, vector<2x64xf32> -> vector<2x64xf32>
    %474 = arith.addf %472, %473 : vector<2x64xf32>
    %475 = arith.index_cast %463 : i32 to index
    %c0_133 = arith.constant 0 : index
    %c0_134 = arith.constant 0 : index
    %476 = vector.load %arg19[%475, %c0_133, %c0_134] : memref<8x2x64xf32, #tpu.memory_space<vmem>>, vector<1x2x64xf32>
    %477 = vector.shape_cast %476 : vector<1x2x64xf32> to vector<2x64xf32>
    %cst_135 = arith.constant dense<0.000000e+00> : vector<2x64xf32>
    %478 = tpu.matmul %455, %16, %cst_135 {dimension_numbers = #tpu.dot_dimension_numbers<[1], [0], [0], [1], [0, 0, 1, 1], [], []>} : vector<2x16xf32>, vector<16x64xf32>, vector<2x64xf32> -> vector<2x64xf32>
    %479 = arith.addf %477, %478 : vector<2x64xf32>
    %480 = vector.extract_strided_slice %474 {offsets = [0, 0], sizes = [2, 48], strides = [1, 1]} : vector<2x64xf32> to vector<2x48xf32>
    %481 = arith.negf %480 : vector<2x48xf32>
    %482 = math.exp %481 : vector<2x48xf32>
    %cst_136 = arith.constant 1.000000e+00 : f32
    %483 = vector.broadcast %cst_136 : f32 to vector<2x48xf32>
    %484 = arith.addf %483, %482 : vector<2x48xf32>
    %485 = arith.divf %483, %484 : vector<2x48xf32>
    %486 = vector.extract_strided_slice %485 {offsets = [0, 0], sizes = [2, 16], strides = [1, 1]} : vector<2x48xf32> to vector<2x16xf32>
    %487 = vector.extract_strided_slice %485 {offsets = [0, 16], sizes = [2, 16], strides = [1, 1]} : vector<2x48xf32> to vector<2x16xf32>
    %488 = vector.extract_strided_slice %485 {offsets = [0, 32], sizes = [2, 16], strides = [1, 1]} : vector<2x48xf32> to vector<2x16xf32>
    %489 = vector.extract_strided_slice %474 {offsets = [0, 48], sizes = [2, 16], strides = [1, 1]} : vector<2x64xf32> to vector<2x16xf32>
    %490 = math.tanh %489 : vector<2x16xf32>
    %491 = arith.mulf %487, %448 : vector<2x16xf32>
    %492 = arith.mulf %486, %490 : vector<2x16xf32>
    %493 = arith.addf %491, %492 : vector<2x16xf32>
    %494 = math.tanh %493 : vector<2x16xf32>
    %495 = arith.mulf %488, %494 : vector<2x16xf32>
    %496 = vector.extract_strided_slice %479 {offsets = [0, 0], sizes = [2, 48], strides = [1, 1]} : vector<2x64xf32> to vector<2x48xf32>
    %497 = arith.negf %496 : vector<2x48xf32>
    %498 = math.exp %497 : vector<2x48xf32>
    %cst_137 = arith.constant 1.000000e+00 : f32
    %499 = vector.broadcast %cst_137 : f32 to vector<2x48xf32>
    %500 = arith.addf %499, %498 : vector<2x48xf32>
    %501 = arith.divf %499, %500 : vector<2x48xf32>
    %502 = vector.extract_strided_slice %501 {offsets = [0, 0], sizes = [2, 16], strides = [1, 1]} : vector<2x48xf32> to vector<2x16xf32>
    %503 = vector.extract_strided_slice %501 {offsets = [0, 16], sizes = [2, 16], strides = [1, 1]} : vector<2x48xf32> to vector<2x16xf32>
    %504 = vector.extract_strided_slice %501 {offsets = [0, 32], sizes = [2, 16], strides = [1, 1]} : vector<2x48xf32> to vector<2x16xf32>
    %505 = vector.extract_strided_slice %479 {offsets = [0, 48], sizes = [2, 16], strides = [1, 1]} : vector<2x64xf32> to vector<2x16xf32>
    %506 = math.tanh %505 : vector<2x16xf32>
    %507 = arith.mulf %503, %462 : vector<2x16xf32>
    %508 = arith.mulf %502, %506 : vector<2x16xf32>
    %509 = arith.addf %507, %508 : vector<2x16xf32>
    %510 = math.tanh %509 : vector<2x16xf32>
    %511 = arith.mulf %504, %510 : vector<2x16xf32>
    %512 = vector.broadcast %466 : vector<2x1xf32> to vector<2x16xf32>
    %513 = arith.mulf %512, %495 : vector<2x16xf32>
    %514 = arith.index_cast %c5_i32 : i32 to index
    %c0_138 = arith.constant 0 : index
    %c0_139 = arith.constant 0 : index
    %515 = vector.load %arg20[%514, %c0_138, %c0_139] : memref<8x2x32xf32, #tpu.memory_space<vmem>>, vector<1x2x16xf32>
    %516 = vector.shape_cast %515 : vector<1x2x16xf32> to vector<2x16xf32>
    %517 = vector.shape_cast %513 : vector<2x16xf32> to vector<1x2x16xf32>
    tpu.vector_store %arg20[%514, %c0_138, %c0_139], %517 {strides = array<i32>} : memref<8x2x32xf32, #tpu.memory_space<vmem>>, vector<1x2x16xf32>,
    %518 = vector.broadcast %469 : vector<2x1xf32> to vector<2x16xf32>
    %519 = arith.mulf %518, %511 : vector<2x16xf32>
    %520 = arith.index_cast %463 : i32 to index
    %c0_140 = arith.constant 0 : index
    %c16_141 = arith.constant 16 : index
    %521 = vector.load %arg20[%520, %c0_140, %c16_141] : memref<8x2x32xf32, #tpu.memory_space<vmem>>, vector<1x2x16xf32>
    %522 = vector.shape_cast %521 : vector<1x2x16xf32> to vector<2x16xf32>
    %523 = vector.shape_cast %519 : vector<2x16xf32> to vector<1x2x16xf32>
    tpu.vector_store %arg20[%520, %c0_140, %c16_141], %523 {strides = array<i32>} : memref<8x2x32xf32, #tpu.memory_space<vmem>>, vector<1x2x16xf32>,
    %524 = vector.broadcast %466 : vector<2x1xf32> to vector<2x16xf32>
    %525 = arith.mulf %524, %495 : vector<2x16xf32>
    %cst_142 = arith.constant 1.000000e+00 : f32
    %526 = vector.broadcast %cst_142 : f32 to vector<2x1xf32>
    %527 = arith.subf %526, %466 : vector<2x1xf32>
    %528 = vector.broadcast %527 : vector<2x1xf32> to vector<2x16xf32>
    %529 = arith.mulf %528, %441 : vector<2x16xf32>
    %530 = arith.addf %525, %529 : vector<2x16xf32>
    %531 = vector.broadcast %466 : vector<2x1xf32> to vector<2x16xf32>
    %532 = arith.mulf %531, %493 : vector<2x16xf32>
    %cst_143 = arith.constant 1.000000e+00 : f32
    %533 = vector.broadcast %cst_143 : f32 to vector<2x1xf32>
    %534 = arith.subf %533, %466 : vector<2x1xf32>
    %535 = vector.broadcast %534 : vector<2x1xf32> to vector<2x16xf32>
    %536 = arith.mulf %535, %448 : vector<2x16xf32>
    %537 = arith.addf %532, %536 : vector<2x16xf32>
    %538 = vector.broadcast %469 : vector<2x1xf32> to vector<2x16xf32>
    %539 = arith.mulf %538, %511 : vector<2x16xf32>
    %cst_144 = arith.constant 1.000000e+00 : f32
    %540 = vector.broadcast %cst_144 : f32 to vector<2x1xf32>
    %541 = arith.subf %540, %469 : vector<2x1xf32>
    %542 = vector.broadcast %541 : vector<2x1xf32> to vector<2x16xf32>
    %543 = arith.mulf %542, %455 : vector<2x16xf32>
    %544 = arith.addf %539, %543 : vector<2x16xf32>
    %545 = vector.broadcast %469 : vector<2x1xf32> to vector<2x16xf32>
    %546 = arith.mulf %545, %509 : vector<2x16xf32>
    %cst_145 = arith.constant 1.000000e+00 : f32
    %547 = vector.broadcast %cst_145 : f32 to vector<2x1xf32>
    %548 = arith.subf %547, %469 : vector<2x1xf32>
    %549 = vector.broadcast %548 : vector<2x1xf32> to vector<2x16xf32>
    %550 = arith.mulf %549, %462 : vector<2x16xf32>
    %551 = arith.addf %546, %550 : vector<2x16xf32>
    %c6_i32 = arith.constant 6 : i32
    %c7_i32_146 = arith.constant 7 : i32
    %552 = arith.subi %c7_i32_146, %c6_i32 : i32
    %553 = arith.index_cast %c6_i32 : i32 to index
    %c0_147 = arith.constant 0 : index
    %c0_148 = arith.constant 0 : index
    %554 = vector.load %arg1[%553, %c0_147, %c0_148] : memref<8x2x1xf32, #tpu.memory_space<vmem>>, vector<1x2x1xf32>
    %555 = vector.shape_cast %554 : vector<1x2x1xf32> to vector<2x1xf32>
    %556 = arith.index_cast %552 : i32 to index
    %c0_149 = arith.constant 0 : index
    %c0_150 = arith.constant 0 : index
    %557 = vector.load %arg1[%556, %c0_149, %c0_150] : memref<8x2x1xf32, #tpu.memory_space<vmem>>, vector<1x2x1xf32>
    %558 = vector.shape_cast %557 : vector<1x2x1xf32> to vector<2x1xf32>
    %559 = arith.index_cast %c6_i32 : i32 to index
    %c0_151 = arith.constant 0 : index
    %c0_152 = arith.constant 0 : index
    %560 = vector.load %arg18[%559, %c0_151, %c0_152] : memref<8x2x64xf32, #tpu.memory_space<vmem>>, vector<1x2x64xf32>
    %561 = vector.shape_cast %560 : vector<1x2x64xf32> to vector<2x64xf32>
    %cst_153 = arith.constant dense<0.000000e+00> : vector<2x64xf32>
    %562 = tpu.matmul %530, %15, %cst_153 {dimension_numbers = #tpu.dot_dimension_numbers<[1], [0], [0], [1], [0, 0, 1, 1], [], []>} : vector<2x16xf32>, vector<16x64xf32>, vector<2x64xf32> -> vector<2x64xf32>
    %563 = arith.addf %561, %562 : vector<2x64xf32>
    %564 = arith.index_cast %552 : i32 to index
    %c0_154 = arith.constant 0 : index
    %c0_155 = arith.constant 0 : index
    %565 = vector.load %arg19[%564, %c0_154, %c0_155] : memref<8x2x64xf32, #tpu.memory_space<vmem>>, vector<1x2x64xf32>
    %566 = vector.shape_cast %565 : vector<1x2x64xf32> to vector<2x64xf32>
    %cst_156 = arith.constant dense<0.000000e+00> : vector<2x64xf32>
    %567 = tpu.matmul %544, %16, %cst_156 {dimension_numbers = #tpu.dot_dimension_numbers<[1], [0], [0], [1], [0, 0, 1, 1], [], []>} : vector<2x16xf32>, vector<16x64xf32>, vector<2x64xf32> -> vector<2x64xf32>
    %568 = arith.addf %566, %567 : vector<2x64xf32>
    %569 = vector.extract_strided_slice %563 {offsets = [0, 0], sizes = [2, 48], strides = [1, 1]} : vector<2x64xf32> to vector<2x48xf32>
    %570 = arith.negf %569 : vector<2x48xf32>
    %571 = math.exp %570 : vector<2x48xf32>
    %cst_157 = arith.constant 1.000000e+00 : f32
    %572 = vector.broadcast %cst_157 : f32 to vector<2x48xf32>
    %573 = arith.addf %572, %571 : vector<2x48xf32>
    %574 = arith.divf %572, %573 : vector<2x48xf32>
    %575 = vector.extract_strided_slice %574 {offsets = [0, 0], sizes = [2, 16], strides = [1, 1]} : vector<2x48xf32> to vector<2x16xf32>
    %576 = vector.extract_strided_slice %574 {offsets = [0, 16], sizes = [2, 16], strides = [1, 1]} : vector<2x48xf32> to vector<2x16xf32>
    %577 = vector.extract_strided_slice %574 {offsets = [0, 32], sizes = [2, 16], strides = [1, 1]} : vector<2x48xf32> to vector<2x16xf32>
    %578 = vector.extract_strided_slice %563 {offsets = [0, 48], sizes = [2, 16], strides = [1, 1]} : vector<2x64xf32> to vector<2x16xf32>
    %579 = math.tanh %578 : vector<2x16xf32>
    %580 = arith.mulf %576, %537 : vector<2x16xf32>
    %581 = arith.mulf %575, %579 : vector<2x16xf32>
    %582 = arith.addf %580, %581 : vector<2x16xf32>
    %583 = math.tanh %582 : vector<2x16xf32>
    %584 = arith.mulf %577, %583 : vector<2x16xf32>
    %585 = vector.extract_strided_slice %568 {offsets = [0, 0], sizes = [2, 48], strides = [1, 1]} : vector<2x64xf32> to vector<2x48xf32>
    %586 = arith.negf %585 : vector<2x48xf32>
    %587 = math.exp %586 : vector<2x48xf32>
    %cst_158 = arith.constant 1.000000e+00 : f32
    %588 = vector.broadcast %cst_158 : f32 to vector<2x48xf32>
    %589 = arith.addf %588, %587 : vector<2x48xf32>
    %590 = arith.divf %588, %589 : vector<2x48xf32>
    %591 = vector.extract_strided_slice %590 {offsets = [0, 0], sizes = [2, 16], strides = [1, 1]} : vector<2x48xf32> to vector<2x16xf32>
    %592 = vector.extract_strided_slice %590 {offsets = [0, 16], sizes = [2, 16], strides = [1, 1]} : vector<2x48xf32> to vector<2x16xf32>
    %593 = vector.extract_strided_slice %590 {offsets = [0, 32], sizes = [2, 16], strides = [1, 1]} : vector<2x48xf32> to vector<2x16xf32>
    %594 = vector.extract_strided_slice %568 {offsets = [0, 48], sizes = [2, 16], strides = [1, 1]} : vector<2x64xf32> to vector<2x16xf32>
    %595 = math.tanh %594 : vector<2x16xf32>
    %596 = arith.mulf %592, %551 : vector<2x16xf32>
    %597 = arith.mulf %591, %595 : vector<2x16xf32>
    %598 = arith.addf %596, %597 : vector<2x16xf32>
    %599 = math.tanh %598 : vector<2x16xf32>
    %600 = arith.mulf %593, %599 : vector<2x16xf32>
    %601 = vector.broadcast %555 : vector<2x1xf32> to vector<2x16xf32>
    %602 = arith.mulf %601, %584 : vector<2x16xf32>
    %603 = arith.index_cast %c6_i32 : i32 to index
    %c0_159 = arith.constant 0 : index
    %c0_160 = arith.constant 0 : index
    %604 = vector.load %arg20[%603, %c0_159, %c0_160] : memref<8x2x32xf32, #tpu.memory_space<vmem>>, vector<1x2x16xf32>
    %605 = vector.shape_cast %604 : vector<1x2x16xf32> to vector<2x16xf32>
    %606 = vector.shape_cast %602 : vector<2x16xf32> to vector<1x2x16xf32>
    tpu.vector_store %arg20[%603, %c0_159, %c0_160], %606 {strides = array<i32>} : memref<8x2x32xf32, #tpu.memory_space<vmem>>, vector<1x2x16xf32>,
    %607 = vector.broadcast %558 : vector<2x1xf32> to vector<2x16xf32>
    %608 = arith.mulf %607, %600 : vector<2x16xf32>
    %609 = arith.index_cast %552 : i32 to index
    %c0_161 = arith.constant 0 : index
    %c16_162 = arith.constant 16 : index
    %610 = vector.load %arg20[%609, %c0_161, %c16_162] : memref<8x2x32xf32, #tpu.memory_space<vmem>>, vector<1x2x16xf32>
    %611 = vector.shape_cast %610 : vector<1x2x16xf32> to vector<2x16xf32>
    %612 = vector.shape_cast %608 : vector<2x16xf32> to vector<1x2x16xf32>
    tpu.vector_store %arg20[%609, %c0_161, %c16_162], %612 {strides = array<i32>} : memref<8x2x32xf32, #tpu.memory_space<vmem>>, vector<1x2x16xf32>,
    %613 = vector.broadcast %555 : vector<2x1xf32> to vector<2x16xf32>
    %614 = arith.mulf %613, %584 : vector<2x16xf32>
    %cst_163 = arith.constant 1.000000e+00 : f32
    %615 = vector.broadcast %cst_163 : f32 to vector<2x1xf32>
    %616 = arith.subf %615, %555 : vector<2x1xf32>
    %617 = vector.broadcast %616 : vector<2x1xf32> to vector<2x16xf32>
    %618 = arith.mulf %617, %530 : vector<2x16xf32>
    %619 = arith.addf %614, %618 : vector<2x16xf32>
    %620 = vector.broadcast %555 : vector<2x1xf32> to vector<2x16xf32>
    %621 = arith.mulf %620, %582 : vector<2x16xf32>
    %cst_164 = arith.constant 1.000000e+00 : f32
    %622 = vector.broadcast %cst_164 : f32 to vector<2x1xf32>
    %623 = arith.subf %622, %555 : vector<2x1xf32>
    %624 = vector.broadcast %623 : vector<2x1xf32> to vector<2x16xf32>
    %625 = arith.mulf %624, %537 : vector<2x16xf32>
    %626 = arith.addf %621, %625 : vector<2x16xf32>
    %627 = vector.broadcast %558 : vector<2x1xf32> to vector<2x16xf32>
    %628 = arith.mulf %627, %600 : vector<2x16xf32>
    %cst_165 = arith.constant 1.000000e+00 : f32
    %629 = vector.broadcast %cst_165 : f32 to vector<2x1xf32>
    %630 = arith.subf %629, %558 : vector<2x1xf32>
    %631 = vector.broadcast %630 : vector<2x1xf32> to vector<2x16xf32>
    %632 = arith.mulf %631, %544 : vector<2x16xf32>
    %633 = arith.addf %628, %632 : vector<2x16xf32>
    %634 = vector.broadcast %558 : vector<2x1xf32> to vector<2x16xf32>
    %635 = arith.mulf %634, %598 : vector<2x16xf32>
    %cst_166 = arith.constant 1.000000e+00 : f32
    %636 = vector.broadcast %cst_166 : f32 to vector<2x1xf32>
    %637 = arith.subf %636, %558 : vector<2x1xf32>
    %638 = vector.broadcast %637 : vector<2x1xf32> to vector<2x16xf32>
    %639 = arith.mulf %638, %551 : vector<2x16xf32>
    %640 = arith.addf %635, %639 : vector<2x16xf32>
    %c7_i32_167 = arith.constant 7 : i32
    %c7_i32_168 = arith.constant 7 : i32
    %641 = arith.subi %c7_i32_168, %c7_i32_167 : i32
    %642 = arith.index_cast %c7_i32_167 : i32 to index
    %c0_169 = arith.constant 0 : index
    %c0_170 = arith.constant 0 : index
    %643 = vector.load %arg1[%642, %c0_169, %c0_170] : memref<8x2x1xf32, #tpu.memory_space<vmem>>, vector<1x2x1xf32>
    %644 = vector.shape_cast %643 : vector<1x2x1xf32> to vector<2x1xf32>
    %645 = arith.index_cast %641 : i32 to index
    %c0_171 = arith.constant 0 : index
    %c0_172 = arith.constant 0 : index
    %646 = vector.load %arg1[%645, %c0_171, %c0_172] : memref<8x2x1xf32, #tpu.memory_space<vmem>>, vector<1x2x1xf32>
    %647 = vector.shape_cast %646 : vector<1x2x1xf32> to vector<2x1xf32>
    %648 = arith.index_cast %c7_i32_167 : i32 to index
    %c0_173 = arith.constant 0 : index
    %c0_174 = arith.constant 0 : index
    %649 = vector.load %arg18[%648, %c0_173, %c0_174] : memref<8x2x64xf32, #tpu.memory_space<vmem>>, vector<1x2x64xf32>
    %650 = vector.shape_cast %649 : vector<1x2x64xf32> to vector<2x64xf32>
    %cst_175 = arith.constant dense<0.000000e+00> : vector<2x64xf32>
    %651 = tpu.matmul %619, %15, %cst_175 {dimension_numbers = #tpu.dot_dimension_numbers<[1], [0], [0], [1], [0, 0, 1, 1], [], []>} : vector<2x16xf32>, vector<16x64xf32>, vector<2x64xf32> -> vector<2x64xf32>
    %652 = arith.addf %650, %651 : vector<2x64xf32>
    %653 = arith.index_cast %641 : i32 to index
    %c0_176 = arith.constant 0 : index
    %c0_177 = arith.constant 0 : index
    %654 = vector.load %arg19[%653, %c0_176, %c0_177] : memref<8x2x64xf32, #tpu.memory_space<vmem>>, vector<1x2x64xf32>
    %655 = vector.shape_cast %654 : vector<1x2x64xf32> to vector<2x64xf32>
    %cst_178 = arith.constant dense<0.000000e+00> : vector<2x64xf32>
    %656 = tpu.matmul %633, %16, %cst_178 {dimension_numbers = #tpu.dot_dimension_numbers<[1], [0], [0], [1], [0, 0, 1, 1], [], []>} : vector<2x16xf32>, vector<16x64xf32>, vector<2x64xf32> -> vector<2x64xf32>
    %657 = arith.addf %655, %656 : vector<2x64xf32>
    %658 = vector.extract_strided_slice %652 {offsets = [0, 0], sizes = [2, 48], strides = [1, 1]} : vector<2x64xf32> to vector<2x48xf32>
    %659 = arith.negf %658 : vector<2x48xf32>
    %660 = math.exp %659 : vector<2x48xf32>
    %cst_179 = arith.constant 1.000000e+00 : f32
    %661 = vector.broadcast %cst_179 : f32 to vector<2x48xf32>
    %662 = arith.addf %661, %660 : vector<2x48xf32>
    %663 = arith.divf %661, %662 : vector<2x48xf32>
    %664 = vector.extract_strided_slice %663 {offsets = [0, 0], sizes = [2, 16], strides = [1, 1]} : vector<2x48xf32> to vector<2x16xf32>
    %665 = vector.extract_strided_slice %663 {offsets = [0, 16], sizes = [2, 16], strides = [1, 1]} : vector<2x48xf32> to vector<2x16xf32>
    %666 = vector.extract_strided_slice %663 {offsets = [0, 32], sizes = [2, 16], strides = [1, 1]} : vector<2x48xf32> to vector<2x16xf32>
    %667 = vector.extract_strided_slice %652 {offsets = [0, 48], sizes = [2, 16], strides = [1, 1]} : vector<2x64xf32> to vector<2x16xf32>
    %668 = math.tanh %667 : vector<2x16xf32>
    %669 = arith.mulf %665, %626 : vector<2x16xf32>
    %670 = arith.mulf %664, %668 : vector<2x16xf32>
    %671 = arith.addf %669, %670 : vector<2x16xf32>
    %672 = math.tanh %671 : vector<2x16xf32>
    %673 = arith.mulf %666, %672 : vector<2x16xf32>
    %674 = vector.extract_strided_slice %657 {offsets = [0, 0], sizes = [2, 48], strides = [1, 1]} : vector<2x64xf32> to vector<2x48xf32>
    %675 = arith.negf %674 : vector<2x48xf32>
    %676 = math.exp %675 : vector<2x48xf32>
    %cst_180 = arith.constant 1.000000e+00 : f32
    %677 = vector.broadcast %cst_180 : f32 to vector<2x48xf32>
    %678 = arith.addf %677, %676 : vector<2x48xf32>
    %679 = arith.divf %677, %678 : vector<2x48xf32>
    %680 = vector.extract_strided_slice %679 {offsets = [0, 0], sizes = [2, 16], strides = [1, 1]} : vector<2x48xf32> to vector<2x16xf32>
    %681 = vector.extract_strided_slice %679 {offsets = [0, 16], sizes = [2, 16], strides = [1, 1]} : vector<2x48xf32> to vector<2x16xf32>
    %682 = vector.extract_strided_slice %679 {offsets = [0, 32], sizes = [2, 16], strides = [1, 1]} : vector<2x48xf32> to vector<2x16xf32>
    %683 = vector.extract_strided_slice %657 {offsets = [0, 48], sizes = [2, 16], strides = [1, 1]} : vector<2x64xf32> to vector<2x16xf32>
    %684 = math.tanh %683 : vector<2x16xf32>
    %685 = arith.mulf %681, %640 : vector<2x16xf32>
    %686 = arith.mulf %680, %684 : vector<2x16xf32>
    %687 = arith.addf %685, %686 : vector<2x16xf32>
    %688 = math.tanh %687 : vector<2x16xf32>
    %689 = arith.mulf %682, %688 : vector<2x16xf32>
    %690 = vector.broadcast %644 : vector<2x1xf32> to vector<2x16xf32>
    %691 = arith.mulf %690, %673 : vector<2x16xf32>
    %692 = arith.index_cast %c7_i32_167 : i32 to index
    %c0_181 = arith.constant 0 : index
    %c0_182 = arith.constant 0 : index
    %693 = vector.load %arg20[%692, %c0_181, %c0_182] : memref<8x2x32xf32, #tpu.memory_space<vmem>>, vector<1x2x16xf32>
    %694 = vector.shape_cast %693 : vector<1x2x16xf32> to vector<2x16xf32>
    %695 = vector.shape_cast %691 : vector<2x16xf32> to vector<1x2x16xf32>
    tpu.vector_store %arg20[%692, %c0_181, %c0_182], %695 {strides = array<i32>} : memref<8x2x32xf32, #tpu.memory_space<vmem>>, vector<1x2x16xf32>,
    %696 = vector.broadcast %647 : vector<2x1xf32> to vector<2x16xf32>
    %697 = arith.mulf %696, %689 : vector<2x16xf32>
    %698 = arith.index_cast %641 : i32 to index
    %c0_183 = arith.constant 0 : index
    %c16_184 = arith.constant 16 : index
    %699 = vector.load %arg20[%698, %c0_183, %c16_184] : memref<8x2x32xf32, #tpu.memory_space<vmem>>, vector<1x2x16xf32>
    %700 = vector.shape_cast %699 : vector<1x2x16xf32> to vector<2x16xf32>
    %701 = vector.shape_cast %697 : vector<2x16xf32> to vector<1x2x16xf32>
    tpu.vector_store %arg20[%698, %c0_183, %c16_184], %701 {strides = array<i32>} : memref<8x2x32xf32, #tpu.memory_space<vmem>>, vector<1x2x16xf32>,
    %702 = vector.broadcast %644 : vector<2x1xf32> to vector<2x16xf32>
    %703 = arith.mulf %702, %673 : vector<2x16xf32>
    %cst_185 = arith.constant 1.000000e+00 : f32
    %704 = vector.broadcast %cst_185 : f32 to vector<2x1xf32>
    %705 = arith.subf %704, %644 : vector<2x1xf32>
    %706 = vector.broadcast %705 : vector<2x1xf32> to vector<2x16xf32>
    %707 = arith.mulf %706, %619 : vector<2x16xf32>
    %708 = arith.addf %703, %707 : vector<2x16xf32>
    %709 = vector.broadcast %644 : vector<2x1xf32> to vector<2x16xf32>
    %710 = arith.mulf %709, %671 : vector<2x16xf32>
    %cst_186 = arith.constant 1.000000e+00 : f32
    %711 = vector.broadcast %cst_186 : f32 to vector<2x1xf32>
    %712 = arith.subf %711, %644 : vector<2x1xf32>
    %713 = vector.broadcast %712 : vector<2x1xf32> to vector<2x16xf32>
    %714 = arith.mulf %713, %626 : vector<2x16xf32>
    %715 = arith.addf %710, %714 : vector<2x16xf32>
    %716 = vector.broadcast %647 : vector<2x1xf32> to vector<2x16xf32>
    %717 = arith.mulf %716, %689 : vector<2x16xf32>
    %cst_187 = arith.constant 1.000000e+00 : f32
    %718 = vector.broadcast %cst_187 : f32 to vector<2x1xf32>
    %719 = arith.subf %718, %647 : vector<2x1xf32>
    %720 = vector.broadcast %719 : vector<2x1xf32> to vector<2x16xf32>
    %721 = arith.mulf %720, %633 : vector<2x16xf32>
    %722 = arith.addf %717, %721 : vector<2x16xf32>
    %723 = vector.broadcast %647 : vector<2x1xf32> to vector<2x16xf32>
    %724 = arith.mulf %723, %687 : vector<2x16xf32>
    %cst_188 = arith.constant 1.000000e+00 : f32
    %725 = vector.broadcast %cst_188 : f32 to vector<2x1xf32>
    %726 = arith.subf %725, %647 : vector<2x1xf32>
    %727 = vector.broadcast %726 : vector<2x1xf32> to vector<2x16xf32>
    %728 = arith.mulf %727, %640 : vector<2x16xf32>
    %729 = arith.addf %724, %728 : vector<2x16xf32>
    %c8_i32 = arith.constant 8 : i32
    %c0_189 = arith.constant 0 : index
    %c0_190 = arith.constant 0 : index
    %c0_191 = arith.constant 0 : index
    %730 = vector.load %arg20[%c0_189, %c0_190, %c0_191] : memref<8x2x32xf32, #tpu.memory_space<vmem>>, vector<8x2x32xf32>
    %731 = tpu.iota {dimensions = array<i32: 1>} : vector<1x2x1xi32>
    %c0_i32_192 = arith.constant 0 : i32
    %732 = vector.broadcast %c0_i32_192 : i32 to vector<1x2x1xi32>
    %733 = arith.cmpi eq, %731, %732 : vector<1x2x1xi32>
    %734 = arith.extui %733 : vector<1x2x1xi1> to vector<1x2x1xi32>
    %735 = arith.sitofp %734 : vector<1x2x1xi32> to vector<1x2x1xf32>
    %736 = vector.broadcast %735 : vector<1x2x1xf32> to vector<8x2x32xf32>
    %737 = arith.mulf %730, %736 : vector<8x2x32xf32>
    %cst_193 = arith.constant dense<0.000000e+00> : vector<8x32xf32>
    %738 = vector.multi_reduction <add>, %737, %cst_193 [1] : vector<8x2x32xf32> to vector<8x32xf32>
    %c1_i32_194 = arith.constant 1 : i32
    %739 = vector.broadcast %c1_i32_194 : i32 to vector<1x2x1xi32>
    %740 = arith.cmpi eq, %731, %739 : vector<1x2x1xi32>
    %741 = arith.extui %740 : vector<1x2x1xi1> to vector<1x2x1xi32>
    %742 = arith.sitofp %741 : vector<1x2x1xi32> to vector<1x2x1xf32>
    %743 = vector.broadcast %742 : vector<1x2x1xf32> to vector<8x2x32xf32>
    %744 = arith.mulf %730, %743 : vector<8x2x32xf32>
    %cst_195 = arith.constant dense<0.000000e+00> : vector<8x32xf32>
    %745 = vector.multi_reduction <add>, %744, %cst_195 [1] : vector<8x2x32xf32> to vector<8x32xf32>
    %c0_196 = arith.constant 0 : index
    %c0_197 = arith.constant 0 : index
    %c0_198 = arith.constant 0 : index
    %746 = vector.load %arg2[%c0_196, %c0_197, %c0_198] : memref<2x8x8xf32, #tpu.memory_space<vmem>>, vector<1x8x8xf32>
    %747 = vector.shape_cast %746 : vector<1x8x8xf32> to vector<8x8xf32>
    %c1 = arith.constant 1 : index
    %c0_199 = arith.constant 0 : index
    %c0_200 = arith.constant 0 : index
    %748 = vector.load %arg2[%c1, %c0_199, %c0_200] : memref<2x8x8xf32, #tpu.memory_space<vmem>>, vector<1x8x8xf32>
    %749 = vector.shape_cast %748 : vector<1x8x8xf32> to vector<8x8xf32>
    %cst_201 = arith.constant dense<0.000000e+00> : vector<8xf32>
    %750 = vector.multi_reduction <add>, %747, %cst_201 [1] : vector<8x8xf32> to vector<8xf32>
    %751 = vector.shape_cast %750 : vector<8xf32> to vector<8x1xf32>
    %cst_202 = arith.constant 1.000000e+00 : f32
    %752 = vector.broadcast %cst_202 : f32 to vector<8x1xf32>
    %753 = arith.addf %751, %752 : vector<8x1xf32>
    %cst_203 = arith.constant dense<0.000000e+00> : vector<8xf32>
    %754 = vector.multi_reduction <add>, %749, %cst_203 [1] : vector<8x8xf32> to vector<8xf32>
    %755 = vector.shape_cast %754 : vector<8xf32> to vector<8x1xf32>
    %cst_204 = arith.constant 1.000000e+00 : f32
    %756 = vector.broadcast %cst_204 : f32 to vector<8x1xf32>
    %757 = arith.addf %755, %756 : vector<8x1xf32>
    %758 = tpu.concatenate %753, %757 in 0 : vector<8x1xf32>, vector<8x1xf32> -> vector<16x1xf32>
    %759 = tpu.reciprocal %758 {approx = true} : vector<16x1xf32> -> vector<16x1xf32>
    %cst_205 = arith.constant dense<0.000000e+00> : vector<8x32xf32>
    %760 = tpu.matmul %747, %738, %cst_205 {dimension_numbers = #tpu.dot_dimension_numbers<[1], [0], [0], [1], [0, 0, 1, 1], [], []>} : vector<8x8xf32>, vector<8x32xf32>, vector<8x32xf32> -> vector<8x32xf32>
    %cst_206 = arith.constant dense<0.000000e+00> : vector<8x32xf32>
    %761 = tpu.matmul %749, %745, %cst_206 {dimension_numbers = #tpu.dot_dimension_numbers<[1], [0], [0], [1], [0, 0, 1, 1], [], []>} : vector<8x8xf32>, vector<8x32xf32>, vector<8x32xf32> -> vector<8x32xf32>
    %762 = tpu.concatenate %760, %761 in 0 : vector<8x32xf32>, vector<8x32xf32> -> vector<16x32xf32>
    %c0_207 = arith.constant 0 : index
    %c0_208 = arith.constant 0 : index
    %763 = vector.load %arg11[%c0_207, %c0_208] : memref<32x32xf32, #tpu.memory_space<vmem>>, vector<32x32xf32>
    %cst_209 = arith.constant dense<0.000000e+00> : vector<16x32xf32>
    %764 = tpu.matmul %762, %763, %cst_209 {dimension_numbers = #tpu.dot_dimension_numbers<[1], [0], [0], [1], [0, 0, 1, 1], [], []>} : vector<16x32xf32>, vector<32x32xf32>, vector<16x32xf32> -> vector<16x32xf32>
    %c0_210 = arith.constant 0 : index
    %c0_211 = arith.constant 0 : index
    %765 = vector.load %arg12[%c0_210, %c0_211] : memref<1x32xf32, #tpu.memory_space<vmem>>, vector<1x32xf32>
    %766 = vector.broadcast %765 : vector<1x32xf32> to vector<16x32xf32>
    %767 = arith.addf %764, %766 : vector<16x32xf32>
    %768 = vector.broadcast %759 : vector<16x1xf32> to vector<16x32xf32>
    %769 = arith.mulf %767, %768 : vector<16x32xf32>
    %cst_212 = arith.constant 0.000000e+00 : f32
    %770 = vector.broadcast %cst_212 : f32 to vector<16x32xf32>
    %771 = arith.maximumf %769, %770 : vector<16x32xf32>
    %772 = vector.extract_strided_slice %771 {offsets = [0, 0], sizes = [8, 32], strides = [1, 1]} : vector<16x32xf32> to vector<8x32xf32>
    %773 = vector.extract_strided_slice %771 {offsets = [8, 0], sizes = [8, 32], strides = [1, 1]} : vector<16x32xf32> to vector<8x32xf32>
    %cst_213 = arith.constant dense<0.000000e+00> : vector<8x32xf32>
    %774 = tpu.matmul %747, %772, %cst_213 {dimension_numbers = #tpu.dot_dimension_numbers<[1], [0], [0], [1], [0, 0, 1, 1], [], []>} : vector<8x8xf32>, vector<8x32xf32>, vector<8x32xf32> -> vector<8x32xf32>
    %cst_214 = arith.constant dense<0.000000e+00> : vector<8x32xf32>
    %775 = tpu.matmul %749, %773, %cst_214 {dimension_numbers = #tpu.dot_dimension_numbers<[1], [0], [0], [1], [0, 0, 1, 1], [], []>} : vector<8x8xf32>, vector<8x32xf32>, vector<8x32xf32> -> vector<8x32xf32>
    %776 = tpu.concatenate %774, %775 in 0 : vector<8x32xf32>, vector<8x32xf32> -> vector<16x32xf32>
    %c0_215 = arith.constant 0 : index
    %c0_216 = arith.constant 0 : index
    %777 = vector.load %arg13[%c0_215, %c0_216] : memref<32x32xf32, #tpu.memory_space<vmem>>, vector<32x32xf32>
    %cst_217 = arith.constant dense<0.000000e+00> : vector<16x32xf32>
    %778 = tpu.matmul %776, %777, %cst_217 {dimension_numbers = #tpu.dot_dimension_numbers<[1], [0], [0], [1], [0, 0, 1, 1], [], []>} : vector<16x32xf32>, vector<32x32xf32>, vector<16x32xf32> -> vector<16x32xf32>
    %c0_218 = arith.constant 0 : index
    %c0_219 = arith.constant 0 : index
    %779 = vector.load %arg14[%c0_218, %c0_219] : memref<1x32xf32, #tpu.memory_space<vmem>>, vector<1x32xf32>
    %780 = vector.broadcast %779 : vector<1x32xf32> to vector<16x32xf32>
    %781 = arith.addf %778, %780 : vector<16x32xf32>
    %782 = vector.broadcast %759 : vector<16x1xf32> to vector<16x32xf32>
    %783 = arith.mulf %781, %782 : vector<16x32xf32>
    %cst_220 = arith.constant 0.000000e+00 : f32
    %784 = vector.broadcast %cst_220 : f32 to vector<16x32xf32>
    %785 = arith.maximumf %783, %784 : vector<16x32xf32>
    %c0_221 = arith.constant 0 : index
    %c0_222 = arith.constant 0 : index
    %786 = vector.load %arg3[%c0_221, %c0_222] : memref<16x1xf32, #tpu.memory_space<vmem>>, vector<16x1xf32>
    %c0_223 = arith.constant 0 : index
    %c0_224 = arith.constant 0 : index
    %787 = vector.load %arg4[%c0_223, %c0_224] : memref<2x16xf32, #tpu.memory_space<vmem>>, vector<2x16xf32>
    %788 = vector.broadcast %786 : vector<16x1xf32> to vector<16x32xf32>
    %789 = arith.mulf %785, %788 : vector<16x32xf32>
    %cst_225 = arith.constant dense<0.000000e+00> : vector<2x32xf32>
    %790 = tpu.matmul %787, %789, %cst_225 {dimension_numbers = #tpu.dot_dimension_numbers<[1], [0], [0], [1], [0, 0, 1, 1], [], []>} : vector<2x16xf32>, vector<16x32xf32>, vector<2x32xf32> -> vector<2x32xf32>
    %cst_226 = arith.constant dense<0.000000e+00> : vector<2x1xf32>
    %791 = tpu.matmul %787, %786, %cst_226 {dimension_numbers = #tpu.dot_dimension_numbers<[1], [0], [0], [1], [0, 0, 1, 1], [], []>} : vector<2x16xf32>, vector<16x1xf32>, vector<2x1xf32> -> vector<2x1xf32>
    %cst_227 = arith.constant 1.000000e+00 : f32
    %792 = vector.broadcast %cst_227 : f32 to vector<2x1xf32>
    %793 = arith.maximumf %791, %792 : vector<2x1xf32>
    %794 = tpu.reciprocal %793 {approx = true} : vector<2x1xf32> -> vector<2x1xf32>
    %795 = vector.broadcast %794 : vector<2x1xf32> to vector<2x32xf32>
    %796 = arith.mulf %790, %795 : vector<2x32xf32>
    %c0_228 = arith.constant 0 : index
    %c0_229 = arith.constant 0 : index
    %797 = vector.load %arg15[%c0_228, %c0_229] : memref<32x3xf32, #tpu.memory_space<vmem>>, vector<32x3xf32>
    %cst_230 = arith.constant dense<0.000000e+00> : vector<2x3xf32>
    %798 = tpu.matmul %796, %797, %cst_230 {dimension_numbers = #tpu.dot_dimension_numbers<[1], [0], [0], [1], [0, 0, 1, 1], [], []>} : vector<2x32xf32>, vector<32x3xf32>, vector<2x3xf32> -> vector<2x3xf32>
    %c0_231 = arith.constant 0 : index
    %c0_232 = arith.constant 0 : index
    %799 = vector.load %arg16[%c0_231, %c0_232] : memref<1x3xf32, #tpu.memory_space<vmem>>, vector<1x3xf32>
    %800 = vector.broadcast %799 : vector<1x3xf32> to vector<2x3xf32>
    %801 = arith.addf %798, %800 : vector<2x3xf32>
    %c0_233 = arith.constant 0 : index
    %c0_234 = arith.constant 0 : index
    %802 = vector.load %arg17[%c0_233, %c0_234] : memref<2x3xf32, #tpu.memory_space<vmem>>, vector<2x3xf32>
    tpu.vector_store %arg17[%c0_233, %c0_234], %801 {strides = array<i32>} : memref<2x3xf32, #tpu.memory_space<vmem>>, vector<2x3xf32>,
    return
  }
}

</mosaic_0001>

<llo_original>
// kernel: tpu_custom_call.1
$region0: #{tpu_custom_call.1}
  #allocation0 [shape = 'u32[]', space=smem, size = 0x4, offset = 0x4, fixed_abs, tag = 'smem constant byte address 0x4 - core index']
  #allocation1 [shape = 'u32[144,128]{1,0:T(1,128)}', space=vmem, size = 0x12000, scoped, tag = 'internal scratch']
  #allocation2 [shape = 'f32[8,2,64]{2,1,0:T(2,128)}', space=vmem, size = 0x2000, scoped, tag = 'scratch operand']
  #allocation3 [shape = 'f32[8,2,64]{2,1,0:T(2,128)}', space=vmem, size = 0x2000, scoped, tag = 'scratch operand']
  #allocation4 [shape = 'f32[8,2,32]{2,1,0:T(2,128)}', space=vmem, size = 0x2000, scoped, tag = 'scratch operand']
  %s0 = inlined_call_operand.hbm [shape: f32[8,2,32], index: 0, kind: input, shape index: {}]
  %s1 = inlined_call_operand.vmem [shape: f32[8,2,1], index: 1, kind: input, shape index: {}]
  %s2 = inlined_call_operand.hbm [shape: f32[2,8,8], index: 2, kind: input, shape index: {}]
  %s3 = inlined_call_operand.vmem [shape: f32[16,1], index: 3, kind: input, shape index: {}]
  %s4 = inlined_call_operand.hbm [shape: f32[2,16], index: 4, kind: input, shape index: {}]
  %s5 = inlined_call_operand.vmem [shape: f32[32,64], index: 5, kind: input, shape index: {}]
  %s6 = inlined_call_operand.hbm [shape: f32[16,64], index: 6, kind: input, shape index: {}]
  %s7 = inlined_call_operand.vmem [shape: f32[1,64], index: 7, kind: input, shape index: {}]
  %s8 = inlined_call_operand.vmem [shape: f32[32,64], index: 8, kind: input, shape index: {}]
  %s9 = inlined_call_operand.hbm [shape: f32[16,64], index: 9, kind: input, shape index: {}]
  %s10 = inlined_call_operand.vmem [shape: f32[1,64], index: 10, kind: input, shape index: {}]
  %s11 = inlined_call_operand.vmem [shape: f32[32,32], index: 11, kind: input, shape index: {}]
  %s12 = inlined_call_operand.vmem [shape: f32[1,32], index: 12, kind: input, shape index: {}]
  %s13 = inlined_call_operand.hbm [shape: f32[32,32], index: 13, kind: input, shape index: {}]
  %s14 = inlined_call_operand.vmem [shape: f32[1,32], index: 14, kind: input, shape index: {}]
  %s15 = inlined_call_operand.vmem [shape: f32[32,3], index: 15, kind: input, shape index: {}]
  %s16 = inlined_call_operand.vmem [shape: f32[1,3], index: 16, kind: input, shape index: {}]
  %s17 = inlined_call_operand.hbm [shape: f32[2,3], index: 17, kind: output, shape index: {}]
  %s18 = sld [smem:[#allocation0]]
  $region102: #{tpu_custom_call.1} parent=0
    _
  %s20 = ssub.s32 1, %s18
  %s21 = scalar_select 0, %s20, %s18
  $region1: #{tpu_custom_call.1} parent=0
    #allocation5 [shape = 'u8[8192]{0}', space=vmem, size = 0x2000, scoped, tag = 'input window, operand 0, single buffered']
    #allocation6 [shape = 's32[1]{0}', space=sflag, size = 0x4, scoped, tag = 'scoped memory for tpu_custom_call.1']
    #allocation7 [shape = 's32[1]{0}', space=sflag, size = 0x4, scoped, tag = 'scoped memory for tpu_custom_call.1']
    #allocation8 [shape = 'u8[8192]{0}', space=vmem, size = 0x2000, scoped, tag = 'input window, operand 2, single buffered']
    #allocation9 [shape = 's32[1]{0}', space=sflag, size = 0x4, scoped, tag = 'scoped memory for tpu_custom_call.1']
    #allocation10 [shape = 'u8[1024]{0}', space=vmem, size = 0x400, scoped, tag = 'input window, operand 4, single buffered']
    #allocation11 [shape = 'u8[8192]{0}', space=vmem, size = 0x2000, scoped, tag = 'input window, operand 6, single buffered']
    #allocation12 [shape = 's32[1]{0}', space=sflag, size = 0x4, scoped, tag = 'scoped memory for tpu_custom_call.1']
    #allocation13 [shape = 'u8[8192]{0}', space=vmem, size = 0x2000, scoped, tag = 'input window, operand 9, single buffered']
    #allocation14 [shape = 'u8[16384]{0}', space=vmem, size = 0x4000, scoped, tag = 'input window, operand 13, single buffered']
    #allocation15 [shape = 's32[1]{0}', space=sflag, size = 0x4, scoped, tag = 'scoped memory for tpu_custom_call.1']
    #allocation16 [shape = 'u8[1024]{0}', space=vmem, size = 0x400, scoped, tag = 'output window, operand 0, single buffered']
    %22 = vsyncpa [#allocation6], 0
    %23 = vsyncpa [#allocation9], 0
    %24 = vsyncpa [#allocation12], 0
    %25 = vsyncpa [#allocation15], 0
    %26 = vsyncpa [#allocation7], 0
    // Predicated region
    $region2: #{tpu_custom_call.1} parent=1 // pred_check
      _
    $region3: #{tpu_custom_call.1} parent=1 // pred_check_branch
      %28 = sbr.rel (0) target = $region5
    $region4: #{tpu_custom_call.1} parent=1 // pred_region
      %s30 = ssub.s32 256, 256
      %31 = vsyncadd [#allocation6], %s30
      %s32 = sshll.u32 [#allocation5], 4
      %s33 = int_to_ptr.vmem [resolvable:$true] %s32
      %38 = dma.hbm_to_vmem [thread:$0]  %s0, 256, %s33, [#allocation6], 32, 32, 2
    $region5: #{tpu_custom_call.1} parent=1 // pred_fallthru
      _
    // Predicated region
    $region6: #{tpu_custom_call.1} parent=1 // pred_check
      _
    $region7: #{tpu_custom_call.1} parent=1 // pred_check_branch
      %40 = sbr.rel (0) target = $region9
    $region8: #{tpu_custom_call.1} parent=1 // pred_region
      _
    $region9: #{tpu_custom_call.1} parent=1 // pred_fallthru
      _
    // Predicated region
    $region10: #{tpu_custom_call.1} parent=1 // pred_check
      _
    $region11: #{tpu_custom_call.1} parent=1 // pred_check_branch
      %42 = sbr.rel (0) target = $region13
    $region12: #{tpu_custom_call.1} parent=1 // pred_region
      %s44 = ssub.s32 256, 256
      %45 = vsyncadd [#allocation9], %s44
      %s46 = sshll.u32 [#allocation8], 4
      %s47 = int_to_ptr.vmem [resolvable:$true] %s46
      %52 = dma.hbm_to_vmem [thread:$0]  %s2, 256, %s47, [#allocation9], 128, 128, 8
    $region13: #{tpu_custom_call.1} parent=1 // pred_fallthru
      _
    // Predicated region
    $region14: #{tpu_custom_call.1} parent=1 // pred_check
      _
    $region15: #{tpu_custom_call.1} parent=1 // pred_check_branch
      %54 = sbr.rel (0) target = $region17
    $region16: #{tpu_custom_call.1} parent=1 // pred_region
      _
    $region17: #{tpu_custom_call.1} parent=1 // pred_fallthru
      _
    // Predicated region
    $region18: #{tpu_custom_call.1} parent=1 // pred_check
      _
    $region19: #{tpu_custom_call.1} parent=1 // pred_check_branch
      %56 = sbr.rel (0) target = $region21
    $region20: #{tpu_custom_call.1} parent=1 // pred_region
      %s58 = ssub.s32 32, 32
      %59 = vsyncadd [#allocation9], %s58
      %s61 = sshll.u32 [#allocation10], 4
      %s62 = int_to_ptr.vmem [resolvable:$true] %s61
      %64 = dma.hbm_to_vmem [thread:$0]  %s4, 32, %s62, [#allocation9]
    $region21: #{tpu_custom_call.1} parent=1 // pred_fallthru
      _
    // Predicated region
    $region22: #{tpu_custom_call.1} parent=1 // pred_check
      _
    $region23: #{tpu_custom_call.1} parent=1 // pred_check_branch
      %66 = sbr.rel (0) target = $region25
    $region24: #{tpu_custom_call.1} parent=1 // pred_region
      _
    $region25: #{tpu_custom_call.1} parent=1 // pred_fallthru
      _
    // Predicated region
    $region26: #{tpu_custom_call.1} parent=1 // pred_check
      _
    $region27: #{tpu_custom_call.1} parent=1 // pred_check_branch
      %68 = sbr.rel (0) target = $region29
    $region28: #{tpu_custom_call.1} parent=1 // pred_region
      %s70 = ssub.s32 256, 256
      %71 = vsyncadd [#allocation12], %s70
      %s72 = sshll.u32 [#allocation11], 4
      %s73 = int_to_ptr.vmem [resolvable:$true] %s72
      %78 = dma.hbm_to_vmem [thread:$0]  %s6, 256, %s73, [#allocation12], 128, 128, 8
    $region29: #{tpu_custom_call.1} parent=1 // pred_fallthru
      _
    // Predicated region
    $region30: #{tpu_custom_call.1} parent=1 // pred_check
      _
    $region31: #{tpu_custom_call.1} parent=1 // pred_check_branch
      %80 = sbr.rel (0) target = $region33
    $region32: #{tpu_custom_call.1} parent=1 // pred_region
      _
    $region33: #{tpu_custom_call.1} parent=1 // pred_fallthru
      _
    // Predicated region
    $region34: #{tpu_custom_call.1} parent=1 // pred_check
      _
    $region35: #{tpu_custom_call.1} parent=1 // pred_check_branch
      %82 = sbr.rel (0) target = $region37
    $region36: #{tpu_custom_call.1} parent=1 // pred_region
      _
    $region37: #{tpu_custom_call.1} parent=1 // pred_fallthru
      _
    // Predicated region
    $region38: #{tpu_custom_call.1} parent=1 // pred_check
      _
    $region39: #{tpu_custom_call.1} parent=1 // pred_check_branch
      %84 = sbr.rel (0) target = $region41
    $region40: #{tpu_custom_call.1} parent=1 // pred_region
      %s86 = ssub.s32 256, 256
      %87 = vsyncadd [#allocation12], %s86
      %s88 = sshll.u32 [#allocation13], 4
      %s89 = int_to_ptr.vmem [resolvable:$true] %s88
      %94 = dma.hbm_to_vmem [thread:$0]  %s9, 256, %s89, [#allocation12], 128, 128, 8
    $region41: #{tpu_custom_call.1} parent=1 // pred_fallthru
      _
    // Predicated region
    $region42: #{tpu_custom_call.1} parent=1 // pred_check
      _
    $region43: #{tpu_custom_call.1} parent=1 // pred_check_branch
      %96 = sbr.rel (0) target = $region45
    $region44: #{tpu_custom_call.1} parent=1 // pred_region
      _
    $region45: #{tpu_custom_call.1} parent=1 // pred_fallthru
      _
    // Predicated region
    $region46: #{tpu_custom_call.1} parent=1 // pred_check
      _
    $region47: #{tpu_custom_call.1} parent=1 // pred_check_branch
      %98 = sbr.rel (0) target = $region49
    $region48: #{tpu_custom_call.1} parent=1 // pred_region
      _
    $region49: #{tpu_custom_call.1} parent=1 // pred_fallthru
      _
    // Predicated region
    $region50: #{tpu_custom_call.1} parent=1 // pred_check
      _
    $region51: #{tpu_custom_call.1} parent=1 // pred_check_branch
      %100 = sbr.rel (0) target = $region53
    $region52: #{tpu_custom_call.1} parent=1 // pred_region
      _
    $region53: #{tpu_custom_call.1} parent=1 // pred_fallthru
      _
    // Predicated region
    $region54: #{tpu_custom_call.1} parent=1 // pred_check
      _
    $region55: #{tpu_custom_call.1} parent=1 // pred_check_branch
      %102 = sbr.rel (0) target = $region57
    $region56: #{tpu_custom_call.1} parent=1 // pred_region
      %s104 = ssub.s32 512, 512
      %105 = vsyncadd [#allocation15], %s104
      %s106 = sshll.u32 [#allocation14], 4
      %s107 = int_to_ptr.vmem [resolvable:$true] %s106
      %112 = dma.hbm_to_vmem [thread:$0]  %s13, 512, %s107, [#allocation15], 128, 128, 8
    $region57: #{tpu_custom_call.1} parent=1 // pred_fallthru
      _
    // Predicated region
    $region58: #{tpu_custom_call.1} parent=1 // pred_check
      _
    $region59: #{tpu_custom_call.1} parent=1 // pred_check_branch
      %114 = sbr.rel (0) target = $region61
    $region60: #{tpu_custom_call.1} parent=1 // pred_region
      _
    $region61: #{tpu_custom_call.1} parent=1 // pred_fallthru
      _
    // Predicated region
    $region62: #{tpu_custom_call.1} parent=1 // pred_check
      _
    $region63: #{tpu_custom_call.1} parent=1 // pred_check_branch
      %116 = sbr.rel (0) target = $region65
    $region64: #{tpu_custom_call.1} parent=1 // pred_region
      _
    $region65: #{tpu_custom_call.1} parent=1 // pred_fallthru
      _
    // Predicated region
    $region66: #{tpu_custom_call.1} parent=1 // pred_check
      _
    $region67: #{tpu_custom_call.1} parent=1 // pred_check_branch
      %118 = sbr.rel (0) target = $region69
    $region68: #{tpu_custom_call.1} parent=1 // pred_region
      _
    $region69: #{tpu_custom_call.1} parent=1 // pred_fallthru
      _
    // Predicated region
    $region70: #{tpu_custom_call.1} parent=1 // pred_check
      _
    $region71: #{tpu_custom_call.1} parent=1 // pred_check_branch
      %120 = sbr.rel (0) target = $region73
    $region72: #{tpu_custom_call.1} parent=1 // pred_region
      %121 = dma.done [#allocation6], 256
    $region73: #{tpu_custom_call.1} parent=1 // pred_fallthru
      _
    // Predicated region
    $region74: #{tpu_custom_call.1} parent=1 // pred_check
      _
    $region75: #{tpu_custom_call.1} parent=1 // pred_check_branch
      %123 = sbr.rel (0) target = $region77
    $region76: #{tpu_custom_call.1} parent=1 // pred_region
      %124 = dma.done [#allocation9], 256
    $region77: #{tpu_custom_call.1} parent=1 // pred_fallthru
      _
    // Predicated region
    $region78: #{tpu_custom_call.1} parent=1 // pred_check
      _
    $region79: #{tpu_custom_call.1} parent=1 // pred_check_branch
      %126 = sbr.rel (0) target = $region81
    $region80: #{tpu_custom_call.1} parent=1 // pred_region
      %127 = dma.done [#allocation9], 32
    $region81: #{tpu_custom_call.1} parent=1 // pred_fallthru
      _
    // Predicated region
    $region82: #{tpu_custom_call.1} parent=1 // pred_check
      _
    $region83: #{tpu_custom_call.1} parent=1 // pred_check_branch
      %129 = sbr.rel (0) target = $region85
    $region84: #{tpu_custom_call.1} parent=1 // pred_region
      %130 = dma.done [#allocation12], 256
    $region85: #{tpu_custom_call.1} parent=1 // pred_fallthru
      _
    // Predicated region
    $region86: #{tpu_custom_call.1} parent=1 // pred_check
      _
    $region87: #{tpu_custom_call.1} parent=1 // pred_check_branch
      %132 = sbr.rel (0) target = $region89
    $region88: #{tpu_custom_call.1} parent=1 // pred_region
      %133 = dma.done [#allocation12], 256
    $region89: #{tpu_custom_call.1} parent=1 // pred_fallthru
      _
    // Predicated region
    $region90: #{tpu_custom_call.1} parent=1 // pred_check
      _
    $region91: #{tpu_custom_call.1} parent=1 // pred_check_branch
      %135 = sbr.rel (0) target = $region93
    $region92: #{tpu_custom_call.1} parent=1 // pred_region
      %136 = dma.done [#allocation15], 512
    $region93: #{tpu_custom_call.1} parent=1 // pred_fallthru
      _
    %v137 = vld [vmem:[#allocation5] sm:$0x3]
    %v138 = vld [vmem:[#allocation5 + $0x2] sm:$0x3]
    %v139 = vld [vmem:[#allocation5 + $0x4] sm:$0x3]
    %v140 = vld [vmem:[#allocation5 + $0x6] sm:$0x3]
    %v141 = vld [vmem:[#allocation5 + $0x8] sm:$0x3]
    %v142 = vld [vmem:[#allocation5 + $0xa] sm:$0x3]
    %v143 = vld [vmem:[#allocation5 + $0xc] sm:$0x3]
    %v144 = vld [vmem:[#allocation5 + $0xe] sm:$0x3]
    %v145 = vld [vmem:[%s5] sm:$0xff]
    %v146 = vld [vmem:[%s5 + $0x8] sm:$0xff]
    %v147 = vld [vmem:[%s5 + $0x10] sm:$0xff]
    %v148 = vld [vmem:[%s5 + $0x18] sm:$0xff]
    %v149 = vld [vmem:[%s7] sm:$0x1]
    %v151 = vlaneseq
    %v152 = vshrl.u32 %v151, 7
    %v153 = vsub.s32 0, %v152
    %v154 = vrot.slane %v149, %v153
    %v163 = vcombine.low %v137, %v138
    %v164 = vcombine.low %v139, %v140
    %v166 = vunpack.c.l.s4 1983009808
    %v167 = vunpack.c.0.s8 %v166
    %v168 = vlaneseq
    %v169 = vshrl.u32 %v168, 7
    %v170 = vsub.s32 %v167, %v169
    %v171 = vrot.slane %v163, %v170
    %v173 = vunpack.c.l.s4 1983009808
    %v174 = vunpack.c.0.s8 %v173
    %v175 = vlaneseq
    %v176 = vshrl.u32 %v175, 7
    %v177 = vsub.s32 %v174, %v176
    %v178 = vrot.slane %v164, %v177
    %v179 = vcombine.low %v171, %v178
    %v180 = vcombine.low %v141, %v142
    %v181 = vcombine.low %v143, %v144
    %v183 = vunpack.c.l.s4 1983009808
    %v184 = vunpack.c.0.s8 %v183
    %v185 = vlaneseq
    %v186 = vshrl.u32 %v185, 7
    %v187 = vsub.s32 %v184, %v186
    %v188 = vrot.slane %v180, %v187
    %v190 = vunpack.c.l.s4 1983009808
    %v191 = vunpack.c.0.s8 %v190
    %v192 = vlaneseq
    %v193 = vshrl.u32 %v192, 7
    %v194 = vsub.s32 %v191, %v193
    %v195 = vrot.slane %v181, %v194
    %v196 = vcombine.low %v188, %v195
    %v197 = vcombine.low %v154, %v154
    %v199 = vunpack.c.l.s4 1983009808
    %v200 = vunpack.c.0.s8 %v199
    %v201 = vlaneseq
    %v202 = vshrl.u32 %v201, 7
    %v203 = vsub.s32 %v200, %v202
    %v204 = vrot.slane %v197, %v203
    %v205 = vcombine.low %v204, %v204
    %vm207 = vcmask 261120
    %v208 = vsel %vm207, %v179, 0
    %v210 = vsel %vm207, %v196, 0
    %212 = vmatprep.subr.mxu0 0.0
    %213 = vmatpush1.msra.mxu0 %v145
    %214 = vmatprep.subr.mxu0 0.0
    %215 = vmatpush1.msra.mxu0 %v146
    %216 = vmatprep.subr.mxu0 0.0
    %217 = vmatpush1.msra.mxu0 %v147
    %218 = vmatprep.subr.mxu0 0.0
    %219 = vmatpush1.msra.mxu0 %v148
    %220 = vmatprep.subr.mxu0 0.0
    %221 = vmatpush1.msra.mxu0 0.0
    %222 = vmatprep.subr.mxu0 0.0
    %223 = vmatpush1.msra.mxu0 0.0
    %224 = vmatprep.subr.mxu0 0.0
    %225 = vmatpush1.msra.mxu0 0.0
    %226 = vmatprep.subr.mxu0 0.0
    %227 = vmatpush1.msra.mxu0 0.0
    %228 = vmatprep.subr.mxu0 0.0
    %229 = vmatpush1.msra.mxu0 0.0
    %230 = vmatprep.subr.mxu0 0.0
    %231 = vmatpush1.msra.mxu0 0.0
    %232 = vmatprep.subr.mxu0 0.0
    %233 = vmatpush1.msra.mxu0 0.0
    %234 = vmatprep.subr.mxu0 0.0
    %235 = vmatpush1.msra.mxu0 0.0
    %236 = vmatprep.subr.mxu0 0.0
    %237 = vmatpush1.msra.mxu0 0.0
    %238 = vmatprep.subr.mxu0 0.0
    %239 = vmatpush1.msra.mxu0 0.0
    %240 = vmatprep.subr.mxu0 0.0
    %241 = vmatpush1.msra.mxu0 0.0
    %242 = vmatprep.subr.mxu0 0.0
    %243 = vmatpush1.msra.mxu0 0.0
    %244 = vmatprep.subr.mxu0 0.0
    %245 = vmatpush1.msra.mxu0 0.0
    %246 = vmatprep.subr.mxu0 0.0
    %247 = vmatpush1.msra.mxu0 0.0
    %248 = vmatprep.subr.mxu0 0.0
    %249 = vmatpush1.msra.mxu0 0.0
    %250 = vmatprep.subr.mxu0 0.0
    %251 = vmatpush1.msra.mxu0 0.0
    %252 = vmatprep.subr.mxu0 0.0
    %253 = vmatpush1.msra.mxu0 0.0
    %254 = vmatprep.subr.mxu0 0.0
    %255 = vmatpush1.msra.mxu0 0.0
    %256 = vmatprep.subr.mxu0 0.0
    %257 = vmatpush1.msra.mxu0 0.0
    %258 = vmatprep.subr.mxu0 0.0
    %259 = vmatpush1.msra.mxu0 0.0
    %260 = vmatprep.subr.mxu0 0.0
    %261 = vmatpush1.msra.mxu0 0.0
    %262 = vmatprep.subr.mxu0 0.0
    %263 = vmatpush1.msra.mxu0 0.0
    %264 = vmatprep.subr.mxu0 0.0
    %265 = vmatpush1.msra.mxu0 0.0
    %266 = vmatprep.subr.mxu0 0.0
    %267 = vmatpush1.msra.mxu0 0.0
    %268 = vmatprep.subr.mxu0 0.0
    %269 = vmatpush1.msra.mxu0 0.0
    %270 = vmatprep.subr.mxu0 0.0
    %271 = vmatpush1.msra.mxu0 0.0
    %272 = vmatprep.subr.mxu0 0.0
    %273 = vmatpush1.msra.mxu0 0.0
    %274 = vmatprep.subr.mxu0 0.0
    %275 = vmatpush1.msra.mxu0 0.0
    %276 = vmatprep.mubr.f32.mxu0 0.0
    %277 = vmatmul.mubr.f32.gmra.mrb[0].mxu0 %v208
    %v278 = vpop.f32.mrb[0].mxu0
    %v279 = vadd.f32 %v205, %v278
    %v280 = vpop.f32.mrb[0].mxu0
    %281 = vmatprep.mubr.f32.mxu0 0.0
    %282 = vmatmul.mubr.f32.gmra.mrb[0].mxu0 %v210
    %v283 = vpop.f32.mrb[0].mxu0
    %v284 = vadd.f32 %v205, %v283
    %v285 = vpop.f32.mrb[0].mxu0
    %286 = vdwg.mxu0
    %v289 = vcombine.high %v279, %v279
    %v291 = vunpack.c.l.s4 1983009808
    %v292 = vunpack.c.0.s8 %v291
    %v293 = vlaneseq
    %v294 = vshrl.u32 %v293, 7
    %v295 = vsub.s32 %v292, %v294
    %v296 = vrot.slane %v279, %v295
    %v298 = vunpack.c.l.s4 1983009808
    %v299 = vunpack.c.0.s8 %v298
    %v300 = vlaneseq
    %v301 = vshrl.u32 %v300, 7
    %v302 = vsub.s32 %v299, %v301
    %v303 = vrot.slane %v289, %v302
    %v304 = vcombine.high %v296, %v296
    %v305 = vcombine.high %v303, %v303
    %v306 = vcombine.high %v284, %v284
    %v308 = vunpack.c.l.s4 1983009808
    %v309 = vunpack.c.0.s8 %v308
    %v310 = vlaneseq
    %v311 = vshrl.u32 %v310, 7
    %v312 = vsub.s32 %v309, %v311
    %v313 = vrot.slane %v284, %v312
    %v315 = vunpack.c.l.s4 1983009808
    %v316 = vunpack.c.0.s8 %v315
    %v317 = vlaneseq
    %v318 = vshrl.u32 %v317, 7
    %v319 = vsub.s32 %v316, %v318
    %v320 = vrot.slane %v306, %v319
    %v321 = vcombine.high %v313, %v313
    %v322 = vcombine.high %v320, %v320
    %vm331 = vcmask 517120
    %332 = vst.msk [vmem:[#allocation2] sm:$0x3] %vm331, %v296
    %333 = vst.msk [vmem:[#allocation2 + $0x2] sm:$0x3] %vm331, %v304
    %334 = vst.msk [vmem:[#allocation2 + $0x4] sm:$0x3] %vm331, %v303
    %335 = vst.msk [vmem:[#allocation2 + $0x6] sm:$0x3] %vm331, %v305
    %336 = vst.msk [vmem:[#allocation2 + $0x8] sm:$0x3] %vm331, %v313
    %337 = vst.msk [vmem:[#allocation2 + $0xa] sm:$0x3] %vm331, %v321
    %338 = vst.msk [vmem:[#allocation2 + $0xc] sm:$0x3] %vm331, %v320
    %339 = vst.msk [vmem:[#allocation2 + $0xe] sm:$0x3] %vm331, %v322
    %v340 = vld [vmem:[%s8] sm:$0xff]
    %v341 = vld [vmem:[%s8 + $0x8] sm:$0xff]
    %v342 = vld [vmem:[%s8 + $0x10] sm:$0xff]
    %v343 = vld [vmem:[%s8 + $0x18] sm:$0xff]
    %v344 = vld [vmem:[%s10] sm:$0x1]
    %v346 = vlaneseq
    %v347 = vshrl.u32 %v346, 7
    %v348 = vsub.s32 0, %v347
    %v349 = vrot.slane %v344, %v348
    %v350 = vcombine.low %v349, %v349
    %v352 = vunpack.c.l.s4 1983009808
    %v353 = vunpack.c.0.s8 %v352
    %v354 = vlaneseq
    %v355 = vshrl.u32 %v354, 7
    %v356 = vsub.s32 %v353, %v355
    %v357 = vrot.slane %v350, %v356
    %v358 = vcombine.low %v357, %v357
    %360 = vmatprep.subr.mxu0 0.0
    %361 = vmatpush1.msra.mxu0 %v340
    %362 = vmatprep.subr.mxu0 0.0
    %363 = vmatpush1.msra.mxu0 %v341
    %364 = vmatprep.subr.mxu0 0.0
    %365 = vmatpush1.msra.mxu0 %v342
    %366 = vmatprep.subr.mxu0 0.0
    %367 = vmatpush1.msra.mxu0 %v343
    %368 = vmatprep.subr.mxu0 0.0
    %369 = vmatpush1.msra.mxu0 0.0
    %370 = vmatprep.subr.mxu0 0.0
    %371 = vmatpush1.msra.mxu0 0.0
    %372 = vmatprep.subr.mxu0 0.0
    %373 = vmatpush1.msra.mxu0 0.0
    %374 = vmatprep.subr.mxu0 0.0
    %375 = vmatpush1.msra.mxu0 0.0
    %376 = vmatprep.subr.mxu0 0.0
    %377 = vmatpush1.msra.mxu0 0.0
    %378 = vmatprep.subr.mxu0 0.0
    %379 = vmatpush1.msra.mxu0 0.0
    %380 = vmatprep.subr.mxu0 0.0
    %381 = vmatpush1.msra.mxu0 0.0
    %382 = vmatprep.subr.mxu0 0.0
    %383 = vmatpush1.msra.mxu0 0.0
    %384 = vmatprep.subr.mxu0 0.0
    %385 = vmatpush1.msra.mxu0 0.0
    %386 = vmatprep.subr.mxu0 0.0
    %387 = vmatpush1.msra.mxu0 0.0
    %388 = vmatprep.subr.mxu0 0.0
    %389 = vmatpush1.msra.mxu0 0.0
    %390 = vmatprep.subr.mxu0 0.0
    %391 = vmatpush1.msra.mxu0 0.0
    %392 = vmatprep.subr.mxu0 0.0
    %393 = vmatpush1.msra.mxu0 0.0
    %394 = vmatprep.subr.mxu0 0.0
    %395 = vmatpush1.msra.mxu0 0.0
    %396 = vmatprep.subr.mxu0 0.0
    %397 = vmatpush1.msra.mxu0 0.0
    %398 = vmatprep.subr.mxu0 0.0
    %399 = vmatpush1.msra.mxu0 0.0
    %400 = vmatprep.subr.mxu0 0.0
    %401 = vmatpush1.msra.mxu0 0.0
    %402 = vmatprep.subr.mxu0 0.0
    %403 = vmatpush1.msra.mxu0 0.0
    %404 = vmatprep.subr.mxu0 0.0
    %405 = vmatpush1.msra.mxu0 0.0
    %406 = vmatprep.subr.mxu0 0.0
    %407 = vmatpush1.msra.mxu0 0.0
    %408 = vmatprep.subr.mxu0 0.0
    %409 = vmatpush1.msra.mxu0 0.0
    %410 = vmatprep.subr.mxu0 0.0
    %411 = vmatpush1.msra.mxu0 0.0
    %412 = vmatprep.subr.mxu0 0.0
    %413 = vmatpush1.msra.mxu0 0.0
    %414 = vmatprep.subr.mxu0 0.0
    %415 = vmatpush1.msra.mxu0 0.0
    %416 = vmatprep.subr.mxu0 0.0
    %417 = vmatpush1.msra.mxu0 0.0
    %418 = vmatprep.subr.mxu0 0.0
    %419 = vmatpush1.msra.mxu0 0.0
    %420 = vmatprep.subr.mxu0 0.0
    %421 = vmatpush1.msra.mxu0 0.0
    %422 = vmatprep.subr.mxu0 0.0
    %423 = vmatpush1.msra.mxu0 0.0
    %424 = vmatprep.mubr.f32.mxu0 0.0
    %425 = vmatmul.mubr.f32.gmra.mrb[0].mxu0 %v208
    %v426 = vpop.f32.mrb[0].mxu0
    %v427 = vadd.f32 %v358, %v426
    %v428 = vpop.f32.mrb[0].mxu0
    %429 = vmatprep.mubr.f32.mxu0 0.0
    %430 = vmatmul.mubr.f32.gmra.mrb[0].mxu0 %v210
    %v431 = vpop.f32.mrb[0].mxu0
    %v432 = vadd.f32 %v358, %v431
    %v433 = vpop.f32.mrb[0].mxu0
    %434 = vdwg.mxu0
    %v437 = vcombine.high %v427, %v427
    %v439 = vunpack.c.l.s4 1983009808
    %v440 = vunpack.c.0.s8 %v439
    %v441 = vlaneseq
    %v442 = vshrl.u32 %v441, 7
    %v443 = vsub.s32 %v440, %v442
    %v444 = vrot.slane %v427, %v443
    %v446 = vunpack.c.l.s4 1983009808
    %v447 = vunpack.c.0.s8 %v446
    %v448 = vlaneseq
    %v449 = vshrl.u32 %v448, 7
    %v450 = vsub.s32 %v447, %v449
    %v451 = vrot.slane %v437, %v450
    %v452 = vcombine.high %v444, %v444
    %v453 = vcombine.high %v451, %v451
    %v454 = vcombine.high %v432, %v432
    %v456 = vunpack.c.l.s4 1983009808
    %v457 = vunpack.c.0.s8 %v456
    %v458 = vlaneseq
    %v459 = vshrl.u32 %v458, 7
    %v460 = vsub.s32 %v457, %v459
    %v461 = vrot.slane %v432, %v460
    %v463 = vunpack.c.l.s4 1983009808
    %v464 = vunpack.c.0.s8 %v463
    %v465 = vlaneseq
    %v466 = vshrl.u32 %v465, 7
    %v467 = vsub.s32 %v464, %v466
    %v468 = vrot.slane %v454, %v467
    %v469 = vcombine.high %v461, %v461
    %v470 = vcombine.high %v468, %v468
    %479 = vst.msk [vmem:[#allocation3] sm:$0x3] %vm331, %v444
    %480 = vst.msk [vmem:[#allocation3 + $0x2] sm:$0x3] %vm331, %v452
    %481 = vst.msk [vmem:[#allocation3 + $0x4] sm:$0x3] %vm331, %v451
    %482 = vst.msk [vmem:[#allocation3 + $0x6] sm:$0x3] %vm331, %v453
    %483 = vst.msk [vmem:[#allocation3 + $0x8] sm:$0x3] %vm331, %v461
    %484 = vst.msk [vmem:[#allocation3 + $0xa] sm:$0x3] %vm331, %v469
    %485 = vst.msk [vmem:[#allocation3 + $0xc] sm:$0x3] %vm331, %v468
    %486 = vst.msk [vmem:[#allocation3 + $0xe] sm:$0x3] %vm331, %v470
    %v487 = vld [vmem:[#allocation11] sm:$0xff]
    %v488 = vld [vmem:[#allocation11 + $0x8] sm:$0xff]
    %v489 = vld [vmem:[#allocation13] sm:$0xff]
    %v490 = vld [vmem:[#allocation13 + $0x8] sm:$0xff]
    %v491 = vld [vmem:[%s1] sm:$0x3]
    %s492 = scalar_lea.vmem %s1, 14
    %v493 = vld [vmem:[%s492] sm:$0x3]
    %v494 = vld [vmem:[#allocation2] sm:$0x3]
    %vm495 = vcmask 130048
    %v497 = vsel %vm495, 0.0, 0
    %499 = vmatprep.subr.mxu0 0.0
    %500 = vmatpush1.msra.mxu0 %v487
    %501 = vmatprep.subr.mxu0 0.0
    %502 = vmatpush1.msra.mxu0 %v488
    %503 = vmatprep.subr.mxu0 0.0
    %504 = vmatpush1.msra.mxu0 0.0
    %505 = vmatprep.subr.mxu0 0.0
    %506 = vmatpush1.msra.mxu0 0.0
    %507 = vmatprep.subr.mxu0 0.0
    %508 = vmatpush1.msra.mxu0 0.0
    %509 = vmatprep.subr.mxu0 0.0
    %510 = vmatpush1.msra.mxu0 0.0
    %511 = vmatprep.subr.mxu0 0.0
    %512 = vmatpush1.msra.mxu0 0.0
    %513 = vmatprep.subr.mxu0 0.0
    %514 = vmatpush1.msra.mxu0 0.0
    %515 = vmatprep.subr.mxu0 0.0
    %516 = vmatpush1.msra.mxu0 0.0
    %517 = vmatprep.subr.mxu0 0.0
    %518 = vmatpush1.msra.mxu0 0.0
    %519 = vmatprep.subr.mxu0 0.0
    %520 = vmatpush1.msra.mxu0 0.0
    %521 = vmatprep.subr.mxu0 0.0
    %522 = vmatpush1.msra.mxu0 0.0
    %523 = vmatprep.subr.mxu0 0.0
    %524 = vmatpush1.msra.mxu0 0.0
    %525 = vmatprep.subr.mxu0 0.0
    %526 = vmatpush1.msra.mxu0 0.0
    %527 = vmatprep.subr.mxu0 0.0
    %528 = vmatpush1.msra.mxu0 0.0
    %529 = vmatprep.subr.mxu0 0.0
    %530 = vmatpush1.msra.mxu0 0.0
    %531 = vmatprep.subr.mxu0 0.0
    %532 = vmatpush1.msra.mxu0 0.0
    %533 = vmatprep.subr.mxu0 0.0
    %534 = vmatpush1.msra.mxu0 0.0
    %535 = vmatprep.subr.mxu0 0.0
    %536 = vmatpush1.msra.mxu0 0.0
    %537 = vmatprep.subr.mxu0 0.0
    %538 = vmatpush1.msra.mxu0 0.0
    %539 = vmatprep.subr.mxu0 0.0
    %540 = vmatpush1.msra.mxu0 0.0
    %541 = vmatprep.subr.mxu0 0.0
    %542 = vmatpush1.msra.mxu0 0.0
    %543 = vmatprep.subr.mxu0 0.0
    %544 = vmatpush1.msra.mxu0 0.0
    %545 = vmatprep.subr.mxu0 0.0
    %546 = vmatpush1.msra.mxu0 0.0
    %547 = vmatprep.subr.mxu0 0.0
    %548 = vmatpush1.msra.mxu0 0.0
    %549 = vmatprep.subr.mxu0 0.0
    %550 = vmatpush1.msra.mxu0 0.0
    %551 = vmatprep.subr.mxu0 0.0
    %552 = vmatpush1.msra.mxu0 0.0
    %553 = vmatprep.subr.mxu0 0.0
    %554 = vmatpush1.msra.mxu0 0.0
    %555 = vmatprep.subr.mxu0 0.0
    %556 = vmatpush1.msra.mxu0 0.0
    %557 = vmatprep.subr.mxu0 0.0
    %558 = vmatpush1.msra.mxu0 0.0
    %559 = vmatprep.subr.mxu0 0.0
    %560 = vmatpush1.msra.mxu0 0.0
    %561 = vmatprep.subr.mxu0 0.0
    %562 = vmatpush1.msra.mxu0 0.0
    %563 = vmatprep.mubr.f32.mxu0 0.0
    %564 = vmatmul.mubr.f32.gmra.mrb[0].mxu0 %v497
    %v565 = vpop.f32.mrb[0].mxu0
    %v566 = vadd.f32 0.0, %v565
    %v567 = vpop.f32.mrb[0].mxu0
    %568 = vdwg.mxu0
    %v569 = vadd.f32 %v494, %v566
    %s570 = scalar_lea.vmem [#allocation3], 14
    %v571 = vld [vmem:[%s570] sm:$0x3]
    %572 = vmatprep.subr.mxu0 0.0
    %573 = vmatpush1.msra.mxu0 %v489
    %574 = vmatprep.subr.mxu0 0.0
    %575 = vmatpush1.msra.mxu0 %v490
    %576 = vmatprep.subr.mxu0 0.0
    %577 = vmatpush1.msra.mxu0 0.0
    %578 = vmatprep.subr.mxu0 0.0
    %579 = vmatpush1.msra.mxu0 0.0
    %580 = vmatprep.subr.mxu0 0.0
    %581 = vmatpush1.msra.mxu0 0.0
    %582 = vmatprep.subr.mxu0 0.0
    %583 = vmatpush1.msra.mxu0 0.0
    %584 = vmatprep.subr.mxu0 0.0
    %585 = vmatpush1.msra.mxu0 0.0
    %586 = vmatprep.subr.mxu0 0.0
    %587 = vmatpush1.msra.mxu0 0.0
    %588 = vmatprep.subr.mxu0 0.0
    %589 = vmatpush1.msra.mxu0 0.0
    %590 = vmatprep.subr.mxu0 0.0
    %591 = vmatpush1.msra.mxu0 0.0
    %592 = vmatprep.subr.mxu0 0.0
    %593 = vmatpush1.msra.mxu0 0.0
    %594 = vmatprep.subr.mxu0 0.0
    %595 = vmatpush1.msra.mxu0 0.0
    %596 = vmatprep.subr.mxu0 0.0
    %597 = vmatpush1.msra.mxu0 0.0
    %598 = vmatprep.subr.mxu0 0.0
    %599 = vmatpush1.msra.mxu0 0.0
    %600 = vmatprep.subr.mxu0 0.0
    %601 = vmatpush1.msra.mxu0 0.0
    %602 = vmatprep.subr.mxu0 0.0
    %603 = vmatpush1.msra.mxu0 0.0
    %604 = vmatprep.subr.mxu0 0.0
    %605 = vmatpush1.msra.mxu0 0.0
    %606 = vmatprep.subr.mxu0 0.0
    %607 = vmatpush1.msra.mxu0 0.0
    %608 = vmatprep.subr.mxu0 0.0
    %609 = vmatpush1.msra.mxu0 0.0
    %610 = vmatprep.subr.mxu0 0.0
    %611 = vmatpush1.msra.mxu0 0.0
    %612 = vmatprep.subr.mxu0 0.0
    %613 = vmatpush1.msra.mxu0 0.0
    %614 = vmatprep.subr.mxu0 0.0
    %615 = vmatpush1.msra.mxu0 0.0
    %616 = vmatprep.subr.mxu0 0.0
    %617 = vmatpush1.msra.mxu0 0.0
    %618 = vmatprep.subr.mxu0 0.0
    %619 = vmatpush1.msra.mxu0 0.0
    %620 = vmatprep.subr.mxu0 0.0
    %621 = vmatpush1.msra.mxu0 0.0
    %622 = vmatprep.subr.mxu0 0.0
    %623 = vmatpush1.msra.mxu0 0.0
    %624 = vmatprep.subr.mxu0 0.0
    %625 = vmatpush1.msra.mxu0 0.0
    %626 = vmatprep.subr.mxu0 0.0
    %627 = vmatpush1.msra.mxu0 0.0
    %628 = vmatprep.subr.mxu0 0.0
    %629 = vmatpush1.msra.mxu0 0.0
    %630 = vmatprep.subr.mxu0 0.0
    %631 = vmatpush1.msra.mxu0 0.0
    %632 = vmatprep.subr.mxu0 0.0
    %633 = vmatpush1.msra.mxu0 0.0
    %634 = vmatprep.subr.mxu0 0.0
    %635 = vmatpush1.msra.mxu0 0.0
    %636 = vmatprep.mubr.f32.mxu0 0.0
    %637 = vmatmul.mubr.f32.gmra.mrb[0].mxu0 %v497
    %v638 = vpop.f32.mrb[0].mxu0
    %v639 = vadd.f32 0.0, %v638
    %v640 = vpop.f32.mrb[0].mxu0
    %641 = vdwg.mxu0
    %v642 = vadd.f32 %v571, %v639
    %v643 = vxor.u32 %v569, 2147483648
    %v644 = vmul.f32 %v643, 1.442695
    %v645 = vpow.pop %v644
    %v646 = vadd.f32 %v645, 1.0
    %v647 = vrcp.pop %v646
    %v648 = vmul.f32 1.0, %v647
    %v649 = vtanh.pop %v569
    %v650 = vmul.f32 %v648, 0.0
    %652 = vrot.lane.b32.xlu0 %v649, 80
    %v653 = vpop.permute.xlu0 %652
    %v655 = vmul.f32 %v648, %v653
    %657 = vrot.lane.b32.xlu0 %v655, 16
    %v658 = vpop.permute.xlu0 %657
    %v660 = vadd.f32 %v650, %v658
    %v661 = vtanh.pop %v660
    %663 = vrot.lane.b32.xlu0 %v661, 16
    %v664 = vpop.permute.xlu0 %663
    %v666 = vmul.f32 %v648, %v664
    %v667 = vxor.u32 %v642, 2147483648
    %v668 = vmul.f32 %v667, 1.442695
    %v669 = vpow.pop %v668
    %v670 = vadd.f32 %v669, 1.0
    %v671 = vrcp.pop %v670
    %v672 = vmul.f32 1.0, %v671
    %v673 = vtanh.pop %v642
    %v674 = vmul.f32 %v672, 0.0
    %676 = vrot.lane.b32.xlu0 %v673, 80
    %v677 = vpop.permute.xlu0 %676
    %v679 = vmul.f32 %v672, %v677
    %681 = vrot.lane.b32.xlu0 %v679, 16
    %v682 = vpop.permute.xlu0 %681
    %v684 = vadd.f32 %v674, %v682
    %v685 = vtanh.pop %v684
    %687 = vrot.lane.b32.xlu0 %v685, 16
    %v688 = vpop.permute.xlu0 %687
    %v690 = vmul.f32 %v672, %v688
    %692 = vset.pattern.permute.xlu0 0
    %693 = vperm.xlu0 %692, %v491
    %v694 = vpop.permute.xlu0 %693
    %v696 = vmul.f32 %v694, %v666
    %698 = vrot.lane.b32.xlu0 %v696, 96
    %v699 = vpop.permute.xlu0 %698
    %vm701 = vcmask 123904
    %702 = vst.msk [vmem:[#allocation4] sm:$0x3] %vm701, %v699
    %704 = vset.pattern.permute.xlu0 0
    %705 = vperm.xlu0 %704, %v493
    %v706 = vpop.permute.xlu0 %705
    %v708 = vmul.f32 %v706, %v690
    %710 = vrot.lane.b32.xlu0 %v708, 112
    %v711 = vpop.permute.xlu0 %710
    %s713 = scalar_lea.vmem [#allocation4], 14
    %vm714 = vcmask 255104
    %715 = vst.msk [vmem:[%s713] sm:$0x3] %vm714, %v711
    %v716 = vsub.f32 1.0, %v491
    %718 = vset.pattern.permute.xlu0 0
    %719 = vperm.xlu0 %718, %v716
    %v720 = vpop.permute.xlu0 %719
    %v722 = vmul.f32 %v720, 0.0
    %v723 = vadd.f32 %v696, %v722
    %v724 = vmul.f32 %v694, %v660
    %v725 = vadd.f32 %v724, %v722
    %v726 = vsub.f32 1.0, %v493
    %728 = vset.pattern.permute.xlu0 0
    %729 = vperm.xlu0 %728, %v726
    %v730 = vpop.permute.xlu0 %729
    %v732 = vmul.f32 %v730, 0.0
    %v733 = vadd.f32 %v708, %v732
    %v734 = vmul.f32 %v706, %v684
    %v735 = vadd.f32 %v734, %v732
    %s736 = scalar_lea.vmem %s1, 2
    %v737 = vld [vmem:[%s736] sm:$0x3]
    %s738 = scalar_lea.vmem %s1, 12
    %v739 = vld [vmem:[%s738] sm:$0x3]
    %s740 = scalar_lea.vmem [#allocation2], 2
    %v741 = vld [vmem:[%s740] sm:$0x3]
    %743 = vrot.lane.b32.xlu0 %v723, 96
    %v744 = vpop.permute.xlu0 %743
    %v745 = vsel %vm495, %v744, 0
    %747 = vmatprep.subr.mxu0 0.0
    %748 = vmatpush1.msra.mxu0 %v487
    %749 = vmatprep.subr.mxu0 0.0
    %750 = vmatpush1.msra.mxu0 %v488
    %751 = vmatprep.subr.mxu0 0.0
    %752 = vmatpush1.msra.mxu0 0.0
    %753 = vmatprep.subr.mxu0 0.0
    %754 = vmatpush1.msra.mxu0 0.0
    %755 = vmatprep.subr.mxu0 0.0
    %756 = vmatpush1.msra.mxu0 0.0
    %757 = vmatprep.subr.mxu0 0.0
    %758 = vmatpush1.msra.mxu0 0.0
    %759 = vmatprep.subr.mxu0 0.0
    %760 = vmatpush1.msra.mxu0 0.0
    %761 = vmatprep.subr.mxu0 0.0
    %762 = vmatpush1.msra.mxu0 0.0
    %763 = vmatprep.subr.mxu0 0.0
    %764 = vmatpush1.msra.mxu0 0.0
    %765 = vmatprep.subr.mxu0 0.0
    %766 = vmatpush1.msra.mxu0 0.0
    %767 = vmatprep.subr.mxu0 0.0
    %768 = vmatpush1.msra.mxu0 0.0
    %769 = vmatprep.subr.mxu0 0.0
    %770 = vmatpush1.msra.mxu0 0.0
    %771 = vmatprep.subr.mxu0 0.0
    %772 = vmatpush1.msra.mxu0 0.0
    %773 = vmatprep.subr.mxu0 0.0
    %774 = vmatpush1.msra.mxu0 0.0
    %775 = vmatprep.subr.mxu0 0.0
    %776 = vmatpush1.msra.mxu0 0.0
    %777 = vmatprep.subr.mxu0 0.0
    %778 = vmatpush1.msra.mxu0 0.0
    %779 = vmatprep.subr.mxu0 0.0
    %780 = vmatpush1.msra.mxu0 0.0
    %781 = vmatprep.subr.mxu0 0.0
    %782 = vmatpush1.msra.mxu0 0.0
    %783 = vmatprep.subr.mxu0 0.0
    %784 = vmatpush1.msra.mxu0 0.0
    %785 = vmatprep.subr.mxu0 0.0
    %786 = vmatpush1.msra.mxu0 0.0
    %787 = vmatprep.subr.mxu0 0.0
    %788 = vmatpush1.msra.mxu0 0.0
    %789 = vmatprep.subr.mxu0 0.0
    %790 = vmatpush1.msra.mxu0 0.0
    %791 = vmatprep.subr.mxu0 0.0
    %792 = vmatpush1.msra.mxu0 0.0
    %793 = vmatprep.subr.mxu0 0.0
    %794 = vmatpush1.msra.mxu0 0.0
    %795 = vmatprep.subr.mxu0 0.0
    %796 = vmatpush1.msra.mxu0 0.0
    %797 = vmatprep.subr.mxu0 0.0
    %798 = vmatpush1.msra.mxu0 0.0
    %799 = vmatprep.subr.mxu0 0.0
    %800 = vmatpush1.msra.mxu0 0.0
    %801 = vmatprep.subr.mxu0 0.0
    %802 = vmatpush1.msra.mxu0 0.0
    %803 = vmatprep.subr.mxu0 0.0
    %804 = vmatpush1.msra.mxu0 0.0
    %805 = vmatprep.subr.mxu0 0.0
    %806 = vmatpush1.msra.mxu0 0.0
    %807 = vmatprep.subr.mxu0 0.0
    %808 = vmatpush1.msra.mxu0 0.0
    %809 = vmatprep.subr.mxu0 0.0
    %810 = vmatpush1.msra.mxu0 0.0
    %811 = vmatprep.mubr.f32.mxu0 0.0
    %812 = vmatmul.mubr.f32.gmra.mrb[0].mxu0 %v745
    %v813 = vpop.f32.mrb[0].mxu0
    %v814 = vadd.f32 0.0, %v813
    %v815 = vpop.f32.mrb[0].mxu0
    %816 = vdwg.mxu0
    %v817 = vadd.f32 %v741, %v814
    %s818 = scalar_lea.vmem [#allocation3], 12
    %v819 = vld [vmem:[%s818] sm:$0x3]
    %821 = vrot.lane.b32.xlu0 %v733, 96
    %v822 = vpop.permute.xlu0 %821
    %v823 = vsel %vm495, %v822, 0
    %825 = vmatprep.subr.mxu0 0.0
    %826 = vmatpush1.msra.mxu0 %v489
    %827 = vmatprep.subr.mxu0 0.0
    %828 = vmatpush1.msra.mxu0 %v490
    %829 = vmatprep.subr.mxu0 0.0
    %830 = vmatpush1.msra.mxu0 0.0
    %831 = vmatprep.subr.mxu0 0.0
    %832 = vmatpush1.msra.mxu0 0.0
    %833 = vmatprep.subr.mxu0 0.0
    %834 = vmatpush1.msra.mxu0 0.0
    %835 = vmatprep.subr.mxu0 0.0
    %836 = vmatpush1.msra.mxu0 0.0
    %837 = vmatprep.subr.mxu0 0.0
    %838 = vmatpush1.msra.mxu0 0.0
    %839 = vmatprep.subr.mxu0 0.0
    %840 = vmatpush1.msra.mxu0 0.0
    %841 = vmatprep.subr.mxu0 0.0
    %842 = vmatpush1.msra.mxu0 0.0
    %843 = vmatprep.subr.mxu0 0.0
    %844 = vmatpush1.msra.mxu0 0.0
    %845 = vmatprep.subr.mxu0 0.0
    %846 = vmatpush1.msra.mxu0 0.0
    %847 = vmatprep.subr.mxu0 0.0
    %848 = vmatpush1.msra.mxu0 0.0
    %849 = vmatprep.subr.mxu0 0.0
    %850 = vmatpush1.msra.mxu0 0.0
    %851 = vmatprep.subr.mxu0 0.0
    %852 = vmatpush1.msra.mxu0 0.0
    %853 = vmatprep.subr.mxu0 0.0
    %854 = vmatpush1.msra.mxu0 0.0
    %855 = vmatprep.subr.mxu0 0.0
    %856 = vmatpush1.msra.mxu0 0.0
    %857 = vmatprep.subr.mxu0 0.0
    %858 = vmatpush1.msra.mxu0 0.0
    %859 = vmatprep.subr.mxu0 0.0
    %860 = vmatpush1.msra.mxu0 0.0
    %861 = vmatprep.subr.mxu0 0.0
    %862 = vmatpush1.msra.mxu0 0.0
    %863 = vmatprep.subr.mxu0 0.0
    %864 = vmatpush1.msra.mxu0 0.0
    %865 = vmatprep.subr.mxu0 0.0
    %866 = vmatpush1.msra.mxu0 0.0
    %867 = vmatprep.subr.mxu0 0.0
    %868 = vmatpush1.msra.mxu0 0.0
    %869 = vmatprep.subr.mxu0 0.0
    %870 = vmatpush1.msra.mxu0 0.0
    %871 = vmatprep.subr.mxu0 0.0
    %872 = vmatpush1.msra.mxu0 0.0
    %873 = vmatprep.subr.mxu0 0.0
    %874 = vmatpush1.msra.mxu0 0.0
    %875 = vmatprep.subr.mxu0 0.0
    %876 = vmatpush1.msra.mxu0 0.0
    %877 = vmatprep.subr.mxu0 0.0
    %878 = vmatpush1.msra.mxu0 0.0
    %879 = vmatprep.subr.mxu0 0.0
    %880 = vmatpush1.msra.mxu0 0.0
    %881 = vmatprep.subr.mxu0 0.0
    %882 = vmatpush1.msra.mxu0 0.0
    %883 = vmatprep.subr.mxu0 0.0
    %884 = vmatpush1.msra.mxu0 0.0
    %885 = vmatprep.subr.mxu0 0.0
    %886 = vmatpush1.msra.mxu0 0.0
    %887 = vmatprep.subr.mxu0 0.0
    %888 = vmatpush1.msra.mxu0 0.0
    %889 = vmatprep.mubr.f32.mxu0 0.0
    %890 = vmatmul.mubr.f32.gmra.mrb[0].mxu0 %v823
    %v891 = vpop.f32.mrb[0].mxu0
    %v892 = vadd.f32 0.0, %v891
    %v893 = vpop.f32.mrb[0].mxu0
    %894 = vdwg.mxu0
    %v895 = vadd.f32 %v819, %v892
    %v896 = vxor.u32 %v817, 2147483648
    %v897 = vmul.f32 %v896, 1.442695
    %v898 = vpow.pop %v897
    %v899 = vadd.f32 %v898, 1.0
    %v900 = vrcp.pop %v899
    %v901 = vmul.f32 1.0, %v900
    %v902 = vtanh.pop %v817
    %v903 = vmul.f32 %v901, %v725
    %905 = vrot.lane.b32.xlu0 %v902, 80
    %v906 = vpop.permute.xlu0 %905
    %v908 = vmul.f32 %v901, %v906
    %910 = vrot.lane.b32.xlu0 %v908, 16
    %v911 = vpop.permute.xlu0 %910
    %v913 = vadd.f32 %v903, %v911
    %v914 = vtanh.pop %v913
    %916 = vrot.lane.b32.xlu0 %v914, 16
    %v917 = vpop.permute.xlu0 %916
    %v919 = vmul.f32 %v901, %v917
    %v920 = vxor.u32 %v895, 2147483648
    %v921 = vmul.f32 %v920, 1.442695
    %v922 = vpow.pop %v921
    %v923 = vadd.f32 %v922, 1.0
    %v924 = vrcp.pop %v923
    %v925 = vmul.f32 1.0, %v924
    %v926 = vtanh.pop %v895
    %v927 = vmul.f32 %v925, %v735
    %929 = vrot.lane.b32.xlu0 %v926, 80
    %v930 = vpop.permute.xlu0 %929
    %v932 = vmul.f32 %v925, %v930
    %934 = vrot.lane.b32.xlu0 %v932, 16
    %v935 = vpop.permute.xlu0 %934
    %v937 = vadd.f32 %v927, %v935
    %v938 = vtanh.pop %v937
    %940 = vrot.lane.b32.xlu0 %v938, 16
    %v941 = vpop.permute.xlu0 %940
    %v943 = vmul.f32 %v925, %v941
    %945 = vset.pattern.permute.xlu0 0
    %946 = vperm.xlu0 %945, %v737
    %v947 = vpop.permute.xlu0 %946
    %v949 = vmul.f32 %v947, %v919
    %951 = vrot.lane.b32.xlu0 %v949, 96
    %v952 = vpop.permute.xlu0 %951
    %s954 = scalar_lea.vmem [#allocation4], 2
    %955 = vst.msk [vmem:[%s954] sm:$0x3] %vm701, %v952
    %957 = vset.pattern.permute.xlu0 0
    %958 = vperm.xlu0 %957, %v739
    %v959 = vpop.permute.xlu0 %958
    %v961 = vmul.f32 %v959, %v943
    %963 = vrot.lane.b32.xlu0 %v961, 112
    %v964 = vpop.permute.xlu0 %963
    %s966 = scalar_lea.vmem [#allocation4], 12
    %967 = vst.msk [vmem:[%s966] sm:$0x3] %vm714, %v964
    %v968 = vsub.f32 1.0, %v737
    %970 = vset.pattern.permute.xlu0 0
    %971 = vperm.xlu0 %970, %v968
    %v972 = vpop.permute.xlu0 %971
    %v974 = vmul.f32 %v972, %v723
    %v975 = vadd.f32 %v949, %v974
    %v976 = vmul.f32 %v947, %v913
    %v977 = vmul.f32 %v972, %v725
    %v978 = vadd.f32 %v976, %v977
    %v979 = vsub.f32 1.0, %v739
    %981 = vset.pattern.permute.xlu0 0
    %982 = vperm.xlu0 %981, %v979
    %v983 = vpop.permute.xlu0 %982
    %v985 = vmul.f32 %v983, %v733
    %v986 = vadd.f32 %v961, %v985
    %v987 = vmul.f32 %v959, %v937
    %v988 = vmul.f32 %v983, %v735
    %v989 = vadd.f32 %v987, %v988
    %s990 = scalar_lea.vmem %s1, 4
    %v991 = vld [vmem:[%s990] sm:$0x3]
    %s992 = scalar_lea.vmem %s1, 10
    %v993 = vld [vmem:[%s992] sm:$0x3]
    %s994 = scalar_lea.vmem [#allocation2], 4
    %v995 = vld [vmem:[%s994] sm:$0x3]
    %997 = vrot.lane.b32.xlu0 %v975, 96
    %v998 = vpop.permute.xlu0 %997
    %v999 = vsel %vm495, %v998, 0
    %1001 = vmatprep.subr.mxu0 0.0
    %1002 = vmatpush1.msra.mxu0 %v487
    %1003 = vmatprep.subr.mxu0 0.0
    %1004 = vmatpush1.msra.mxu0 %v488
    %1005 = vmatprep.subr.mxu0 0.0
    %1006 = vmatpush1.msra.mxu0 0.0
    %1007 = vmatprep.subr.mxu0 0.0
    %1008 = vmatpush1.msra.mxu0 0.0
    %1009 = vmatprep.subr.mxu0 0.0
    %1010 = vmatpush1.msra.mxu0 0.0
    %1011 = vmatprep.subr.mxu0 0.0
    %1012 = vmatpush1.msra.mxu0 0.0
    %1013 = vmatprep.subr.mxu0 0.0
    %1014 = vmatpush1.msra.mxu0 0.0
    %1015 = vmatprep.subr.mxu0 0.0
    %1016 = vmatpush1.msra.mxu0 0.0
    %1017 = vmatprep.subr.mxu0 0.0
    %1018 = vmatpush1.msra.mxu0 0.0
    %1019 = vmatprep.subr.mxu0 0.0
    %1020 = vmatpush1.msra.mxu0 0.0
    %1021 = vmatprep.subr.mxu0 0.0
    %1022 = vmatpush1.msra.mxu0 0.0
    %1023 = vmatprep.subr.mxu0 0.0
    %1024 = vmatpush1.msra.mxu0 0.0
    %1025 = vmatprep.subr.mxu0 0.0
    %1026 = vmatpush1.msra.mxu0 0.0
    %1027 = vmatprep.subr.mxu0 0.0
    %1028 = vmatpush1.msra.mxu0 0.0
    %1029 = vmatprep.subr.mxu0 0.0
    %1030 = vmatpush1.msra.mxu0 0.0
    %1031 = vmatprep.subr.mxu0 0.0
    %1032 = vmatpush1.msra.mxu0 0.0
    %1033 = vmatprep.subr.mxu0 0.0
    %1034 = vmatpush1.msra.mxu0 0.0
    %1035 = vmatprep.subr.mxu0 0.0
    %1036 = vmatpush1.msra.mxu0 0.0
    %1037 = vmatprep.subr.mxu0 0.0
    %1038 = vmatpush1.msra.mxu0 0.0
    %1039 = vmatprep.subr.mxu0 0.0
    %1040 = vmatpush1.msra.mxu0 0.0
    %1041 = vmatprep.subr.mxu0 0.0
    %1042 = vmatpush1.msra.mxu0 0.0
    %1043 = vmatprep.subr.mxu0 0.0
    %1044 = vmatpush1.msra.mxu0 0.0
    %1045 = vmatprep.subr.mxu0 0.0
    %1046 = vmatpush1.msra.mxu0 0.0
    %1047 = vmatprep.subr.mxu0 0.0
    %1048 = vmatpush1.msra.mxu0 0.0
    %1049 = vmatprep.subr.mxu0 0.0
    %1050 = vmatpush1.msra.mxu0 0.0
    %1051 = vmatprep.subr.mxu0 0.0
    %1052 = vmatpush1.msra.mxu0 0.0
    %1053 = vmatprep.subr.mxu0 0.0
    %1054 = vmatpush1.msra.mxu0 0.0
    %1055 = vmatprep.subr.mxu0 0.0
    %1056 = vmatpush1.msra.mxu0 0.0
    %1057 = vmatprep.subr.mxu0 0.0
    %1058 = vmatpush1.msra.mxu0 0.0
    %1059 = vmatprep.subr.mxu0 0.0
    %1060 = vmatpush1.msra.mxu0 0.0
    %1061 = vmatprep.subr.mxu0 0.0
    %1062 = vmatpush1.msra.mxu0 0.0
    %1063 = vmatprep.subr.mxu0 0.0
    %1064 = vmatpush1.msra.mxu0 0.0
    %1065 = vmatprep.mubr.f32.mxu0 0.0
    %1066 = vmatmul.mubr.f32.gmra.mrb[0].mxu0 %v999
    %v1067 = vpop.f32.mrb[0].mxu0
    %v1068 = vadd.f32 0.0, %v1067
    %v1069 = vpop.f32.mrb[0].mxu0
    %1070 = vdwg.mxu0
    %v1071 = vadd.f32 %v995, %v1068
    %s1072 = scalar_lea.vmem [#allocation3], 10
    %v1073 = vld [vmem:[%s1072] sm:$0x3]
    %1075 = vrot.lane.b32.xlu0 %v986, 96
    %v1076 = vpop.permute.xlu0 %1075
    %v1077 = vsel %vm495, %v1076, 0
    %1079 = vmatprep.subr.mxu0 0.0
    %1080 = vmatpush1.msra.mxu0 %v489
    %1081 = vmatprep.subr.mxu0 0.0
    %1082 = vmatpush1.msra.mxu0 %v490
    %1083 = vmatprep.subr.mxu0 0.0
    %1084 = vmatpush1.msra.mxu0 0.0
    %1085 = vmatprep.subr.mxu0 0.0
    %1086 = vmatpush1.msra.mxu0 0.0
    %1087 = vmatprep.subr.mxu0 0.0
    %1088 = vmatpush1.msra.mxu0 0.0
    %1089 = vmatprep.subr.mxu0 0.0
    %1090 = vmatpush1.msra.mxu0 0.0
    %1091 = vmatprep.subr.mxu0 0.0
    %1092 = vmatpush1.msra.mxu0 0.0
    %1093 = vmatprep.subr.mxu0 0.0
    %1094 = vmatpush1.msra.mxu0 0.0
    %1095 = vmatprep.subr.mxu0 0.0
    %1096 = vmatpush1.msra.mxu0 0.0
    %1097 = vmatprep.subr.mxu0 0.0
    %1098 = vmatpush1.msra.mxu0 0.0
    %1099 = vmatprep.subr.mxu0 0.0
    %1100 = vmatpush1.msra.mxu0 0.0
    %1101 = vmatprep.subr.mxu0 0.0
    %1102 = vmatpush1.msra.mxu0 0.0
    %1103 = vmatprep.subr.mxu0 0.0
    %1104 = vmatpush1.msra.mxu0 0.0
    %1105 = vmatprep.subr.mxu0 0.0
    %1106 = vmatpush1.msra.mxu0 0.0
    %1107 = vmatprep.subr.mxu0 0.0
    %1108 = vmatpush1.msra.mxu0 0.0
    %1109 = vmatprep.subr.mxu0 0.0
    %1110 = vmatpush1.msra.mxu0 0.0
    %1111 = vmatprep.subr.mxu0 0.0
    %1112 = vmatpush1.msra.mxu0 0.0
    %1113 = vmatprep.subr.mxu0 0.0
    %1114 = vmatpush1.msra.mxu0 0.0
    %1115 = vmatprep.subr.mxu0 0.0
    %1116 = vmatpush1.msra.mxu0 0.0
    %1117 = vmatprep.subr.mxu0 0.0
    %1118 = vmatpush1.msra.mxu0 0.0
    %1119 = vmatprep.subr.mxu0 0.0
    %1120 = vmatpush1.msra.mxu0 0.0
    %1121 = vmatprep.subr.mxu0 0.0
    %1122 = vmatpush1.msra.mxu0 0.0
    %1123 = vmatprep.subr.mxu0 0.0
    %1124 = vmatpush1.msra.mxu0 0.0
    %1125 = vmatprep.subr.mxu0 0.0
    %1126 = vmatpush1.msra.mxu0 0.0
    %1127 = vmatprep.subr.mxu0 0.0
    %1128 = vmatpush1.msra.mxu0 0.0
    %1129 = vmatprep.subr.mxu0 0.0
    %1130 = vmatpush1.msra.mxu0 0.0
    %1131 = vmatprep.subr.mxu0 0.0
    %1132 = vmatpush1.msra.mxu0 0.0
    %1133 = vmatprep.subr.mxu0 0.0
    %1134 = vmatpush1.msra.mxu0 0.0
    %1135 = vmatprep.subr.mxu0 0.0
    %1136 = vmatpush1.msra.mxu0 0.0
    %1137 = vmatprep.subr.mxu0 0.0
    %1138 = vmatpush1.msra.mxu0 0.0
    %1139 = vmatprep.subr.mxu0 0.0
    %1140 = vmatpush1.msra.mxu0 0.0
    %1141 = vmatprep.subr.mxu0 0.0
    %1142 = vmatpush1.msra.mxu0 0.0
    %1143 = vmatprep.mubr.f32.mxu0 0.0
    %1144 = vmatmul.mubr.f32.gmra.mrb[0].mxu0 %v1077
    %v1145 = vpop.f32.mrb[0].mxu0
    %v1146 = vadd.f32 0.0, %v1145
    %v1147 = vpop.f32.mrb[0].mxu0
    %1148 = vdwg.mxu0
    %v1149 = vadd.f32 %v1073, %v1146
    %v1150 = vxor.u32 %v1071, 2147483648
    %v1151 = vmul.f32 %v1150, 1.442695
    %v1152 = vpow.pop %v1151
    %v1153 = vadd.f32 %v1152, 1.0
    %v1154 = vrcp.pop %v1153
    %v1155 = vmul.f32 1.0, %v1154
    %v1156 = vtanh.pop %v1071
    %v1157 = vmul.f32 %v1155, %v978
    %1159 = vrot.lane.b32.xlu0 %v1156, 80
    %v1160 = vpop.permute.xlu0 %1159
    %v1162 = vmul.f32 %v1155, %v1160
    %1164 = vrot.lane.b32.xlu0 %v1162, 16
    %v1165 = vpop.permute.xlu0 %1164
    %v1167 = vadd.f32 %v1157, %v1165
    %v1168 = vtanh.pop %v1167
    %1170 = vrot.lane.b32.xlu0 %v1168, 16
    %v1171 = vpop.permute.xlu0 %1170
    %v1173 = vmul.f32 %v1155, %v1171
    %v1174 = vxor.u32 %v1149, 2147483648
    %v1175 = vmul.f32 %v1174, 1.442695
    %v1176 = vpow.pop %v1175
    %v1177 = vadd.f32 %v1176, 1.0
    %v1178 = vrcp.pop %v1177
    %v1179 = vmul.f32 1.0, %v1178
    %v1180 = vtanh.pop %v1149
    %v1181 = vmul.f32 %v1179, %v989
    %1183 = vrot.lane.b32.xlu0 %v1180, 80
    %v1184 = vpop.permute.xlu0 %1183
    %v1186 = vmul.f32 %v1179, %v1184
    %1188 = vrot.lane.b32.xlu0 %v1186, 16
    %v1189 = vpop.permute.xlu0 %1188
    %v1191 = vadd.f32 %v1181, %v1189
    %v1192 = vtanh.pop %v1191
    %1194 = vrot.lane.b32.xlu0 %v1192, 16
    %v1195 = vpop.permute.xlu0 %1194
    %v1197 = vmul.f32 %v1179, %v1195
    %1199 = vset.pattern.permute.xlu0 0
    %1200 = vperm.xlu0 %1199, %v991
    %v1201 = vpop.permute.xlu0 %1200
    %v1203 = vmul.f32 %v1201, %v1173
    %1205 = vrot.lane.b32.xlu0 %v1203, 96
    %v1206 = vpop.permute.xlu0 %1205
    %s1208 = scalar_lea.vmem [#allocation4], 4
    %1209 = vst.msk [vmem:[%s1208] sm:$0x3] %vm701, %v1206
    %1211 = vset.pattern.permute.xlu0 0
    %1212 = vperm.xlu0 %1211, %v993
    %v1213 = vpop.permute.xlu0 %1212
    %v1215 = vmul.f32 %v1213, %v1197
    %1217 = vrot.lane.b32.xlu0 %v1215, 112
    %v1218 = vpop.permute.xlu0 %1217
    %s1220 = scalar_lea.vmem [#allocation4], 10
    %1221 = vst.msk [vmem:[%s1220] sm:$0x3] %vm714, %v1218
    %v1222 = vsub.f32 1.0, %v991
    %1224 = vset.pattern.permute.xlu0 0
    %1225 = vperm.xlu0 %1224, %v1222
    %v1226 = vpop.permute.xlu0 %1225
    %v1228 = vmul.f32 %v1226, %v975
    %v1229 = vadd.f32 %v1203, %v1228
    %v1230 = vmul.f32 %v1201, %v1167
    %v1231 = vmul.f32 %v1226, %v978
    %v1232 = vadd.f32 %v1230, %v1231
    %v1233 = vsub.f32 1.0, %v993
    %1235 = vset.pattern.permute.xlu0 0
    %1236 = vperm.xlu0 %1235, %v1233
    %v1237 = vpop.permute.xlu0 %1236
    %v1239 = vmul.f32 %v1237, %v986
    %v1240 = vadd.f32 %v1215, %v1239
    %v1241 = vmul.f32 %v1213, %v1191
    %v1242 = vmul.f32 %v1237, %v989
    %v1243 = vadd.f32 %v1241, %v1242
    %s1244 = scalar_lea.vmem %s1, 6
    %v1245 = vld [vmem:[%s1244] sm:$0x3]
    %s1246 = scalar_lea.vmem %s1, 8
    %v1247 = vld [vmem:[%s1246] sm:$0x3]
    %s1248 = scalar_lea.vmem [#allocation2], 6
    %v1249 = vld [vmem:[%s1248] sm:$0x3]
    %1251 = vrot.lane.b32.xlu0 %v1229, 96
    %v1252 = vpop.permute.xlu0 %1251
    %v1253 = vsel %vm495, %v1252, 0
    %1255 = vmatprep.subr.mxu0 0.0
    %1256 = vmatpush1.msra.mxu0 %v487
    %1257 = vmatprep.subr.mxu0 0.0
    %1258 = vmatpush1.msra.mxu0 %v488
    %1259 = vmatprep.subr.mxu0 0.0
    %1260 = vmatpush1.msra.mxu0 0.0
    %1261 = vmatprep.subr.mxu0 0.0
    %1262 = vmatpush1.msra.mxu0 0.0
    %1263 = vmatprep.subr.mxu0 0.0
    %1264 = vmatpush1.msra.mxu0 0.0
    %1265 = vmatprep.subr.mxu0 0.0
    %1266 = vmatpush1.msra.mxu0 0.0
    %1267 = vmatprep.subr.mxu0 0.0
    %1268 = vmatpush1.msra.mxu0 0.0
    %1269 = vmatprep.subr.mxu0 0.0
    %1270 = vmatpush1.msra.mxu0 0.0
    %1271 = vmatprep.subr.mxu0 0.0
    %1272 = vmatpush1.msra.mxu0 0.0
    %1273 = vmatprep.subr.mxu0 0.0
    %1274 = vmatpush1.msra.mxu0 0.0
    %1275 = vmatprep.subr.mxu0 0.0
    %1276 = vmatpush1.msra.mxu0 0.0
    %1277 = vmatprep.subr.mxu0 0.0
    %1278 = vmatpush1.msra.mxu0 0.0
    %1279 = vmatprep.subr.mxu0 0.0
    %1280 = vmatpush1.msra.mxu0 0.0
    %1281 = vmatprep.subr.mxu0 0.0
    %1282 = vmatpush1.msra.mxu0 0.0
    %1283 = vmatprep.subr.mxu0 0.0
    %1284 = vmatpush1.msra.mxu0 0.0
    %1285 = vmatprep.subr.mxu0 0.0
    %1286 = vmatpush1.msra.mxu0 0.0
    %1287 = vmatprep.subr.mxu0 0.0
    %1288 = vmatpush1.msra.mxu0 0.0
    %1289 = vmatprep.subr.mxu0 0.0
    %1290 = vmatpush1.msra.mxu0 0.0
    %1291 = vmatprep.subr.mxu0 0.0
    %1292 = vmatpush1.msra.mxu0 0.0
    %1293 = vmatprep.subr.mxu0 0.0
    %1294 = vmatpush1.msra.mxu0 0.0
    %1295 = vmatprep.subr.mxu0 0.0
    %1296 = vmatpush1.msra.mxu0 0.0
    %1297 = vmatprep.subr.mxu0 0.0
    %1298 = vmatpush1.msra.mxu0 0.0
    %1299 = vmatprep.subr.mxu0 0.0
    %1300 = vmatpush1.msra.mxu0 0.0
    %1301 = vmatprep.subr.mxu0 0.0
    %1302 = vmatpush1.msra.mxu0 0.0
    %1303 = vmatprep.subr.mxu0 0.0
    %1304 = vmatpush1.msra.mxu0 0.0
    %1305 = vmatprep.subr.mxu0 0.0
    %1306 = vmatpush1.msra.mxu0 0.0
    %1307 = vmatprep.subr.mxu0 0.0
    %1308 = vmatpush1.msra.mxu0 0.0
    %1309 = vmatprep.subr.mxu0 0.0
    %1310 = vmatpush1.msra.mxu0 0.0
    %1311 = vmatprep.subr.mxu0 0.0
    %1312 = vmatpush1.msra.mxu0 0.0
    %1313 = vmatprep.subr.mxu0 0.0
    %1314 = vmatpush1.msra.mxu0 0.0
    %1315 = vmatprep.subr.mxu0 0.0
    %1316 = vmatpush1.msra.mxu0 0.0
    %1317 = vmatprep.subr.mxu0 0.0
    %1318 = vmatpush1.msra.mxu0 0.0
    %1319 = vmatprep.mubr.f32.mxu0 0.0
    %1320 = vmatmul.mubr.f32.gmra.mrb[0].mxu0 %v1253
    %v1321 = vpop.f32.mrb[0].mxu0
    %v1322 = vadd.f32 0.0, %v1321
    %v1323 = vpop.f32.mrb[0].mxu0
    %1324 = vdwg.mxu0
    %v1325 = vadd.f32 %v1249, %v1322
    %s1326 = scalar_lea.vmem [#allocation3], 8
    %v1327 = vld [vmem:[%s1326] sm:$0x3]
    %1329 = vrot.lane.b32.xlu0 %v1240, 96
    %v1330 = vpop.permute.xlu0 %1329
    %v1331 = vsel %vm495, %v1330, 0
    %1333 = vmatprep.subr.mxu0 0.0
    %1334 = vmatpush1.msra.mxu0 %v489
    %1335 = vmatprep.subr.mxu0 0.0
    %1336 = vmatpush1.msra.mxu0 %v490
    %1337 = vmatprep.subr.mxu0 0.0
    %1338 = vmatpush1.msra.mxu0 0.0
    %1339 = vmatprep.subr.mxu0 0.0
    %1340 = vmatpush1.msra.mxu0 0.0
    %1341 = vmatprep.subr.mxu0 0.0
    %1342 = vmatpush1.msra.mxu0 0.0
    %1343 = vmatprep.subr.mxu0 0.0
    %1344 = vmatpush1.msra.mxu0 0.0
    %1345 = vmatprep.subr.mxu0 0.0
    %1346 = vmatpush1.msra.mxu0 0.0
    %1347 = vmatprep.subr.mxu0 0.0
    %1348 = vmatpush1.msra.mxu0 0.0
    %1349 = vmatprep.subr.mxu0 0.0
    %1350 = vmatpush1.msra.mxu0 0.0
    %1351 = vmatprep.subr.mxu0 0.0
    %1352 = vmatpush1.msra.mxu0 0.0
    %1353 = vmatprep.subr.mxu0 0.0
    %1354 = vmatpush1.msra.mxu0 0.0
    %1355 = vmatprep.subr.mxu0 0.0
    %1356 = vmatpush1.msra.mxu0 0.0
    %1357 = vmatprep.subr.mxu0 0.0
    %1358 = vmatpush1.msra.mxu0 0.0
    %1359 = vmatprep.subr.mxu0 0.0
    %1360 = vmatpush1.msra.mxu0 0.0
    %1361 = vmatprep.subr.mxu0 0.0
    %1362 = vmatpush1.msra.mxu0 0.0
    %1363 = vmatprep.subr.mxu0 0.0
    %1364 = vmatpush1.msra.mxu0 0.0
    %1365 = vmatprep.subr.mxu0 0.0
    %1366 = vmatpush1.msra.mxu0 0.0
    %1367 = vmatprep.subr.mxu0 0.0
    %1368 = vmatpush1.msra.mxu0 0.0
    %1369 = vmatprep.subr.mxu0 0.0
    %1370 = vmatpush1.msra.mxu0 0.0
    %1371 = vmatprep.subr.mxu0 0.0
    %1372 = vmatpush1.msra.mxu0 0.0
    %1373 = vmatprep.subr.mxu0 0.0
    %1374 = vmatpush1.msra.mxu0 0.0
    %1375 = vmatprep.subr.mxu0 0.0
    %1376 = vmatpush1.msra.mxu0 0.0
    %1377 = vmatprep.subr.mxu0 0.0
    %1378 = vmatpush1.msra.mxu0 0.0
    %1379 = vmatprep.subr.mxu0 0.0
    %1380 = vmatpush1.msra.mxu0 0.0
    %1381 = vmatprep.subr.mxu0 0.0
    %1382 = vmatpush1.msra.mxu0 0.0
    %1383 = vmatprep.subr.mxu0 0.0
    %1384 = vmatpush1.msra.mxu0 0.0
    %1385 = vmatprep.subr.mxu0 0.0
    %1386 = vmatpush1.msra.mxu0 0.0
    %1387 = vmatprep.subr.mxu0 0.0
    %1388 = vmatpush1.msra.mxu0 0.0
    %1389 = vmatprep.subr.mxu0 0.0
    %1390 = vmatpush1.msra.mxu0 0.0
    %1391 = vmatprep.subr.mxu0 0.0
    %1392 = vmatpush1.msra.mxu0 0.0
    %1393 = vmatprep.subr.mxu0 0.0
    %1394 = vmatpush1.msra.mxu0 0.0
    %1395 = vmatprep.subr.mxu0 0.0
    %1396 = vmatpush1.msra.mxu0 0.0
    %1397 = vmatprep.mubr.f32.mxu0 0.0
    %1398 = vmatmul.mubr.f32.gmra.mrb[0].mxu0 %v1331
    %v1399 = vpop.f32.mrb[0].mxu0
    %v1400 = vadd.f32 0.0, %v1399
    %v1401 = vpop.f32.mrb[0].mxu0
    %1402 = vdwg.mxu0
    %v1403 = vadd.f32 %v1327, %v1400
    %v1404 = vxor.u32 %v1325, 2147483648
    %v1405 = vmul.f32 %v1404, 1.442695
    %v1406 = vpow.pop %v1405
    %v1407 = vadd.f32 %v1406, 1.0
    %v1408 = vrcp.pop %v1407
    %v1409 = vmul.f32 1.0, %v1408
    %v1410 = vtanh.pop %v1325
    %v1411 = vmul.f32 %v1409, %v1232
    %1413 = vrot.lane.b32.xlu0 %v1410, 80
    %v1414 = vpop.permute.xlu0 %1413
    %v1416 = vmul.f32 %v1409, %v1414
    %1418 = vrot.lane.b32.xlu0 %v1416, 16
    %v1419 = vpop.permute.xlu0 %1418
    %v1421 = vadd.f32 %v1411, %v1419
    %v1422 = vtanh.pop %v1421
    %1424 = vrot.lane.b32.xlu0 %v1422, 16
    %v1425 = vpop.permute.xlu0 %1424
    %v1427 = vmul.f32 %v1409, %v1425
    %v1428 = vxor.u32 %v1403, 2147483648
    %v1429 = vmul.f32 %v1428, 1.442695
    %v1430 = vpow.pop %v1429
    %v1431 = vadd.f32 %v1430, 1.0
    %v1432 = vrcp.pop %v1431
    %v1433 = vmul.f32 1.0, %v1432
    %v1434 = vtanh.pop %v1403
    %v1435 = vmul.f32 %v1433, %v1243
    %1437 = vrot.lane.b32.xlu0 %v1434, 80
    %v1438 = vpop.permute.xlu0 %1437
    %v1440 = vmul.f32 %v1433, %v1438
    %1442 = vrot.lane.b32.xlu0 %v1440, 16
    %v1443 = vpop.permute.xlu0 %1442
    %v1445 = vadd.f32 %v1435, %v1443
    %v1446 = vtanh.pop %v1445
    %1448 = vrot.lane.b32.xlu0 %v1446, 16
    %v1449 = vpop.permute.xlu0 %1448
    %v1451 = vmul.f32 %v1433, %v1449
    %1453 = vset.pattern.permute.xlu0 0
    %1454 = vperm.xlu0 %1453, %v1245
    %v1455 = vpop.permute.xlu0 %1454
    %v1457 = vmul.f32 %v1455, %v1427
    %1459 = vrot.lane.b32.xlu0 %v1457, 96
    %v1460 = vpop.permute.xlu0 %1459
    %s1462 = scalar_lea.vmem [#allocation4], 6
    %1463 = vst.msk [vmem:[%s1462] sm:$0x3] %vm701, %v1460
    %1465 = vset.pattern.permute.xlu0 0
    %1466 = vperm.xlu0 %1465, %v1247
    %v1467 = vpop.permute.xlu0 %1466
    %v1469 = vmul.f32 %v1467, %v1451
    %1471 = vrot.lane.b32.xlu0 %v1469, 112
    %v1472 = vpop.permute.xlu0 %1471
    %s1474 = scalar_lea.vmem [#allocation4], 8
    %1475 = vst.msk [vmem:[%s1474] sm:$0x3] %vm714, %v1472
    %v1476 = vsub.f32 1.0, %v1245
    %1478 = vset.pattern.permute.xlu0 0
    %1479 = vperm.xlu0 %1478, %v1476
    %v1480 = vpop.permute.xlu0 %1479
    %v1482 = vmul.f32 %v1480, %v1229
    %v1483 = vadd.f32 %v1457, %v1482
    %v1484 = vmul.f32 %v1455, %v1421
    %v1485 = vmul.f32 %v1480, %v1232
    %v1486 = vadd.f32 %v1484, %v1485
    %v1487 = vsub.f32 1.0, %v1247
    %1489 = vset.pattern.permute.xlu0 0
    %1490 = vperm.xlu0 %1489, %v1487
    %v1491 = vpop.permute.xlu0 %1490
    %v1493 = vmul.f32 %v1491, %v1240
    %v1494 = vadd.f32 %v1469, %v1493
    %v1495 = vmul.f32 %v1467, %v1445
    %v1496 = vmul.f32 %v1491, %v1243
    %v1497 = vadd.f32 %v1495, %v1496
    %v1498 = vld [vmem:[%s1246] sm:$0x3]
    %v1499 = vld [vmem:[%s1244] sm:$0x3]
    %s1500 = scalar_lea.vmem [#allocation2], 8
    %v1501 = vld [vmem:[%s1500] sm:$0x3]
    %1503 = vrot.lane.b32.xlu0 %v1483, 96
    %v1504 = vpop.permute.xlu0 %1503
    %v1505 = vsel %vm495, %v1504, 0
    %1507 = vmatprep.subr.mxu0 0.0
    %1508 = vmatpush1.msra.mxu0 %v487
    %1509 = vmatprep.subr.mxu0 0.0
    %1510 = vmatpush1.msra.mxu0 %v488
    %1511 = vmatprep.subr.mxu0 0.0
    %1512 = vmatpush1.msra.mxu0 0.0
    %1513 = vmatprep.subr.mxu0 0.0
    %1514 = vmatpush1.msra.mxu0 0.0
    %1515 = vmatprep.subr.mxu0 0.0
    %1516 = vmatpush1.msra.mxu0 0.0
    %1517 = vmatprep.subr.mxu0 0.0
    %1518 = vmatpush1.msra.mxu0 0.0
    %1519 = vmatprep.subr.mxu0 0.0
    %1520 = vmatpush1.msra.mxu0 0.0
    %1521 = vmatprep.subr.mxu0 0.0
    %1522 = vmatpush1.msra.mxu0 0.0
    %1523 = vmatprep.subr.mxu0 0.0
    %1524 = vmatpush1.msra.mxu0 0.0
    %1525 = vmatprep.subr.mxu0 0.0
    %1526 = vmatpush1.msra.mxu0 0.0
    %1527 = vmatprep.subr.mxu0 0.0
    %1528 = vmatpush1.msra.mxu0 0.0
    %1529 = vmatprep.subr.mxu0 0.0
    %1530 = vmatpush1.msra.mxu0 0.0
    %1531 = vmatprep.subr.mxu0 0.0
    %1532 = vmatpush1.msra.mxu0 0.0
    %1533 = vmatprep.subr.mxu0 0.0
    %1534 = vmatpush1.msra.mxu0 0.0
    %1535 = vmatprep.subr.mxu0 0.0
    %1536 = vmatpush1.msra.mxu0 0.0
    %1537 = vmatprep.subr.mxu0 0.0
    %1538 = vmatpush1.msra.mxu0 0.0
    %1539 = vmatprep.subr.mxu0 0.0
    %1540 = vmatpush1.msra.mxu0 0.0
    %1541 = vmatprep.subr.mxu0 0.0
    %1542 = vmatpush1.msra.mxu0 0.0
    %1543 = vmatprep.subr.mxu0 0.0
    %1544 = vmatpush1.msra.mxu0 0.0
    %1545 = vmatprep.subr.mxu0 0.0
    %1546 = vmatpush1.msra.mxu0 0.0
    %1547 = vmatprep.subr.mxu0 0.0
    %1548 = vmatpush1.msra.mxu0 0.0
    %1549 = vmatprep.subr.mxu0 0.0
    %1550 = vmatpush1.msra.mxu0 0.0
    %1551 = vmatprep.subr.mxu0 0.0
    %1552 = vmatpush1.msra.mxu0 0.0
    %1553 = vmatprep.subr.mxu0 0.0
    %1554 = vmatpush1.msra.mxu0 0.0
    %1555 = vmatprep.subr.mxu0 0.0
    %1556 = vmatpush1.msra.mxu0 0.0
    %1557 = vmatprep.subr.mxu0 0.0
    %1558 = vmatpush1.msra.mxu0 0.0
    %1559 = vmatprep.subr.mxu0 0.0
    %1560 = vmatpush1.msra.mxu0 0.0
    %1561 = vmatprep.subr.mxu0 0.0
    %1562 = vmatpush1.msra.mxu0 0.0
    %1563 = vmatprep.subr.mxu0 0.0
    %1564 = vmatpush1.msra.mxu0 0.0
    %1565 = vmatprep.subr.mxu0 0.0
    %1566 = vmatpush1.msra.mxu0 0.0
    %1567 = vmatprep.subr.mxu0 0.0
    %1568 = vmatpush1.msra.mxu0 0.0
    %1569 = vmatprep.subr.mxu0 0.0
    %1570 = vmatpush1.msra.mxu0 0.0
    %1571 = vmatprep.mubr.f32.mxu0 0.0
    %1572 = vmatmul.mubr.f32.gmra.mrb[0].mxu0 %v1505
    %v1573 = vpop.f32.mrb[0].mxu0
    %v1574 = vadd.f32 0.0, %v1573
    %v1575 = vpop.f32.mrb[0].mxu0
    %1576 = vdwg.mxu0
    %v1577 = vadd.f32 %v1501, %v1574
    %s1578 = scalar_lea.vmem [#allocation3], 6
    %v1579 = vld [vmem:[%s1578] sm:$0x3]
    %1581 = vrot.lane.b32.xlu0 %v1494, 96
    %v1582 = vpop.permute.xlu0 %1581
    %v1583 = vsel %vm495, %v1582, 0
    %1585 = vmatprep.subr.mxu0 0.0
    %1586 = vmatpush1.msra.mxu0 %v489
    %1587 = vmatprep.subr.mxu0 0.0
    %1588 = vmatpush1.msra.mxu0 %v490
    %1589 = vmatprep.subr.mxu0 0.0
    %1590 = vmatpush1.msra.mxu0 0.0
    %1591 = vmatprep.subr.mxu0 0.0
    %1592 = vmatpush1.msra.mxu0 0.0
    %1593 = vmatprep.subr.mxu0 0.0
    %1594 = vmatpush1.msra.mxu0 0.0
    %1595 = vmatprep.subr.mxu0 0.0
    %1596 = vmatpush1.msra.mxu0 0.0
    %1597 = vmatprep.subr.mxu0 0.0
    %1598 = vmatpush1.msra.mxu0 0.0
    %1599 = vmatprep.subr.mxu0 0.0
    %1600 = vmatpush1.msra.mxu0 0.0
    %1601 = vmatprep.subr.mxu0 0.0
    %1602 = vmatpush1.msra.mxu0 0.0
    %1603 = vmatprep.subr.mxu0 0.0
    %1604 = vmatpush1.msra.mxu0 0.0
    %1605 = vmatprep.subr.mxu0 0.0
    %1606 = vmatpush1.msra.mxu0 0.0
    %1607 = vmatprep.subr.mxu0 0.0
    %1608 = vmatpush1.msra.mxu0 0.0
    %1609 = vmatprep.subr.mxu0 0.0
    %1610 = vmatpush1.msra.mxu0 0.0
    %1611 = vmatprep.subr.mxu0 0.0
    %1612 = vmatpush1.msra.mxu0 0.0
    %1613 = vmatprep.subr.mxu0 0.0
    %1614 = vmatpush1.msra.mxu0 0.0
    %1615 = vmatprep.subr.mxu0 0.0
    %1616 = vmatpush1.msra.mxu0 0.0
    %1617 = vmatprep.subr.mxu0 0.0
    %1618 = vmatpush1.msra.mxu0 0.0
    %1619 = vmatprep.subr.mxu0 0.0
    %1620 = vmatpush1.msra.mxu0 0.0
    %1621 = vmatprep.subr.mxu0 0.0
    %1622 = vmatpush1.msra.mxu0 0.0
    %1623 = vmatprep.subr.mxu0 0.0
    %1624 = vmatpush1.msra.mxu0 0.0
    %1625 = vmatprep.subr.mxu0 0.0
    %1626 = vmatpush1.msra.mxu0 0.0
    %1627 = vmatprep.subr.mxu0 0.0
    %1628 = vmatpush1.msra.mxu0 0.0
    %1629 = vmatprep.subr.mxu0 0.0
    %1630 = vmatpush1.msra.mxu0 0.0
    %1631 = vmatprep.subr.mxu0 0.0
    %1632 = vmatpush1.msra.mxu0 0.0
    %1633 = vmatprep.subr.mxu0 0.0
    %1634 = vmatpush1.msra.mxu0 0.0
    %1635 = vmatprep.subr.mxu0 0.0
    %1636 = vmatpush1.msra.mxu0 0.0
    %1637 = vmatprep.subr.mxu0 0.0
    %1638 = vmatpush1.msra.mxu0 0.0
    %1639 = vmatprep.subr.mxu0 0.0
    %1640 = vmatpush1.msra.mxu0 0.0
    %1641 = vmatprep.subr.mxu0 0.0
    %1642 = vmatpush1.msra.mxu0 0.0
    %1643 = vmatprep.subr.mxu0 0.0
    %1644 = vmatpush1.msra.mxu0 0.0
    %1645 = vmatprep.subr.mxu0 0.0
    %1646 = vmatpush1.msra.mxu0 0.0
    %1647 = vmatprep.subr.mxu0 0.0
    %1648 = vmatpush1.msra.mxu0 0.0
    %1649 = vmatprep.mubr.f32.mxu0 0.0
    %1650 = vmatmul.mubr.f32.gmra.mrb[0].mxu0 %v1583
    %v1651 = vpop.f32.mrb[0].mxu0
    %v1652 = vadd.f32 0.0, %v1651
    %v1653 = vpop.f32.mrb[0].mxu0
    %1654 = vdwg.mxu0
    %v1655 = vadd.f32 %v1579, %v1652
    %v1656 = vxor.u32 %v1577, 2147483648
    %v1657 = vmul.f32 %v1656, 1.442695
    %v1658 = vpow.pop %v1657
    %v1659 = vadd.f32 %v1658, 1.0
    %v1660 = vrcp.pop %v1659
    %v1661 = vmul.f32 1.0, %v1660
    %v1662 = vtanh.pop %v1577
    %v1663 = vmul.f32 %v1661, %v1486
    %1665 = vrot.lane.b32.xlu0 %v1662, 80
    %v1666 = vpop.permute.xlu0 %1665
    %v1668 = vmul.f32 %v1661, %v1666
    %1670 = vrot.lane.b32.xlu0 %v1668, 16
    %v1671 = vpop.permute.xlu0 %1670
    %v1673 = vadd.f32 %v1663, %v1671
    %v1674 = vtanh.pop %v1673
    %1676 = vrot.lane.b32.xlu0 %v1674, 16
    %v1677 = vpop.permute.xlu0 %1676
    %v1679 = vmul.f32 %v1661, %v1677
    %v1680 = vxor.u32 %v1655, 2147483648
    %v1681 = vmul.f32 %v1680, 1.442695
    %v1682 = vpow.pop %v1681
    %v1683 = vadd.f32 %v1682, 1.0
    %v1684 = vrcp.pop %v1683
    %v1685 = vmul.f32 1.0, %v1684
    %v1686 = vtanh.pop %v1655
    %v1687 = vmul.f32 %v1685, %v1497
    %1689 = vrot.lane.b32.xlu0 %v1686, 80
    %v1690 = vpop.permute.xlu0 %1689
    %v1692 = vmul.f32 %v1685, %v1690
    %1694 = vrot.lane.b32.xlu0 %v1692, 16
    %v1695 = vpop.permute.xlu0 %1694
    %v1697 = vadd.f32 %v1687, %v1695
    %v1698 = vtanh.pop %v1697
    %1700 = vrot.lane.b32.xlu0 %v1698, 16
    %v1701 = vpop.permute.xlu0 %1700
    %v1703 = vmul.f32 %v1685, %v1701
    %1705 = vset.pattern.permute.xlu0 0
    %1706 = vperm.xlu0 %1705, %v1498
    %v1707 = vpop.permute.xlu0 %1706
    %v1709 = vmul.f32 %v1707, %v1679
    %1711 = vrot.lane.b32.xlu0 %v1709, 96
    %v1712 = vpop.permute.xlu0 %1711
    %1714 = vst.msk [vmem:[%s1474] sm:$0x3] %vm701, %v1712
    %1716 = vset.pattern.permute.xlu0 0
    %1717 = vperm.xlu0 %1716, %v1499
    %v1718 = vpop.permute.xlu0 %1717
    %v1720 = vmul.f32 %v1718, %v1703
    %1722 = vrot.lane.b32.xlu0 %v1720, 112
    %v1723 = vpop.permute.xlu0 %1722
    %1725 = vst.msk [vmem:[%s1462] sm:$0x3] %vm714, %v1723
    %v1726 = vsub.f32 1.0, %v1498
    %1728 = vset.pattern.permute.xlu0 0
    %1729 = vperm.xlu0 %1728, %v1726
    %v1730 = vpop.permute.xlu0 %1729
    %v1732 = vmul.f32 %v1730, %v1483
    %v1733 = vadd.f32 %v1709, %v1732
    %v1734 = vmul.f32 %v1707, %v1673
    %v1735 = vmul.f32 %v1730, %v1486
    %v1736 = vadd.f32 %v1734, %v1735
    %v1737 = vsub.f32 1.0, %v1499
    %1739 = vset.pattern.permute.xlu0 0
    %1740 = vperm.xlu0 %1739, %v1737
    %v1741 = vpop.permute.xlu0 %1740
    %v1743 = vmul.f32 %v1741, %v1494
    %v1744 = vadd.f32 %v1720, %v1743
    %v1745 = vmul.f32 %v1718, %v1697
    %v1746 = vmul.f32 %v1741, %v1497
    %v1747 = vadd.f32 %v1745, %v1746
    %v1748 = vld [vmem:[%s992] sm:$0x3]
    %v1749 = vld [vmem:[%s990] sm:$0x3]
    %s1750 = scalar_lea.vmem [#allocation2], 10
    %v1751 = vld [vmem:[%s1750] sm:$0x3]
    %1753 = vrot.lane.b32.xlu0 %v1733, 96
    %v1754 = vpop.permute.xlu0 %1753
    %v1755 = vsel %vm495, %v1754, 0
    %1757 = vmatprep.subr.mxu0 0.0
    %1758 = vmatpush1.msra.mxu0 %v487
    %1759 = vmatprep.subr.mxu0 0.0
    %1760 = vmatpush1.msra.mxu0 %v488
    %1761 = vmatprep.subr.mxu0 0.0
    %1762 = vmatpush1.msra.mxu0 0.0
    %1763 = vmatprep.subr.mxu0 0.0
    %1764 = vmatpush1.msra.mxu0 0.0
    %1765 = vmatprep.subr.mxu0 0.0
    %1766 = vmatpush1.msra.mxu0 0.0
    %1767 = vmatprep.subr.mxu0 0.0
    %1768 = vmatpush1.msra.mxu0 0.0
    %1769 = vmatprep.subr.mxu0 0.0
    %1770 = vmatpush1.msra.mxu0 0.0
    %1771 = vmatprep.subr.mxu0 0.0
    %1772 = vmatpush1.msra.mxu0 0.0
    %1773 = vmatprep.subr.mxu0 0.0
    %1774 = vmatpush1.msra.mxu0 0.0
    %1775 = vmatprep.subr.mxu0 0.0
    %1776 = vmatpush1.msra.mxu0 0.0
    %1777 = vmatprep.subr.mxu0 0.0
    %1778 = vmatpush1.msra.mxu0 0.0
    %1779 = vmatprep.subr.mxu0 0.0
    %1780 = vmatpush1.msra.mxu0 0.0
    %1781 = vmatprep.subr.mxu0 0.0
    %1782 = vmatpush1.msra.mxu0 0.0
    %1783 = vmatprep.subr.mxu0 0.0
    %1784 = vmatpush1.msra.mxu0 0.0
    %1785 = vmatprep.subr.mxu0 0.0
    %1786 = vmatpush1.msra.mxu0 0.0
    %1787 = vmatprep.subr.mxu0 0.0
    %1788 = vmatpush1.msra.mxu0 0.0
    %1789 = vmatprep.subr.mxu0 0.0
    %1790 = vmatpush1.msra.mxu0 0.0
    %1791 = vmatprep.subr.mxu0 0.0
    %1792 = vmatpush1.msra.mxu0 0.0
    %1793 = vmatprep.subr.mxu0 0.0
    %1794 = vmatpush1.msra.mxu0 0.0
    %1795 = vmatprep.subr.mxu0 0.0
    %1796 = vmatpush1.msra.mxu0 0.0
    %1797 = vmatprep.subr.mxu0 0.0
    %1798 = vmatpush1.msra.mxu0 0.0
    %1799 = vmatprep.subr.mxu0 0.0
    %1800 = vmatpush1.msra.mxu0 0.0
    %1801 = vmatprep.subr.mxu0 0.0
    %1802 = vmatpush1.msra.mxu0 0.0
    %1803 = vmatprep.subr.mxu0 0.0
    %1804 = vmatpush1.msra.mxu0 0.0
    %1805 = vmatprep.subr.mxu0 0.0
    %1806 = vmatpush1.msra.mxu0 0.0
    %1807 = vmatprep.subr.mxu0 0.0
    %1808 = vmatpush1.msra.mxu0 0.0
    %1809 = vmatprep.subr.mxu0 0.0
    %1810 = vmatpush1.msra.mxu0 0.0
    %1811 = vmatprep.subr.mxu0 0.0
    %1812 = vmatpush1.msra.mxu0 0.0
    %1813 = vmatprep.subr.mxu0 0.0
    %1814 = vmatpush1.msra.mxu0 0.0
    %1815 = vmatprep.subr.mxu0 0.0
    %1816 = vmatpush1.msra.mxu0 0.0
    %1817 = vmatprep.subr.mxu0 0.0
    %1818 = vmatpush1.msra.mxu0 0.0
    %1819 = vmatprep.subr.mxu0 0.0
    %1820 = vmatpush1.msra.mxu0 0.0
    %1821 = vmatprep.mubr.f32.mxu0 0.0
    %1822 = vmatmul.mubr.f32.gmra.mrb[0].mxu0 %v1755
    %v1823 = vpop.f32.mrb[0].mxu0
    %v1824 = vadd.f32 0.0, %v1823
    %v1825 = vpop.f32.mrb[0].mxu0
    %1826 = vdwg.mxu0
    %v1827 = vadd.f32 %v1751, %v1824
    %s1828 = scalar_lea.vmem [#allocation3], 4
    %v1829 = vld [vmem:[%s1828] sm:$0x3]
    %1831 = vrot.lane.b32.xlu0 %v1744, 96
    %v1832 = vpop.permute.xlu0 %1831
    %v1833 = vsel %vm495, %v1832, 0
    %1835 = vmatprep.subr.mxu0 0.0
    %1836 = vmatpush1.msra.mxu0 %v489
    %1837 = vmatprep.subr.mxu0 0.0
    %1838 = vmatpush1.msra.mxu0 %v490
    %1839 = vmatprep.subr.mxu0 0.0
    %1840 = vmatpush1.msra.mxu0 0.0
    %1841 = vmatprep.subr.mxu0 0.0
    %1842 = vmatpush1.msra.mxu0 0.0
    %1843 = vmatprep.subr.mxu0 0.0
    %1844 = vmatpush1.msra.mxu0 0.0
    %1845 = vmatprep.subr.mxu0 0.0
    %1846 = vmatpush1.msra.mxu0 0.0
    %1847 = vmatprep.subr.mxu0 0.0
    %1848 = vmatpush1.msra.mxu0 0.0
    %1849 = vmatprep.subr.mxu0 0.0
    %1850 = vmatpush1.msra.mxu0 0.0
    %1851 = vmatprep.subr.mxu0 0.0
    %1852 = vmatpush1.msra.mxu0 0.0
    %1853 = vmatprep.subr.mxu0 0.0
    %1854 = vmatpush1.msra.mxu0 0.0
    %1855 = vmatprep.subr.mxu0 0.0
    %1856 = vmatpush1.msra.mxu0 0.0
    %1857 = vmatprep.subr.mxu0 0.0
    %1858 = vmatpush1.msra.mxu0 0.0
    %1859 = vmatprep.subr.mxu0 0.0
    %1860 = vmatpush1.msra.mxu0 0.0
    %1861 = vmatprep.subr.mxu0 0.0
    %1862 = vmatpush1.msra.mxu0 0.0
    %1863 = vmatprep.subr.mxu0 0.0
    %1864 = vmatpush1.msra.mxu0 0.0
    %1865 = vmatprep.subr.mxu0 0.0
    %1866 = vmatpush1.msra.mxu0 0.0
    %1867 = vmatprep.subr.mxu0 0.0
    %1868 = vmatpush1.msra.mxu0 0.0
    %1869 = vmatprep.subr.mxu0 0.0
    %1870 = vmatpush1.msra.mxu0 0.0
    %1871 = vmatprep.subr.mxu0 0.0
    %1872 = vmatpush1.msra.mxu0 0.0
    %1873 = vmatprep.subr.mxu0 0.0
    %1874 = vmatpush1.msra.mxu0 0.0
    %1875 = vmatprep.subr.mxu0 0.0
    %1876 = vmatpush1.msra.mxu0 0.0
    %1877 = vmatprep.subr.mxu0 0.0
    %1878 = vmatpush1.msra.mxu0 0.0
    %1879 = vmatprep.subr.mxu0 0.0
    %1880 = vmatpush1.msra.mxu0 0.0
    %1881 = vmatprep.subr.mxu0 0.0
    %1882 = vmatpush1.msra.mxu0 0.0
    %1883 = vmatprep.subr.mxu0 0.0
    %1884 = vmatpush1.msra.mxu0 0.0
    %1885 = vmatprep.subr.mxu0 0.0
    %1886 = vmatpush1.msra.mxu0 0.0
    %1887 = vmatprep.subr.mxu0 0.0
    %1888 = vmatpush1.msra.mxu0 0.0
    %1889 = vmatprep.subr.mxu0 0.0
    %1890 = vmatpush1.msra.mxu0 0.0
    %1891 = vmatprep.subr.mxu0 0.0
    %1892 = vmatpush1.msra.mxu0 0.0
    %1893 = vmatprep.subr.mxu0 0.0
    %1894 = vmatpush1.msra.mxu0 0.0
    %1895 = vmatprep.subr.mxu0 0.0
    %1896 = vmatpush1.msra.mxu0 0.0
    %1897 = vmatprep.subr.mxu0 0.0
    %1898 = vmatpush1.msra.mxu0 0.0
    %1899 = vmatprep.mubr.f32.mxu0 0.0
    %1900 = vmatmul.mubr.f32.gmra.mrb[0].mxu0 %v1833
    %v1901 = vpop.f32.mrb[0].mxu0
    %v1902 = vadd.f32 0.0, %v1901
    %v1903 = vpop.f32.mrb[0].mxu0
    %1904 = vdwg.mxu0
    %v1905 = vadd.f32 %v1829, %v1902
    %v1906 = vxor.u32 %v1827, 2147483648
    %v1907 = vmul.f32 %v1906, 1.442695
    %v1908 = vpow.pop %v1907
    %v1909 = vadd.f32 %v1908, 1.0
    %v1910 = vrcp.pop %v1909
    %v1911 = vmul.f32 1.0, %v1910
    %v1912 = vtanh.pop %v1827
    %v1913 = vmul.f32 %v1911, %v1736
    %1915 = vrot.lane.b32.xlu0 %v1912, 80
    %v1916 = vpop.permute.xlu0 %1915
    %v1918 = vmul.f32 %v1911, %v1916
    %1920 = vrot.lane.b32.xlu0 %v1918, 16
    %v1921 = vpop.permute.xlu0 %1920
    %v1923 = vadd.f32 %v1913, %v1921
    %v1924 = vtanh.pop %v1923
    %1926 = vrot.lane.b32.xlu0 %v1924, 16
    %v1927 = vpop.permute.xlu0 %1926
    %v1929 = vmul.f32 %v1911, %v1927
    %v1930 = vxor.u32 %v1905, 2147483648
    %v1931 = vmul.f32 %v1930, 1.442695
    %v1932 = vpow.pop %v1931
    %v1933 = vadd.f32 %v1932, 1.0
    %v1934 = vrcp.pop %v1933
    %v1935 = vmul.f32 1.0, %v1934
    %v1936 = vtanh.pop %v1905
    %v1937 = vmul.f32 %v1935, %v1747
    %1939 = vrot.lane.b32.xlu0 %v1936, 80
    %v1940 = vpop.permute.xlu0 %1939
    %v1942 = vmul.f32 %v1935, %v1940
    %1944 = vrot.lane.b32.xlu0 %v1942, 16
    %v1945 = vpop.permute.xlu0 %1944
    %v1947 = vadd.f32 %v1937, %v1945
    %v1948 = vtanh.pop %v1947
    %1950 = vrot.lane.b32.xlu0 %v1948, 16
    %v1951 = vpop.permute.xlu0 %1950
    %v1953 = vmul.f32 %v1935, %v1951
    %1955 = vset.pattern.permute.xlu0 0
    %1956 = vperm.xlu0 %1955, %v1748
    %v1957 = vpop.permute.xlu0 %1956
    %v1959 = vmul.f32 %v1957, %v1929
    %1961 = vrot.lane.b32.xlu0 %v1959, 96
    %v1962 = vpop.permute.xlu0 %1961
    %1964 = vst.msk [vmem:[%s1220] sm:$0x3] %vm701, %v1962
    %1966 = vset.pattern.permute.xlu0 0
    %1967 = vperm.xlu0 %1966, %v1749
    %v1968 = vpop.permute.xlu0 %1967
    %v1970 = vmul.f32 %v1968, %v1953
    %1972 = vrot.lane.b32.xlu0 %v1970, 112
    %v1973 = vpop.permute.xlu0 %1972
    %1975 = vst.msk [vmem:[%s1208] sm:$0x3] %vm714, %v1973
    %v1976 = vsub.f32 1.0, %v1748
    %1978 = vset.pattern.permute.xlu0 0
    %1979 = vperm.xlu0 %1978, %v1976
    %v1980 = vpop.permute.xlu0 %1979
    %v1982 = vmul.f32 %v1980, %v1733
    %v1983 = vadd.f32 %v1959, %v1982
    %v1984 = vmul.f32 %v1957, %v1923
    %v1985 = vmul.f32 %v1980, %v1736
    %v1986 = vadd.f32 %v1984, %v1985
    %v1987 = vsub.f32 1.0, %v1749
    %1989 = vset.pattern.permute.xlu0 0
    %1990 = vperm.xlu0 %1989, %v1987
    %v1991 = vpop.permute.xlu0 %1990
    %v1993 = vmul.f32 %v1991, %v1744
    %v1994 = vadd.f32 %v1970, %v1993
    %v1995 = vmul.f32 %v1968, %v1947
    %v1996 = vmul.f32 %v1991, %v1747
    %v1997 = vadd.f32 %v1995, %v1996
    %v1998 = vld [vmem:[%s738] sm:$0x3]
    %v1999 = vld [vmem:[%s736] sm:$0x3]
    %s2000 = scalar_lea.vmem [#allocation2], 12
    %v2001 = vld [vmem:[%s2000] sm:$0x3]
    %2003 = vrot.lane.b32.xlu0 %v1983, 96
    %v2004 = vpop.permute.xlu0 %2003
    %v2005 = vsel %vm495, %v2004, 0
    %2007 = vmatprep.subr.mxu0 0.0
    %2008 = vmatpush1.msra.mxu0 %v487
    %2009 = vmatprep.subr.mxu0 0.0
    %2010 = vmatpush1.msra.mxu0 %v488
    %2011 = vmatprep.subr.mxu0 0.0
    %2012 = vmatpush1.msra.mxu0 0.0
    %2013 = vmatprep.subr.mxu0 0.0
    %2014 = vmatpush1.msra.mxu0 0.0
    %2015 = vmatprep.subr.mxu0 0.0
    %2016 = vmatpush1.msra.mxu0 0.0
    %2017 = vmatprep.subr.mxu0 0.0
    %2018 = vmatpush1.msra.mxu0 0.0
    %2019 = vmatprep.subr.mxu0 0.0
    %2020 = vmatpush1.msra.mxu0 0.0
    %2021 = vmatprep.subr.mxu0 0.0
    %2022 = vmatpush1.msra.mxu0 0.0
    %2023 = vmatprep.subr.mxu0 0.0
    %2024 = vmatpush1.msra.mxu0 0.0
    %2025 = vmatprep.subr.mxu0 0.0
    %2026 = vmatpush1.msra.mxu0 0.0
    %2027 = vmatprep.subr.mxu0 0.0
    %2028 = vmatpush1.msra.mxu0 0.0
    %2029 = vmatprep.subr.mxu0 0.0
    %2030 = vmatpush1.msra.mxu0 0.0
    %2031 = vmatprep.subr.mxu0 0.0
    %2032 = vmatpush1.msra.mxu0 0.0
    %2033 = vmatprep.subr.mxu0 0.0
    %2034 = vmatpush1.msra.mxu0 0.0
    %2035 = vmatprep.subr.mxu0 0.0
    %2036 = vmatpush1.msra.mxu0 0.0
    %2037 = vmatprep.subr.mxu0 0.0
    %2038 = vmatpush1.msra.mxu0 0.0
    %2039 = vmatprep.subr.mxu0 0.0
    %2040 = vmatpush1.msra.mxu0 0.0
    %2041 = vmatprep.subr.mxu0 0.0
    %2042 = vmatpush1.msra.mxu0 0.0
    %2043 = vmatprep.subr.mxu0 0.0
    %2044 = vmatpush1.msra.mxu0 0.0
    %2045 = vmatprep.subr.mxu0 0.0
    %2046 = vmatpush1.msra.mxu0 0.0
    %2047 = vmatprep.subr.mxu0 0.0
    %2048 = vmatpush1.msra.mxu0 0.0
    %2049 = vmatprep.subr.mxu0 0.0
    %2050 = vmatpush1.msra.mxu0 0.0
    %2051 = vmatprep.subr.mxu0 0.0
    %2052 = vmatpush1.msra.mxu0 0.0
    %2053 = vmatprep.subr.mxu0 0.0
    %2054 = vmatpush1.msra.mxu0 0.0
    %2055 = vmatprep.subr.mxu0 0.0
    %2056 = vmatpush1.msra.mxu0 0.0
    %2057 = vmatprep.subr.mxu0 0.0
    %2058 = vmatpush1.msra.mxu0 0.0
    %2059 = vmatprep.subr.mxu0 0.0
    %2060 = vmatpush1.msra.mxu0 0.0
    %2061 = vmatprep.subr.mxu0 0.0
    %2062 = vmatpush1.msra.mxu0 0.0
    %2063 = vmatprep.subr.mxu0 0.0
    %2064 = vmatpush1.msra.mxu0 0.0
    %2065 = vmatprep.subr.mxu0 0.0
    %2066 = vmatpush1.msra.mxu0 0.0
    %2067 = vmatprep.subr.mxu0 0.0
    %2068 = vmatpush1.msra.mxu0 0.0
    %2069 = vmatprep.subr.mxu0 0.0
    %2070 = vmatpush1.msra.mxu0 0.0
    %2071 = vmatprep.mubr.f32.mxu0 0.0
    %2072 = vmatmul.mubr.f32.gmra.mrb[0].mxu0 %v2005
    %v2073 = vpop.f32.mrb[0].mxu0
    %v2074 = vadd.f32 0.0, %v2073
    %v2075 = vpop.f32.mrb[0].mxu0
    %2076 = vdwg.mxu0
    %v2077 = vadd.f32 %v2001, %v2074
    %s2078 = scalar_lea.vmem [#allocation3], 2
    %v2079 = vld [vmem:[%s2078] sm:$0x3]
    %2081 = vrot.lane.b32.xlu0 %v1994, 96
    %v2082 = vpop.permute.xlu0 %2081
    %v2083 = vsel %vm495, %v2082, 0
    %2085 = vmatprep.subr.mxu0 0.0
    %2086 = vmatpush1.msra.mxu0 %v489
    %2087 = vmatprep.subr.mxu0 0.0
    %2088 = vmatpush1.msra.mxu0 %v490
    %2089 = vmatprep.subr.mxu0 0.0
    %2090 = vmatpush1.msra.mxu0 0.0
    %2091 = vmatprep.subr.mxu0 0.0
    %2092 = vmatpush1.msra.mxu0 0.0
    %2093 = vmatprep.subr.mxu0 0.0
    %2094 = vmatpush1.msra.mxu0 0.0
    %2095 = vmatprep.subr.mxu0 0.0
    %2096 = vmatpush1.msra.mxu0 0.0
    %2097 = vmatprep.subr.mxu0 0.0
    %2098 = vmatpush1.msra.mxu0 0.0
    %2099 = vmatprep.subr.mxu0 0.0
    %2100 = vmatpush1.msra.mxu0 0.0
    %2101 = vmatprep.subr.mxu0 0.0
    %2102 = vmatpush1.msra.mxu0 0.0
    %2103 = vmatprep.subr.mxu0 0.0
    %2104 = vmatpush1.msra.mxu0 0.0
    %2105 = vmatprep.subr.mxu0 0.0
    %2106 = vmatpush1.msra.mxu0 0.0
    %2107 = vmatprep.subr.mxu0 0.0
    %2108 = vmatpush1.msra.mxu0 0.0
    %2109 = vmatprep.subr.mxu0 0.0
    %2110 = vmatpush1.msra.mxu0 0.0
    %2111 = vmatprep.subr.mxu0 0.0
    %2112 = vmatpush1.msra.mxu0 0.0
    %2113 = vmatprep.subr.mxu0 0.0
    %2114 = vmatpush1.msra.mxu0 0.0
    %2115 = vmatprep.subr.mxu0 0.0
    %2116 = vmatpush1.msra.mxu0 0.0
    %2117 = vmatprep.subr.mxu0 0.0
    %2118 = vmatpush1.msra.mxu0 0.0
    %2119 = vmatprep.subr.mxu0 0.0
    %2120 = vmatpush1.msra.mxu0 0.0
    %2121 = vmatprep.subr.mxu0 0.0
    %2122 = vmatpush1.msra.mxu0 0.0
    %2123 = vmatprep.subr.mxu0 0.0
    %2124 = vmatpush1.msra.mxu0 0.0
    %2125 = vmatprep.subr.mxu0 0.0
    %2126 = vmatpush1.msra.mxu0 0.0
    %2127 = vmatprep.subr.mxu0 0.0
    %2128 = vmatpush1.msra.mxu0 0.0
    %2129 = vmatprep.subr.mxu0 0.0
    %2130 = vmatpush1.msra.mxu0 0.0
    %2131 = vmatprep.subr.mxu0 0.0
    %2132 = vmatpush1.msra.mxu0 0.0
    %2133 = vmatprep.subr.mxu0 0.0
    %2134 = vmatpush1.msra.mxu0 0.0
    %2135 = vmatprep.subr.mxu0 0.0
    %2136 = vmatpush1.msra.mxu0 0.0
    %2137 = vmatprep.subr.mxu0 0.0
    %2138 = vmatpush1.msra.mxu0 0.0
    %2139 = vmatprep.subr.mxu0 0.0
    %2140 = vmatpush1.msra.mxu0 0.0
    %2141 = vmatprep.subr.mxu0 0.0
    %2142 = vmatpush1.msra.mxu0 0.0
    %2143 = vmatprep.subr.mxu0 0.0
    %2144 = vmatpush1.msra.mxu0 0.0
    %2145 = vmatprep.subr.mxu0 0.0
    %2146 = vmatpush1.msra.mxu0 0.0
    %2147 = vmatprep.subr.mxu0 0.0
    %2148 = vmatpush1.msra.mxu0 0.0
    %2149 = vmatprep.mubr.f32.mxu0 0.0
    %2150 = vmatmul.mubr.f32.gmra.mrb[0].mxu0 %v2083
    %v2151 = vpop.f32.mrb[0].mxu0
    %v2152 = vadd.f32 0.0, %v2151
    %v2153 = vpop.f32.mrb[0].mxu0
    %2154 = vdwg.mxu0
    %v2155 = vadd.f32 %v2079, %v2152
    %v2156 = vxor.u32 %v2077, 2147483648
    %v2157 = vmul.f32 %v2156, 1.442695
    %v2158 = vpow.pop %v2157
    %v2159 = vadd.f32 %v2158, 1.0
    %v2160 = vrcp.pop %v2159
    %v2161 = vmul.f32 1.0, %v2160
    %v2162 = vtanh.pop %v2077
    %v2163 = vmul.f32 %v2161, %v1986
    %2165 = vrot.lane.b32.xlu0 %v2162, 80
    %v2166 = vpop.permute.xlu0 %2165
    %v2168 = vmul.f32 %v2161, %v2166
    %2170 = vrot.lane.b32.xlu0 %v2168, 16
    %v2171 = vpop.permute.xlu0 %2170
    %v2173 = vadd.f32 %v2163, %v2171
    %v2174 = vtanh.pop %v2173
    %2176 = vrot.lane.b32.xlu0 %v2174, 16
    %v2177 = vpop.permute.xlu0 %2176
    %v2179 = vmul.f32 %v2161, %v2177
    %v2180 = vxor.u32 %v2155, 2147483648
    %v2181 = vmul.f32 %v2180, 1.442695
    %v2182 = vpow.pop %v2181
    %v2183 = vadd.f32 %v2182, 1.0
    %v2184 = vrcp.pop %v2183
    %v2185 = vmul.f32 1.0, %v2184
    %v2186 = vtanh.pop %v2155
    %v2187 = vmul.f32 %v2185, %v1997
    %2189 = vrot.lane.b32.xlu0 %v2186, 80
    %v2190 = vpop.permute.xlu0 %2189
    %v2192 = vmul.f32 %v2185, %v2190
    %2194 = vrot.lane.b32.xlu0 %v2192, 16
    %v2195 = vpop.permute.xlu0 %2194
    %v2197 = vadd.f32 %v2187, %v2195
    %v2198 = vtanh.pop %v2197
    %2200 = vrot.lane.b32.xlu0 %v2198, 16
    %v2201 = vpop.permute.xlu0 %2200
    %v2203 = vmul.f32 %v2185, %v2201
    %2205 = vset.pattern.permute.xlu0 0
    %2206 = vperm.xlu0 %2205, %v1998
    %v2207 = vpop.permute.xlu0 %2206
    %v2209 = vmul.f32 %v2207, %v2179
    %2211 = vrot.lane.b32.xlu0 %v2209, 96
    %v2212 = vpop.permute.xlu0 %2211
    %2214 = vst.msk [vmem:[%s966] sm:$0x3] %vm701, %v2212
    %2216 = vset.pattern.permute.xlu0 0
    %2217 = vperm.xlu0 %2216, %v1999
    %v2218 = vpop.permute.xlu0 %2217
    %v2220 = vmul.f32 %v2218, %v2203
    %2222 = vrot.lane.b32.xlu0 %v2220, 112
    %v2223 = vpop.permute.xlu0 %2222
    %2225 = vst.msk [vmem:[%s954] sm:$0x3] %vm714, %v2223
    %v2226 = vsub.f32 1.0, %v1998
    %2228 = vset.pattern.permute.xlu0 0
    %2229 = vperm.xlu0 %2228, %v2226
    %v2230 = vpop.permute.xlu0 %2229
    %v2232 = vmul.f32 %v2230, %v1983
    %v2233 = vadd.f32 %v2209, %v2232
    %v2234 = vmul.f32 %v2207, %v2173
    %v2235 = vmul.f32 %v2230, %v1986
    %v2236 = vadd.f32 %v2234, %v2235
    %v2237 = vsub.f32 1.0, %v1999
    %2239 = vset.pattern.permute.xlu0 0
    %2240 = vperm.xlu0 %2239, %v2237
    %v2241 = vpop.permute.xlu0 %2240
    %v2243 = vmul.f32 %v2241, %v1994
    %v2244 = vadd.f32 %v2220, %v2243
    %v2245 = vmul.f32 %v2218, %v2197
    %v2246 = vmul.f32 %v2241, %v1997
    %v2247 = vadd.f32 %v2245, %v2246
    %v2248 = vld [vmem:[%s492] sm:$0x3]
    %v2249 = vld [vmem:[%s1] sm:$0x3]
    %s2250 = scalar_lea.vmem [#allocation2], 14
    %v2251 = vld [vmem:[%s2250] sm:$0x3]
    %2253 = vrot.lane.b32.xlu0 %v2233, 96
    %v2254 = vpop.permute.xlu0 %2253
    %v2255 = vsel %vm495, %v2254, 0
    %2257 = vmatprep.subr.mxu0 0.0
    %2258 = vmatpush1.msra.mxu0 %v487
    %2259 = vmatprep.subr.mxu0 0.0
    %2260 = vmatpush1.msra.mxu0 %v488
    %2261 = vmatprep.subr.mxu0 0.0
    %2262 = vmatpush1.msra.mxu0 0.0
    %2263 = vmatprep.subr.mxu0 0.0
    %2264 = vmatpush1.msra.mxu0 0.0
    %2265 = vmatprep.subr.mxu0 0.0
    %2266 = vmatpush1.msra.mxu0 0.0
    %2267 = vmatprep.subr.mxu0 0.0
    %2268 = vmatpush1.msra.mxu0 0.0
    %2269 = vmatprep.subr.mxu0 0.0
    %2270 = vmatpush1.msra.mxu0 0.0
    %2271 = vmatprep.subr.mxu0 0.0
    %2272 = vmatpush1.msra.mxu0 0.0
    %2273 = vmatprep.subr.mxu0 0.0
    %2274 = vmatpush1.msra.mxu0 0.0
    %2275 = vmatprep.subr.mxu0 0.0
    %2276 = vmatpush1.msra.mxu0 0.0
    %2277 = vmatprep.subr.mxu0 0.0
    %2278 = vmatpush1.msra.mxu0 0.0
    %2279 = vmatprep.subr.mxu0 0.0
    %2280 = vmatpush1.msra.mxu0 0.0
    %2281 = vmatprep.subr.mxu0 0.0
    %2282 = vmatpush1.msra.mxu0 0.0
    %2283 = vmatprep.subr.mxu0 0.0
    %2284 = vmatpush1.msra.mxu0 0.0
    %2285 = vmatprep.subr.mxu0 0.0
    %2286 = vmatpush1.msra.mxu0 0.0
    %2287 = vmatprep.subr.mxu0 0.0
    %2288 = vmatpush1.msra.mxu0 0.0
    %2289 = vmatprep.subr.mxu0 0.0
    %2290 = vmatpush1.msra.mxu0 0.0
    %2291 = vmatprep.subr.mxu0 0.0
    %2292 = vmatpush1.msra.mxu0 0.0
    %2293 = vmatprep.subr.mxu0 0.0
    %2294 = vmatpush1.msra.mxu0 0.0
    %2295 = vmatprep.subr.mxu0 0.0
    %2296 = vmatpush1.msra.mxu0 0.0
    %2297 = vmatprep.subr.mxu0 0.0
    %2298 = vmatpush1.msra.mxu0 0.0
    %2299 = vmatprep.subr.mxu0 0.0
    %2300 = vmatpush1.msra.mxu0 0.0
    %2301 = vmatprep.subr.mxu0 0.0
    %2302 = vmatpush1.msra.mxu0 0.0
    %2303 = vmatprep.subr.mxu0 0.0
    %2304 = vmatpush1.msra.mxu0 0.0
    %2305 = vmatprep.subr.mxu0 0.0
    %2306 = vmatpush1.msra.mxu0 0.0
    %2307 = vmatprep.subr.mxu0 0.0
    %2308 = vmatpush1.msra.mxu0 0.0
    %2309 = vmatprep.subr.mxu0 0.0
    %2310 = vmatpush1.msra.mxu0 0.0
    %2311 = vmatprep.subr.mxu0 0.0
    %2312 = vmatpush1.msra.mxu0 0.0
    %2313 = vmatprep.subr.mxu0 0.0
    %2314 = vmatpush1.msra.mxu0 0.0
    %2315 = vmatprep.subr.mxu0 0.0
    %2316 = vmatpush1.msra.mxu0 0.0
    %2317 = vmatprep.subr.mxu0 0.0
    %2318 = vmatpush1.msra.mxu0 0.0
    %2319 = vmatprep.subr.mxu0 0.0
    %2320 = vmatpush1.msra.mxu0 0.0
    %2321 = vmatprep.mubr.f32.mxu0 0.0
    %2322 = vmatmul.mubr.f32.gmra.mrb[0].mxu0 %v2255
    %v2323 = vpop.f32.mrb[0].mxu0
    %v2324 = vadd.f32 0.0, %v2323
    %v2325 = vpop.f32.mrb[0].mxu0
    %2326 = vdwg.mxu0
    %v2327 = vadd.f32 %v2251, %v2324
    %v2328 = vld [vmem:[#allocation3] sm:$0x3]
    %2330 = vrot.lane.b32.xlu0 %v2244, 96
    %v2331 = vpop.permute.xlu0 %2330
    %v2332 = vsel %vm495, %v2331, 0
    %2334 = vmatprep.subr.mxu0 0.0
    %2335 = vmatpush1.msra.mxu0 %v489
    %2336 = vmatprep.subr.mxu0 0.0
    %2337 = vmatpush1.msra.mxu0 %v490
    %2338 = vmatprep.subr.mxu0 0.0
    %2339 = vmatpush1.msra.mxu0 0.0
    %2340 = vmatprep.subr.mxu0 0.0
    %2341 = vmatpush1.msra.mxu0 0.0
    %2342 = vmatprep.subr.mxu0 0.0
    %2343 = vmatpush1.msra.mxu0 0.0
    %2344 = vmatprep.subr.mxu0 0.0
    %2345 = vmatpush1.msra.mxu0 0.0
    %2346 = vmatprep.subr.mxu0 0.0
    %2347 = vmatpush1.msra.mxu0 0.0
    %2348 = vmatprep.subr.mxu0 0.0
    %2349 = vmatpush1.msra.mxu0 0.0
    %2350 = vmatprep.subr.mxu0 0.0
    %2351 = vmatpush1.msra.mxu0 0.0
    %2352 = vmatprep.subr.mxu0 0.0
    %2353 = vmatpush1.msra.mxu0 0.0
    %2354 = vmatprep.subr.mxu0 0.0
    %2355 = vmatpush1.msra.mxu0 0.0
    %2356 = vmatprep.subr.mxu0 0.0
    %2357 = vmatpush1.msra.mxu0 0.0
    %2358 = vmatprep.subr.mxu0 0.0
    %2359 = vmatpush1.msra.mxu0 0.0
    %2360 = vmatprep.subr.mxu0 0.0
    %2361 = vmatpush1.msra.mxu0 0.0
    %2362 = vmatprep.subr.mxu0 0.0
    %2363 = vmatpush1.msra.mxu0 0.0
    %2364 = vmatprep.subr.mxu0 0.0
    %2365 = vmatpush1.msra.mxu0 0.0
    %2366 = vmatprep.subr.mxu0 0.0
    %2367 = vmatpush1.msra.mxu0 0.0
    %2368 = vmatprep.subr.mxu0 0.0
    %2369 = vmatpush1.msra.mxu0 0.0
    %2370 = vmatprep.subr.mxu0 0.0
    %2371 = vmatpush1.msra.mxu0 0.0
    %2372 = vmatprep.subr.mxu0 0.0
    %2373 = vmatpush1.msra.mxu0 0.0
    %2374 = vmatprep.subr.mxu0 0.0
    %2375 = vmatpush1.msra.mxu0 0.0
    %2376 = vmatprep.subr.mxu0 0.0
    %2377 = vmatpush1.msra.mxu0 0.0
    %2378 = vmatprep.subr.mxu0 0.0
    %2379 = vmatpush1.msra.mxu0 0.0
    %2380 = vmatprep.subr.mxu0 0.0
    %2381 = vmatpush1.msra.mxu0 0.0
    %2382 = vmatprep.subr.mxu0 0.0
    %2383 = vmatpush1.msra.mxu0 0.0
    %2384 = vmatprep.subr.mxu0 0.0
    %2385 = vmatpush1.msra.mxu0 0.0
    %2386 = vmatprep.subr.mxu0 0.0
    %2387 = vmatpush1.msra.mxu0 0.0
    %2388 = vmatprep.subr.mxu0 0.0
    %2389 = vmatpush1.msra.mxu0 0.0
    %2390 = vmatprep.subr.mxu0 0.0
    %2391 = vmatpush1.msra.mxu0 0.0
    %2392 = vmatprep.subr.mxu0 0.0
    %2393 = vmatpush1.msra.mxu0 0.0
    %2394 = vmatprep.subr.mxu0 0.0
    %2395 = vmatpush1.msra.mxu0 0.0
    %2396 = vmatprep.subr.mxu0 0.0
    %2397 = vmatpush1.msra.mxu0 0.0
    %2398 = vmatprep.mubr.f32.mxu0 0.0
    %2399 = vmatmul.mubr.f32.gmra.mrb[0].mxu0 %v2332
    %v2400 = vpop.f32.mrb[0].mxu0
    %v2401 = vadd.f32 0.0, %v2400
    %v2402 = vpop.f32.mrb[0].mxu0
    %2403 = vdwg.mxu0
    %v2404 = vadd.f32 %v2328, %v2401
    %v2405 = vxor.u32 %v2327, 2147483648
    %v2406 = vmul.f32 %v2405, 1.442695
    %v2407 = vpow.pop %v2406
    %v2408 = vadd.f32 %v2407, 1.0
    %v2409 = vrcp.pop %v2408
    %v2410 = vmul.f32 1.0, %v2409
    %v2411 = vtanh.pop %v2327
    %v2412 = vmul.f32 %v2410, %v2236
    %2414 = vrot.lane.b32.xlu0 %v2411, 80
    %v2415 = vpop.permute.xlu0 %2414
    %v2417 = vmul.f32 %v2410, %v2415
    %2419 = vrot.lane.b32.xlu0 %v2417, 16
    %v2420 = vpop.permute.xlu0 %2419
    %v2422 = vadd.f32 %v2412, %v2420
    %v2423 = vtanh.pop %v2422
    %2425 = vrot.lane.b32.xlu0 %v2423, 16
    %v2426 = vpop.permute.xlu0 %2425
    %v2428 = vmul.f32 %v2410, %v2426
    %v2429 = vxor.u32 %v2404, 2147483648
    %v2430 = vmul.f32 %v2429, 1.442695
    %v2431 = vpow.pop %v2430
    %v2432 = vadd.f32 %v2431, 1.0
    %v2433 = vrcp.pop %v2432
    %v2434 = vmul.f32 1.0, %v2433
    %v2435 = vtanh.pop %v2404
    %v2436 = vmul.f32 %v2434, %v2247
    %2438 = vrot.lane.b32.xlu0 %v2435, 80
    %v2439 = vpop.permute.xlu0 %2438
    %v2441 = vmul.f32 %v2434, %v2439
    %2443 = vrot.lane.b32.xlu0 %v2441, 16
    %v2444 = vpop.permute.xlu0 %2443
    %v2446 = vadd.f32 %v2436, %v2444
    %v2447 = vtanh.pop %v2446
    %2449 = vrot.lane.b32.xlu0 %v2447, 16
    %v2450 = vpop.permute.xlu0 %2449
    %v2452 = vmul.f32 %v2434, %v2450
    %2454 = vset.pattern.permute.xlu0 0
    %2455 = vperm.xlu0 %2454, %v2248
    %v2456 = vpop.permute.xlu0 %2455
    %v2458 = vmul.f32 %v2456, %v2428
    %2460 = vrot.lane.b32.xlu0 %v2458, 96
    %v2461 = vpop.permute.xlu0 %2460
    %2463 = vst.msk [vmem:[%s713] sm:$0x3] %vm701, %v2461
    %2465 = vset.pattern.permute.xlu0 0
    %2466 = vperm.xlu0 %2465, %v2249
    %v2467 = vpop.permute.xlu0 %2466
    %v2469 = vmul.f32 %v2467, %v2452
    %2471 = vrot.lane.b32.xlu0 %v2469, 112
    %v2472 = vpop.permute.xlu0 %2471
    %2474 = vst.msk [vmem:[#allocation4] sm:$0x3] %vm714, %v2472
    %v2475 = vld [vmem:[#allocation4] sm:$0x3]
    %v2476 = vld [vmem:[#allocation4 + $0x2] sm:$0x3]
    %v2477 = vld [vmem:[#allocation4 + $0x4] sm:$0x3]
    %v2478 = vld [vmem:[#allocation4 + $0x6] sm:$0x3]
    %v2479 = vld [vmem:[#allocation4 + $0x8] sm:$0x3]
    %v2480 = vld [vmem:[#allocation4 + $0xa] sm:$0x3]
    %v2481 = vld [vmem:[#allocation4 + $0xc] sm:$0x3]
    %v2482 = vld [vmem:[#allocation4 + $0xe] sm:$0x3]
    %v2483 = vlaneseq
    %v2484 = vshrl.u32 %v2483, 7
    %vm2485 = vcmp.eq.s32.totalorder %v2484, 0
    %v2486 = vsel %vm2485, 1, 0
    %v2487 = vcvt.s32.f32 %v2486
    %v2488 = vmul.f32 %v2475, %v2487
    %v2489 = vmul.f32 %v2476, %v2487
    %v2490 = vmul.f32 %v2477, %v2487
    %v2491 = vmul.f32 %v2478, %v2487
    %v2492 = vmul.f32 %v2479, %v2487
    %v2493 = vmul.f32 %v2480, %v2487
    %v2494 = vmul.f32 %v2481, %v2487
    %v2495 = vmul.f32 %v2482, %v2487
    %vm2496 = vcmask 254976
    %v2497 = vsel %vm2496, %v2488, 0.0
    %v2498 = vrot.slane %v2497, 4
    %v2499 = vadd.f32 %v2497, %v2498
    %v2500 = vrot.slane %v2499, 2
    %v2501 = vadd.f32 %v2499, %v2500
    %v2502 = vrot.slane %v2501, 1
    %v2503 = vadd.f32 %v2501, %v2502
    %v2504 = vsel %vm2496, %v2489, 0.0
    %v2505 = vrot.slane %v2504, 4
    %v2506 = vadd.f32 %v2504, %v2505
    %v2507 = vrot.slane %v2506, 2
    %v2508 = vadd.f32 %v2506, %v2507
    %v2509 = vrot.slane %v2508, 1
    %v2510 = vadd.f32 %v2508, %v2509
    %v2511 = vsel %vm2496, %v2490, 0.0
    %v2512 = vrot.slane %v2511, 4
    %v2513 = vadd.f32 %v2511, %v2512
    %v2514 = vrot.slane %v2513, 2
    %v2515 = vadd.f32 %v2513, %v2514
    %v2516 = vrot.slane %v2515, 1
    %v2517 = vadd.f32 %v2515, %v2516
    %v2518 = vsel %vm2496, %v2491, 0.0
    %v2519 = vrot.slane %v2518, 4
    %v2520 = vadd.f32 %v2518, %v2519
    %v2521 = vrot.slane %v2520, 2
    %v2522 = vadd.f32 %v2520, %v2521
    %v2523 = vrot.slane %v2522, 1
    %v2524 = vadd.f32 %v2522, %v2523
    %v2525 = vsel %vm2496, %v2492, 0.0
    %v2526 = vrot.slane %v2525, 4
    %v2527 = vadd.f32 %v2525, %v2526
    %v2528 = vrot.slane %v2527, 2
    %v2529 = vadd.f32 %v2527, %v2528
    %v2530 = vrot.slane %v2529, 1
    %v2531 = vadd.f32 %v2529, %v2530
    %v2532 = vsel %vm2496, %v2493, 0.0
    %v2533 = vrot.slane %v2532, 4
    %v2534 = vadd.f32 %v2532, %v2533
    %v2535 = vrot.slane %v2534, 2
    %v2536 = vadd.f32 %v2534, %v2535
    %v2537 = vrot.slane %v2536, 1
    %v2538 = vadd.f32 %v2536, %v2537
    %v2539 = vsel %vm2496, %v2494, 0.0
    %v2540 = vrot.slane %v2539, 4
    %v2541 = vadd.f32 %v2539, %v2540
    %v2542 = vrot.slane %v2541, 2
    %v2543 = vadd.f32 %v2541, %v2542
    %v2544 = vrot.slane %v2543, 1
    %v2545 = vadd.f32 %v2543, %v2544
    %v2546 = vsel %vm2496, %v2495, 0.0
    %v2547 = vrot.slane %v2546, 4
    %v2548 = vadd.f32 %v2546, %v2547
    %v2549 = vrot.slane %v2548, 2
    %v2550 = vadd.f32 %v2548, %v2549
    %v2551 = vrot.slane %v2550, 1
    %v2552 = vadd.f32 %v2550, %v2551
    %vm2553 = vcmp.eq.s32.totalorder %v2484, 1
    %v2554 = vsel %vm2553, 1, 0
    %v2555 = vcvt.s32.f32 %v2554
    %v2556 = vmul.f32 %v2475, %v2555
    %v2557 = vmul.f32 %v2476, %v2555
    %v2558 = vmul.f32 %v2477, %v2555
    %v2559 = vmul.f32 %v2478, %v2555
    %v2560 = vmul.f32 %v2479, %v2555
    %v2561 = vmul.f32 %v2480, %v2555
    %v2562 = vmul.f32 %v2481, %v2555
    %v2563 = vmul.f32 %v2482, %v2555
    %v2564 = vsel %vm2496, %v2556, 0.0
    %v2565 = vrot.slane %v2564, 4
    %v2566 = vadd.f32 %v2564, %v2565
    %v2567 = vrot.slane %v2566, 2
    %v2568 = vadd.f32 %v2566, %v2567
    %v2569 = vrot.slane %v2568, 1
    %v2570 = vadd.f32 %v2568, %v2569
    %v2571 = vsel %vm2496, %v2557, 0.0
    %v2572 = vrot.slane %v2571, 4
    %v2573 = vadd.f32 %v2571, %v2572
    %v2574 = vrot.slane %v2573, 2
    %v2575 = vadd.f32 %v2573, %v2574
    %v2576 = vrot.slane %v2575, 1
    %v2577 = vadd.f32 %v2575, %v2576
    %v2578 = vsel %vm2496, %v2558, 0.0
    %v2579 = vrot.slane %v2578, 4
    %v2580 = vadd.f32 %v2578, %v2579
    %v2581 = vrot.slane %v2580, 2
    %v2582 = vadd.f32 %v2580, %v2581
    %v2583 = vrot.slane %v2582, 1
    %v2584 = vadd.f32 %v2582, %v2583
    %v2585 = vsel %vm2496, %v2559, 0.0
    %v2586 = vrot.slane %v2585, 4
    %v2587 = vadd.f32 %v2585, %v2586
    %v2588 = vrot.slane %v2587, 2
    %v2589 = vadd.f32 %v2587, %v2588
    %v2590 = vrot.slane %v2589, 1
    %v2591 = vadd.f32 %v2589, %v2590
    %v2592 = vsel %vm2496, %v2560, 0.0
    %v2593 = vrot.slane %v2592, 4
    %v2594 = vadd.f32 %v2592, %v2593
    %v2595 = vrot.slane %v2594, 2
    %v2596 = vadd.f32 %v2594, %v2595
    %v2597 = vrot.slane %v2596, 1
    %v2598 = vadd.f32 %v2596, %v2597
    %v2599 = vsel %vm2496, %v2561, 0.0
    %v2600 = vrot.slane %v2599, 4
    %v2601 = vadd.f32 %v2599, %v2600
    %v2602 = vrot.slane %v2601, 2
    %v2603 = vadd.f32 %v2601, %v2602
    %v2604 = vrot.slane %v2603, 1
    %v2605 = vadd.f32 %v2603, %v2604
    %v2606 = vsel %vm2496, %v2562, 0.0
    %v2607 = vrot.slane %v2606, 4
    %v2608 = vadd.f32 %v2606, %v2607
    %v2609 = vrot.slane %v2608, 2
    %v2610 = vadd.f32 %v2608, %v2609
    %v2611 = vrot.slane %v2610, 1
    %v2612 = vadd.f32 %v2610, %v2611
    %v2613 = vsel %vm2496, %v2563, 0.0
    %v2614 = vrot.slane %v2613, 4
    %v2615 = vadd.f32 %v2613, %v2614
    %v2616 = vrot.slane %v2615, 2
    %v2617 = vadd.f32 %v2615, %v2616
    %v2618 = vrot.slane %v2617, 1
    %v2619 = vadd.f32 %v2617, %v2618
    %v2620 = vld [vmem:[#allocation8] sm:$0xff]
    %s2621 = scalar_lea.vmem [#allocation8], 8
    %v2622 = vld [vmem:[%s2621] sm:$0xff]
    %vm2623 = vcmask 64512
    %v2624 = vsel %vm2623, %v2620, 0.0
    %2625 = vadd.xlane.f32.xlu0 %v2624
    %v2626 = vpop.xlane.xlu0 %2625
    %v2627 = vadd.f32 %v2626, 1.0
    %v2628 = vsel %vm2623, %v2622, 0.0
    %2629 = vadd.xlane.f32.xlu0 %v2628
    %v2630 = vpop.xlane.xlu0 %2629
    %v2631 = vadd.f32 %v2630, 1.0
    %v2632 = vrcp.pop %v2627
    %v2633 = vrcp.pop %v2631
    %vm2642 = vcmask 1041409
    %v2643 = vsel %vm2642, %v2510, %v2503
    %vm2644 = vcmask 1042434
    %v2645 = vsel %vm2644, %v2517, %v2643
    %vm2646 = vcmask 1043459
    %v2647 = vsel %vm2646, %v2524, %v2645
    %vm2648 = vcmask 1044484
    %v2649 = vsel %vm2648, %v2531, %v2647
    %vm2650 = vcmask 1045509
    %v2651 = vsel %vm2650, %v2538, %v2649
    %vm2652 = vcmask 1046534
    %v2653 = vsel %vm2652, %v2545, %v2651
    %vm2654 = vcmask 1047559
    %v2655 = vsel %vm2654, %v2552, %v2653
    %v2658 = vsel %vm2623, %v2620, 0
    %2660 = vmatprep.subr.mxu0 0.0
    %2661 = vmatpush1.msra.mxu0 %v2655
    %2662 = vmatprep.subr.mxu0 0.0
    %2663 = vmatpush1.msra.mxu0 0.0
    %2664 = vmatprep.subr.mxu0 0.0
    %2665 = vmatpush1.msra.mxu0 0.0
    %2666 = vmatprep.subr.mxu0 0.0
    %2667 = vmatpush1.msra.mxu0 0.0
    %2668 = vmatprep.subr.mxu0 0.0
    %2669 = vmatpush1.msra.mxu0 0.0
    %2670 = vmatprep.subr.mxu0 0.0
    %2671 = vmatpush1.msra.mxu0 0.0
    %2672 = vmatprep.subr.mxu0 0.0
    %2673 = vmatpush1.msra.mxu0 0.0
    %2674 = vmatprep.subr.mxu0 0.0
    %2675 = vmatpush1.msra.mxu0 0.0
    %2676 = vmatprep.subr.mxu0 0.0
    %2677 = vmatpush1.msra.mxu0 0.0
    %2678 = vmatprep.subr.mxu0 0.0
    %2679 = vmatpush1.msra.mxu0 0.0
    %2680 = vmatprep.subr.mxu0 0.0
    %2681 = vmatpush1.msra.mxu0 0.0
    %2682 = vmatprep.subr.mxu0 0.0
    %2683 = vmatpush1.msra.mxu0 0.0
    %2684 = vmatprep.subr.mxu0 0.0
    %2685 = vmatpush1.msra.mxu0 0.0
    %2686 = vmatprep.subr.mxu0 0.0
    %2687 = vmatpush1.msra.mxu0 0.0
    %2688 = vmatprep.subr.mxu0 0.0
    %2689 = vmatpush1.msra.mxu0 0.0
    %2690 = vmatprep.subr.mxu0 0.0
    %2691 = vmatpush1.msra.mxu0 0.0
    %2692 = vmatprep.subr.mxu0 0.0
    %2693 = vmatpush1.msra.mxu0 0.0
    %2694 = vmatprep.subr.mxu0 0.0
    %2695 = vmatpush1.msra.mxu0 0.0
    %2696 = vmatprep.subr.mxu0 0.0
    %2697 = vmatpush1.msra.mxu0 0.0
    %2698 = vmatprep.subr.mxu0 0.0
    %2699 = vmatpush1.msra.mxu0 0.0
    %2700 = vmatprep.subr.mxu0 0.0
    %2701 = vmatpush1.msra.mxu0 0.0
    %2702 = vmatprep.subr.mxu0 0.0
    %2703 = vmatpush1.msra.mxu0 0.0
    %2704 = vmatprep.subr.mxu0 0.0
    %2705 = vmatpush1.msra.mxu0 0.0
    %2706 = vmatprep.subr.mxu0 0.0
    %2707 = vmatpush1.msra.mxu0 0.0
    %2708 = vmatprep.subr.mxu0 0.0
    %2709 = vmatpush1.msra.mxu0 0.0
    %2710 = vmatprep.subr.mxu0 0.0
    %2711 = vmatpush1.msra.mxu0 0.0
    %2712 = vmatprep.subr.mxu0 0.0
    %2713 = vmatpush1.msra.mxu0 0.0
    %2714 = vmatprep.subr.mxu0 0.0
    %2715 = vmatpush1.msra.mxu0 0.0
    %2716 = vmatprep.subr.mxu0 0.0
    %2717 = vmatpush1.msra.mxu0 0.0
    %2718 = vmatprep.subr.mxu0 0.0
    %2719 = vmatpush1.msra.mxu0 0.0
    %2720 = vmatprep.subr.mxu0 0.0
    %2721 = vmatpush1.msra.mxu0 0.0
    %2722 = vmatprep.subr.mxu0 0.0
    %2723 = vmatpush1.msra.mxu0 0.0
    %2724 = vmatprep.mubr.f32.mxu0 0.0
    %2725 = vmatmul.mubr.f32.gmra.mrb[0].mxu0 %v2658
    %v2726 = vpop.f32.mrb[0].mxu0
    %v2727 = vadd.f32 0.0, %v2726
    %v2728 = vpop.f32.mrb[0].mxu0
    %2729 = vdwg.mxu0
    %v2738 = vsel %vm2642, %v2577, %v2570
    %v2739 = vsel %vm2644, %v2584, %v2738
    %v2740 = vsel %vm2646, %v2591, %v2739
    %v2741 = vsel %vm2648, %v2598, %v2740
    %v2742 = vsel %vm2650, %v2605, %v2741
    %v2743 = vsel %vm2652, %v2612, %v2742
    %v2744 = vsel %vm2654, %v2619, %v2743
    %v2747 = vsel %vm2623, %v2622, 0
    %2749 = vmatprep.subr.mxu0 0.0
    %2750 = vmatpush1.msra.mxu0 %v2744
    %2751 = vmatprep.subr.mxu0 0.0
    %2752 = vmatpush1.msra.mxu0 0.0
    %2753 = vmatprep.subr.mxu0 0.0
    %2754 = vmatpush1.msra.mxu0 0.0
    %2755 = vmatprep.subr.mxu0 0.0
    %2756 = vmatpush1.msra.mxu0 0.0
    %2757 = vmatprep.subr.mxu0 0.0
    %2758 = vmatpush1.msra.mxu0 0.0
    %2759 = vmatprep.subr.mxu0 0.0
    %2760 = vmatpush1.msra.mxu0 0.0
    %2761 = vmatprep.subr.mxu0 0.0
    %2762 = vmatpush1.msra.mxu0 0.0
    %2763 = vmatprep.subr.mxu0 0.0
    %2764 = vmatpush1.msra.mxu0 0.0
    %2765 = vmatprep.subr.mxu0 0.0
    %2766 = vmatpush1.msra.mxu0 0.0
    %2767 = vmatprep.subr.mxu0 0.0
    %2768 = vmatpush1.msra.mxu0 0.0
    %2769 = vmatprep.subr.mxu0 0.0
    %2770 = vmatpush1.msra.mxu0 0.0
    %2771 = vmatprep.subr.mxu0 0.0
    %2772 = vmatpush1.msra.mxu0 0.0
    %2773 = vmatprep.subr.mxu0 0.0
    %2774 = vmatpush1.msra.mxu0 0.0
    %2775 = vmatprep.subr.mxu0 0.0
    %2776 = vmatpush1.msra.mxu0 0.0
    %2777 = vmatprep.subr.mxu0 0.0
    %2778 = vmatpush1.msra.mxu0 0.0
    %2779 = vmatprep.subr.mxu0 0.0
    %2780 = vmatpush1.msra.mxu0 0.0
    %2781 = vmatprep.subr.mxu0 0.0
    %2782 = vmatpush1.msra.mxu0 0.0
    %2783 = vmatprep.subr.mxu0 0.0
    %2784 = vmatpush1.msra.mxu0 0.0
    %2785 = vmatprep.subr.mxu0 0.0
    %2786 = vmatpush1.msra.mxu0 0.0
    %2787 = vmatprep.subr.mxu0 0.0
    %2788 = vmatpush1.msra.mxu0 0.0
    %2789 = vmatprep.subr.mxu0 0.0
    %2790 = vmatpush1.msra.mxu0 0.0
    %2791 = vmatprep.subr.mxu0 0.0
    %2792 = vmatpush1.msra.mxu0 0.0
    %2793 = vmatprep.subr.mxu0 0.0
    %2794 = vmatpush1.msra.mxu0 0.0
    %2795 = vmatprep.subr.mxu0 0.0
    %2796 = vmatpush1.msra.mxu0 0.0
    %2797 = vmatprep.subr.mxu0 0.0
    %2798 = vmatpush1.msra.mxu0 0.0
    %2799 = vmatprep.subr.mxu0 0.0
    %2800 = vmatpush1.msra.mxu0 0.0
    %2801 = vmatprep.subr.mxu0 0.0
    %2802 = vmatpush1.msra.mxu0 0.0
    %2803 = vmatprep.subr.mxu0 0.0
    %2804 = vmatpush1.msra.mxu0 0.0
    %2805 = vmatprep.subr.mxu0 0.0
    %2806 = vmatpush1.msra.mxu0 0.0
    %2807 = vmatprep.subr.mxu0 0.0
    %2808 = vmatpush1.msra.mxu0 0.0
    %2809 = vmatprep.subr.mxu0 0.0
    %2810 = vmatpush1.msra.mxu0 0.0
    %2811 = vmatprep.subr.mxu0 0.0
    %2812 = vmatpush1.msra.mxu0 0.0
    %2813 = vmatprep.mubr.f32.mxu0 0.0
    %2814 = vmatmul.mubr.f32.gmra.mrb[0].mxu0 %v2747
    %v2815 = vpop.f32.mrb[0].mxu0
    %v2816 = vadd.f32 0.0, %v2815
    %v2817 = vpop.f32.mrb[0].mxu0
    %2818 = vdwg.mxu0
    %v2819 = vld [vmem:[%s11] sm:$0xff]
    %v2820 = vld [vmem:[%s11 + $0x8] sm:$0xff]
    %v2821 = vld [vmem:[%s11 + $0x10] sm:$0xff]
    %v2822 = vld [vmem:[%s11 + $0x18] sm:$0xff]
    %v2823 = vld [vmem:[%s12] sm:$0x1]
    %v2825 = vlaneseq
    %v2826 = vshrl.u32 %v2825, 7
    %v2827 = vsub.s32 0, %v2826
    %v2828 = vrot.slane %v2823, %v2827
    %v2831 = vsel %vm207, %v2727, 0
    %v2834 = vsel %vm207, %v2816, 0
    %2836 = vmatprep.subr.mxu0 0.0
    %2837 = vmatpush1.msra.mxu0 %v2819
    %2838 = vmatprep.subr.mxu0 0.0
    %2839 = vmatpush1.msra.mxu0 %v2820
    %2840 = vmatprep.subr.mxu0 0.0
    %2841 = vmatpush1.msra.mxu0 %v2821
    %2842 = vmatprep.subr.mxu0 0.0
    %2843 = vmatpush1.msra.mxu0 %v2822
    %2844 = vmatprep.subr.mxu0 0.0
    %2845 = vmatpush1.msra.mxu0 0.0
    %2846 = vmatprep.subr.mxu0 0.0
    %2847 = vmatpush1.msra.mxu0 0.0
    %2848 = vmatprep.subr.mxu0 0.0
    %2849 = vmatpush1.msra.mxu0 0.0
    %2850 = vmatprep.subr.mxu0 0.0
    %2851 = vmatpush1.msra.mxu0 0.0
    %2852 = vmatprep.subr.mxu0 0.0
    %2853 = vmatpush1.msra.mxu0 0.0
    %2854 = vmatprep.subr.mxu0 0.0
    %2855 = vmatpush1.msra.mxu0 0.0
    %2856 = vmatprep.subr.mxu0 0.0
    %2857 = vmatpush1.msra.mxu0 0.0
    %2858 = vmatprep.subr.mxu0 0.0
    %2859 = vmatpush1.msra.mxu0 0.0
    %2860 = vmatprep.subr.mxu0 0.0
    %2861 = vmatpush1.msra.mxu0 0.0
    %2862 = vmatprep.subr.mxu0 0.0
    %2863 = vmatpush1.msra.mxu0 0.0
    %2864 = vmatprep.subr.mxu0 0.0
    %2865 = vmatpush1.msra.mxu0 0.0
    %2866 = vmatprep.subr.mxu0 0.0
    %2867 = vmatpush1.msra.mxu0 0.0
    %2868 = vmatprep.subr.mxu0 0.0
    %2869 = vmatpush1.msra.mxu0 0.0
    %2870 = vmatprep.subr.mxu0 0.0
    %2871 = vmatpush1.msra.mxu0 0.0
    %2872 = vmatprep.subr.mxu0 0.0
    %2873 = vmatpush1.msra.mxu0 0.0
    %2874 = vmatprep.subr.mxu0 0.0
    %2875 = vmatpush1.msra.mxu0 0.0
    %2876 = vmatprep.subr.mxu0 0.0
    %2877 = vmatpush1.msra.mxu0 0.0
    %2878 = vmatprep.subr.mxu0 0.0
    %2879 = vmatpush1.msra.mxu0 0.0
    %2880 = vmatprep.subr.mxu0 0.0
    %2881 = vmatpush1.msra.mxu0 0.0
    %2882 = vmatprep.subr.mxu0 0.0
    %2883 = vmatpush1.msra.mxu0 0.0
    %2884 = vmatprep.subr.mxu0 0.0
    %2885 = vmatpush1.msra.mxu0 0.0
    %2886 = vmatprep.subr.mxu0 0.0
    %2887 = vmatpush1.msra.mxu0 0.0
    %2888 = vmatprep.subr.mxu0 0.0
    %2889 = vmatpush1.msra.mxu0 0.0
    %2890 = vmatprep.subr.mxu0 0.0
    %2891 = vmatpush1.msra.mxu0 0.0
    %2892 = vmatprep.subr.mxu0 0.0
    %2893 = vmatpush1.msra.mxu0 0.0
    %2894 = vmatprep.subr.mxu0 0.0
    %2895 = vmatpush1.msra.mxu0 0.0
    %2896 = vmatprep.subr.mxu0 0.0
    %2897 = vmatpush1.msra.mxu0 0.0
    %2898 = vmatprep.subr.mxu0 0.0
    %2899 = vmatpush1.msra.mxu0 0.0
    %2900 = vmatprep.mubr.f32.mxu0 0.0
    %2901 = vmatmul.mubr.f32.gmra.mrb[0].mxu0 %v2831
    %v2902 = vpop.f32.mrb[0].mxu0
    %v2903 = vadd.f32 %v2828, %v2902
    %v2904 = vpop.f32.mrb[0].mxu0
    %2905 = vmatprep.mubr.f32.mxu0 0.0
    %2906 = vmatmul.mubr.f32.gmra.mrb[0].mxu0 %v2834
    %v2907 = vpop.f32.mrb[0].mxu0
    %v2908 = vadd.f32 %v2828, %v2907
    %v2909 = vpop.f32.mrb[0].mxu0
    %2910 = vdwg.mxu0
    %2912 = vset.pattern.permute.xlu0 0
    %2913 = vperm.xlu0 %2912, %v2632
    %v2914 = vpop.permute.xlu0 %2913
    %2917 = vset.pattern.permute.xlu0 0
    %2918 = vperm.xlu0 %2917, %v2633
    %v2919 = vpop.permute.xlu0 %2918
    %v2921 = vmul.f32 %v2903, %v2914
    %v2922 = vmul.f32 %v2908, %v2919
    %v2923 = vmax.f32 %v2921, 0.0
    %v2924 = vmax.f32 %v2922, 0.0
    %2925 = vmatprep.subr.mxu0 0.0
    %2926 = vmatpush1.msra.mxu0 %v2923
    %2927 = vmatprep.subr.mxu0 0.0
    %2928 = vmatpush1.msra.mxu0 0.0
    %2929 = vmatprep.subr.mxu0 0.0
    %2930 = vmatpush1.msra.mxu0 0.0
    %2931 = vmatprep.subr.mxu0 0.0
    %2932 = vmatpush1.msra.mxu0 0.0
    %2933 = vmatprep.subr.mxu0 0.0
    %2934 = vmatpush1.msra.mxu0 0.0
    %2935 = vmatprep.subr.mxu0 0.0
    %2936 = vmatpush1.msra.mxu0 0.0
    %2937 = vmatprep.subr.mxu0 0.0
    %2938 = vmatpush1.msra.mxu0 0.0
    %2939 = vmatprep.subr.mxu0 0.0
    %2940 = vmatpush1.msra.mxu0 0.0
    %2941 = vmatprep.subr.mxu0 0.0
    %2942 = vmatpush1.msra.mxu0 0.0
    %2943 = vmatprep.subr.mxu0 0.0
    %2944 = vmatpush1.msra.mxu0 0.0
    %2945 = vmatprep.subr.mxu0 0.0
    %2946 = vmatpush1.msra.mxu0 0.0
    %2947 = vmatprep.subr.mxu0 0.0
    %2948 = vmatpush1.msra.mxu0 0.0
    %2949 = vmatprep.subr.mxu0 0.0
    %2950 = vmatpush1.msra.mxu0 0.0
    %2951 = vmatprep.subr.mxu0 0.0
    %2952 = vmatpush1.msra.mxu0 0.0
    %2953 = vmatprep.subr.mxu0 0.0
    %2954 = vmatpush1.msra.mxu0 0.0
    %2955 = vmatprep.subr.mxu0 0.0
    %2956 = vmatpush1.msra.mxu0 0.0
    %2957 = vmatprep.subr.mxu0 0.0
    %2958 = vmatpush1.msra.mxu0 0.0
    %2959 = vmatprep.subr.mxu0 0.0
    %2960 = vmatpush1.msra.mxu0 0.0
    %2961 = vmatprep.subr.mxu0 0.0
    %2962 = vmatpush1.msra.mxu0 0.0
    %2963 = vmatprep.subr.mxu0 0.0
    %2964 = vmatpush1.msra.mxu0 0.0
    %2965 = vmatprep.subr.mxu0 0.0
    %2966 = vmatpush1.msra.mxu0 0.0
    %2967 = vmatprep.subr.mxu0 0.0
    %2968 = vmatpush1.msra.mxu0 0.0
    %2969 = vmatprep.subr.mxu0 0.0
    %2970 = vmatpush1.msra.mxu0 0.0
    %2971 = vmatprep.subr.mxu0 0.0
    %2972 = vmatpush1.msra.mxu0 0.0
    %2973 = vmatprep.subr.mxu0 0.0
    %2974 = vmatpush1.msra.mxu0 0.0
    %2975 = vmatprep.subr.mxu0 0.0
    %2976 = vmatpush1.msra.mxu0 0.0
    %2977 = vmatprep.subr.mxu0 0.0
    %2978 = vmatpush1.msra.mxu0 0.0
    %2979 = vmatprep.subr.mxu0 0.0
    %2980 = vmatpush1.msra.mxu0 0.0
    %2981 = vmatprep.subr.mxu0 0.0
    %2982 = vmatpush1.msra.mxu0 0.0
    %2983 = vmatprep.subr.mxu0 0.0
    %2984 = vmatpush1.msra.mxu0 0.0
    %2985 = vmatprep.subr.mxu0 0.0
    %2986 = vmatpush1.msra.mxu0 0.0
    %2987 = vmatprep.subr.mxu0 0.0
    %2988 = vmatpush1.msra.mxu0 0.0
    %2989 = vmatprep.mubr.f32.mxu0 0.0
    %2990 = vmatmul.mubr.f32.gmra.mrb[0].mxu0 %v2658
    %v2991 = vpop.f32.mrb[0].mxu0
    %v2992 = vadd.f32 0.0, %v2991
    %v2993 = vpop.f32.mrb[0].mxu0
    %2994 = vdwg.mxu0
    %2995 = vmatprep.subr.mxu0 0.0
    %2996 = vmatpush1.msra.mxu0 %v2924
    %2997 = vmatprep.subr.mxu0 0.0
    %2998 = vmatpush1.msra.mxu0 0.0
    %2999 = vmatprep.subr.mxu0 0.0
    %3000 = vmatpush1.msra.mxu0 0.0
    %3001 = vmatprep.subr.mxu0 0.0
    %3002 = vmatpush1.msra.mxu0 0.0
    %3003 = vmatprep.subr.mxu0 0.0
    %3004 = vmatpush1.msra.mxu0 0.0
    %3005 = vmatprep.subr.mxu0 0.0
    %3006 = vmatpush1.msra.mxu0 0.0
    %3007 = vmatprep.subr.mxu0 0.0
    %3008 = vmatpush1.msra.mxu0 0.0
    %3009 = vmatprep.subr.mxu0 0.0
    %3010 = vmatpush1.msra.mxu0 0.0
    %3011 = vmatprep.subr.mxu0 0.0
    %3012 = vmatpush1.msra.mxu0 0.0
    %3013 = vmatprep.subr.mxu0 0.0
    %3014 = vmatpush1.msra.mxu0 0.0
    %3015 = vmatprep.subr.mxu0 0.0
    %3016 = vmatpush1.msra.mxu0 0.0
    %3017 = vmatprep.subr.mxu0 0.0
    %3018 = vmatpush1.msra.mxu0 0.0
    %3019 = vmatprep.subr.mxu0 0.0
    %3020 = vmatpush1.msra.mxu0 0.0
    %3021 = vmatprep.subr.mxu0 0.0
    %3022 = vmatpush1.msra.mxu0 0.0
    %3023 = vmatprep.subr.mxu0 0.0
    %3024 = vmatpush1.msra.mxu0 0.0
    %3025 = vmatprep.subr.mxu0 0.0
    %3026 = vmatpush1.msra.mxu0 0.0
    %3027 = vmatprep.subr.mxu0 0.0
    %3028 = vmatpush1.msra.mxu0 0.0
    %3029 = vmatprep.subr.mxu0 0.0
    %3030 = vmatpush1.msra.mxu0 0.0
    %3031 = vmatprep.subr.mxu0 0.0
    %3032 = vmatpush1.msra.mxu0 0.0
    %3033 = vmatprep.subr.mxu0 0.0
    %3034 = vmatpush1.msra.mxu0 0.0
    %3035 = vmatprep.subr.mxu0 0.0
    %3036 = vmatpush1.msra.mxu0 0.0
    %3037 = vmatprep.subr.mxu0 0.0
    %3038 = vmatpush1.msra.mxu0 0.0
    %3039 = vmatprep.subr.mxu0 0.0
    %3040 = vmatpush1.msra.mxu0 0.0
    %3041 = vmatprep.subr.mxu0 0.0
    %3042 = vmatpush1.msra.mxu0 0.0
    %3043 = vmatprep.subr.mxu0 0.0
    %3044 = vmatpush1.msra.mxu0 0.0
    %3045 = vmatprep.subr.mxu0 0.0
    %3046 = vmatpush1.msra.mxu0 0.0
    %3047 = vmatprep.subr.mxu0 0.0
    %3048 = vmatpush1.msra.mxu0 0.0
    %3049 = vmatprep.subr.mxu0 0.0
    %3050 = vmatpush1.msra.mxu0 0.0
    %3051 = vmatprep.subr.mxu0 0.0
    %3052 = vmatpush1.msra.mxu0 0.0
    %3053 = vmatprep.subr.mxu0 0.0
    %3054 = vmatpush1.msra.mxu0 0.0
    %3055 = vmatprep.subr.mxu0 0.0
    %3056 = vmatpush1.msra.mxu0 0.0
    %3057 = vmatprep.subr.mxu0 0.0
    %3058 = vmatpush1.msra.mxu0 0.0
    %3059 = vmatprep.mubr.f32.mxu0 0.0
    %3060 = vmatmul.mubr.f32.gmra.mrb[0].mxu0 %v2747
    %v3061 = vpop.f32.mrb[0].mxu0
    %v3062 = vadd.f32 0.0, %v3061
    %v3063 = vpop.f32.mrb[0].mxu0
    %3064 = vdwg.mxu0
    %v3065 = vld [vmem:[#allocation14] sm:$0xff]
    %v3066 = vld [vmem:[#allocation14 + $0x8] sm:$0xff]
    %v3067 = vld [vmem:[#allocation14 + $0x10] sm:$0xff]
    %v3068 = vld [vmem:[#allocation14 + $0x18] sm:$0xff]
    %v3069 = vld [vmem:[%s14] sm:$0x1]
    %v3071 = vlaneseq
    %v3072 = vshrl.u32 %v3071, 7
    %v3073 = vsub.s32 0, %v3072
    %v3074 = vrot.slane %v3069, %v3073
    %v3077 = vsel %vm207, %v2992, 0
    %v3080 = vsel %vm207, %v3062, 0
    %3082 = vmatprep.subr.mxu0 0.0
    %3083 = vmatpush1.msra.mxu0 %v3065
    %3084 = vmatprep.subr.mxu0 0.0
    %3085 = vmatpush1.msra.mxu0 %v3066
    %3086 = vmatprep.subr.mxu0 0.0
    %3087 = vmatpush1.msra.mxu0 %v3067
    %3088 = vmatprep.subr.mxu0 0.0
    %3089 = vmatpush1.msra.mxu0 %v3068
    %3090 = vmatprep.subr.mxu0 0.0
    %3091 = vmatpush1.msra.mxu0 0.0
    %3092 = vmatprep.subr.mxu0 0.0
    %3093 = vmatpush1.msra.mxu0 0.0
    %3094 = vmatprep.subr.mxu0 0.0
    %3095 = vmatpush1.msra.mxu0 0.0
    %3096 = vmatprep.subr.mxu0 0.0
    %3097 = vmatpush1.msra.mxu0 0.0
    %3098 = vmatprep.subr.mxu0 0.0
    %3099 = vmatpush1.msra.mxu0 0.0
    %3100 = vmatprep.subr.mxu0 0.0
    %3101 = vmatpush1.msra.mxu0 0.0
    %3102 = vmatprep.subr.mxu0 0.0
    %3103 = vmatpush1.msra.mxu0 0.0
    %3104 = vmatprep.subr.mxu0 0.0
    %3105 = vmatpush1.msra.mxu0 0.0
    %3106 = vmatprep.subr.mxu0 0.0
    %3107 = vmatpush1.msra.mxu0 0.0
    %3108 = vmatprep.subr.mxu0 0.0
    %3109 = vmatpush1.msra.mxu0 0.0
    %3110 = vmatprep.subr.mxu0 0.0
    %3111 = vmatpush1.msra.mxu0 0.0
    %3112 = vmatprep.subr.mxu0 0.0
    %3113 = vmatpush1.msra.mxu0 0.0
    %3114 = vmatprep.subr.mxu0 0.0
    %3115 = vmatpush1.msra.mxu0 0.0
    %3116 = vmatprep.subr.mxu0 0.0
    %3117 = vmatpush1.msra.mxu0 0.0
    %3118 = vmatprep.subr.mxu0 0.0
    %3119 = vmatpush1.msra.mxu0 0.0
    %3120 = vmatprep.subr.mxu0 0.0
    %3121 = vmatpush1.msra.mxu0 0.0
    %3122 = vmatprep.subr.mxu0 0.0
    %3123 = vmatpush1.msra.mxu0 0.0
    %3124 = vmatprep.subr.mxu0 0.0
    %3125 = vmatpush1.msra.mxu0 0.0
    %3126 = vmatprep.subr.mxu0 0.0
    %3127 = vmatpush1.msra.mxu0 0.0
    %3128 = vmatprep.subr.mxu0 0.0
    %3129 = vmatpush1.msra.mxu0 0.0
    %3130 = vmatprep.subr.mxu0 0.0
    %3131 = vmatpush1.msra.mxu0 0.0
    %3132 = vmatprep.subr.mxu0 0.0
    %3133 = vmatpush1.msra.mxu0 0.0
    %3134 = vmatprep.subr.mxu0 0.0
    %3135 = vmatpush1.msra.mxu0 0.0
    %3136 = vmatprep.subr.mxu0 0.0
    %3137 = vmatpush1.msra.mxu0 0.0
    %3138 = vmatprep.subr.mxu0 0.0
    %3139 = vmatpush1.msra.mxu0 0.0
    %3140 = vmatprep.subr.mxu0 0.0
    %3141 = vmatpush1.msra.mxu0 0.0
    %3142 = vmatprep.subr.mxu0 0.0
    %3143 = vmatpush1.msra.mxu0 0.0
    %3144 = vmatprep.subr.mxu0 0.0
    %3145 = vmatpush1.msra.mxu0 0.0
    %3146 = vmatprep.mubr.f32.mxu0 0.0
    %3147 = vmatmul.mubr.f32.gmra.mrb[0].mxu0 %v3077
    %v3148 = vpop.f32.mrb[0].mxu0
    %v3149 = vadd.f32 %v3074, %v3148
    %v3150 = vpop.f32.mrb[0].mxu0
    %3151 = vmatprep.mubr.f32.mxu0 0.0
    %3152 = vmatmul.mubr.f32.gmra.mrb[0].mxu0 %v3080
    %v3153 = vpop.f32.mrb[0].mxu0
    %v3154 = vadd.f32 %v3074, %v3153
    %v3155 = vpop.f32.mrb[0].mxu0
    %3156 = vdwg.mxu0
    %v3157 = vmul.f32 %v3149, %v2914
    %v3158 = vmul.f32 %v3154, %v2919
    %v3159 = vmax.f32 %v3157, 0.0
    %v3160 = vmax.f32 %v3158, 0.0
    %v3161 = vld [vmem:[%s3] sm:$0xff]
    %v3162 = vld [vmem:[%s3 + $0x8] sm:$0xff]
    %v3163 = vld [vmem:[#allocation10] sm:$0x3]
    %3165 = vset.pattern.permute.xlu0 0
    %3166 = vperm.xlu0 %3165, %v3161
    %v3167 = vpop.permute.xlu0 %3166
    %3170 = vset.pattern.permute.xlu0 0
    %3171 = vperm.xlu0 %3170, %v3162
    %v3172 = vpop.permute.xlu0 %3171
    %v3174 = vmul.f32 %v3159, %v3167
    %v3175 = vmul.f32 %v3160, %v3172
    %v3177 = vsel %vm495, %v3163, 0
    %3179 = vmatprep.subr.mxu0 0.0
    %3180 = vmatpush1.msra.mxu0 %v3174
    %3181 = vmatprep.subr.mxu0 0.0
    %3182 = vmatpush1.msra.mxu0 %v3175
    %3183 = vmatprep.subr.mxu0 0.0
    %3184 = vmatpush1.msra.mxu0 0.0
    %3185 = vmatprep.subr.mxu0 0.0
    %3186 = vmatpush1.msra.mxu0 0.0
    %3187 = vmatprep.subr.mxu0 0.0
    %3188 = vmatpush1.msra.mxu0 0.0
    %3189 = vmatprep.subr.mxu0 0.0
    %3190 = vmatpush1.msra.mxu0 0.0
    %3191 = vmatprep.subr.mxu0 0.0
    %3192 = vmatpush1.msra.mxu0 0.0
    %3193 = vmatprep.subr.mxu0 0.0
    %3194 = vmatpush1.msra.mxu0 0.0
    %3195 = vmatprep.subr.mxu0 0.0
    %3196 = vmatpush1.msra.mxu0 0.0
    %3197 = vmatprep.subr.mxu0 0.0
    %3198 = vmatpush1.msra.mxu0 0.0
    %3199 = vmatprep.subr.mxu0 0.0
    %3200 = vmatpush1.msra.mxu0 0.0
    %3201 = vmatprep.subr.mxu0 0.0
    %3202 = vmatpush1.msra.mxu0 0.0
    %3203 = vmatprep.subr.mxu0 0.0
    %3204 = vmatpush1.msra.mxu0 0.0
    %3205 = vmatprep.subr.mxu0 0.0
    %3206 = vmatpush1.msra.mxu0 0.0
    %3207 = vmatprep.subr.mxu0 0.0
    %3208 = vmatpush1.msra.mxu0 0.0
    %3209 = vmatprep.subr.mxu0 0.0
    %3210 = vmatpush1.msra.mxu0 0.0
    %3211 = vmatprep.subr.mxu0 0.0
    %3212 = vmatpush1.msra.mxu0 0.0
    %3213 = vmatprep.subr.mxu0 0.0
    %3214 = vmatpush1.msra.mxu0 0.0
    %3215 = vmatprep.subr.mxu0 0.0
    %3216 = vmatpush1.msra.mxu0 0.0
    %3217 = vmatprep.subr.mxu0 0.0
    %3218 = vmatpush1.msra.mxu0 0.0
    %3219 = vmatprep.subr.mxu0 0.0
    %3220 = vmatpush1.msra.mxu0 0.0
    %3221 = vmatprep.subr.mxu0 0.0
    %3222 = vmatpush1.msra.mxu0 0.0
    %3223 = vmatprep.subr.mxu0 0.0
    %3224 = vmatpush1.msra.mxu0 0.0
    %3225 = vmatprep.subr.mxu0 0.0
    %3226 = vmatpush1.msra.mxu0 0.0
    %3227 = vmatprep.subr.mxu0 0.0
    %3228 = vmatpush1.msra.mxu0 0.0
    %3229 = vmatprep.subr.mxu0 0.0
    %3230 = vmatpush1.msra.mxu0 0.0
    %3231 = vmatprep.subr.mxu0 0.0
    %3232 = vmatpush1.msra.mxu0 0.0
    %3233 = vmatprep.subr.mxu0 0.0
    %3234 = vmatpush1.msra.mxu0 0.0
    %3235 = vmatprep.subr.mxu0 0.0
    %3236 = vmatpush1.msra.mxu0 0.0
    %3237 = vmatprep.subr.mxu0 0.0
    %3238 = vmatpush1.msra.mxu0 0.0
    %3239 = vmatprep.subr.mxu0 0.0
    %3240 = vmatpush1.msra.mxu0 0.0
    %3241 = vmatprep.subr.mxu0 0.0
    %3242 = vmatpush1.msra.mxu0 0.0
    %3243 = vmatprep.mubr.f32.mxu0 0.0
    %3244 = vmatmul.mubr.f32.gmra.mrb[0].mxu0 %v3177
    %v3245 = vpop.f32.mrb[0].mxu0
    %v3246 = vadd.f32 0.0, %v3245
    %v3247 = vpop.f32.mrb[0].mxu0
    %3248 = vdwg.mxu0
    %3249 = vmatprep.subr.mxu0 0.0
    %3250 = vmatpush1.msra.mxu0 %v3161
    %3251 = vmatprep.subr.mxu0 0.0
    %3252 = vmatpush1.msra.mxu0 %v3162
    %3253 = vmatprep.subr.mxu0 0.0
    %3254 = vmatpush1.msra.mxu0 0.0
    %3255 = vmatprep.subr.mxu0 0.0
    %3256 = vmatpush1.msra.mxu0 0.0
    %3257 = vmatprep.subr.mxu0 0.0
    %3258 = vmatpush1.msra.mxu0 0.0
    %3259 = vmatprep.subr.mxu0 0.0
    %3260 = vmatpush1.msra.mxu0 0.0
    %3261 = vmatprep.subr.mxu0 0.0
    %3262 = vmatpush1.msra.mxu0 0.0
    %3263 = vmatprep.subr.mxu0 0.0
    %3264 = vmatpush1.msra.mxu0 0.0
    %3265 = vmatprep.subr.mxu0 0.0
    %3266 = vmatpush1.msra.mxu0 0.0
    %3267 = vmatprep.subr.mxu0 0.0
    %3268 = vmatpush1.msra.mxu0 0.0
    %3269 = vmatprep.subr.mxu0 0.0
    %3270 = vmatpush1.msra.mxu0 0.0
    %3271 = vmatprep.subr.mxu0 0.0
    %3272 = vmatpush1.msra.mxu0 0.0
    %3273 = vmatprep.subr.mxu0 0.0
    %3274 = vmatpush1.msra.mxu0 0.0
    %3275 = vmatprep.subr.mxu0 0.0
    %3276 = vmatpush1.msra.mxu0 0.0
    %3277 = vmatprep.subr.mxu0 0.0
    %3278 = vmatpush1.msra.mxu0 0.0
    %3279 = vmatprep.subr.mxu0 0.0
    %3280 = vmatpush1.msra.mxu0 0.0
    %3281 = vmatprep.subr.mxu0 0.0
    %3282 = vmatpush1.msra.mxu0 0.0
    %3283 = vmatprep.subr.mxu0 0.0
    %3284 = vmatpush1.msra.mxu0 0.0
    %3285 = vmatprep.subr.mxu0 0.0
    %3286 = vmatpush1.msra.mxu0 0.0
    %3287 = vmatprep.subr.mxu0 0.0
    %3288 = vmatpush1.msra.mxu0 0.0
    %3289 = vmatprep.subr.mxu0 0.0
    %3290 = vmatpush1.msra.mxu0 0.0
    %3291 = vmatprep.subr.mxu0 0.0
    %3292 = vmatpush1.msra.mxu0 0.0
    %3293 = vmatprep.subr.mxu0 0.0
    %3294 = vmatpush1.msra.mxu0 0.0
    %3295 = vmatprep.subr.mxu0 0.0
    %3296 = vmatpush1.msra.mxu0 0.0
    %3297 = vmatprep.subr.mxu0 0.0
    %3298 = vmatpush1.msra.mxu0 0.0
    %3299 = vmatprep.subr.mxu0 0.0
    %3300 = vmatpush1.msra.mxu0 0.0
    %3301 = vmatprep.subr.mxu0 0.0
    %3302 = vmatpush1.msra.mxu0 0.0
    %3303 = vmatprep.subr.mxu0 0.0
    %3304 = vmatpush1.msra.mxu0 0.0
    %3305 = vmatprep.subr.mxu0 0.0
    %3306 = vmatpush1.msra.mxu0 0.0
    %3307 = vmatprep.subr.mxu0 0.0
    %3308 = vmatpush1.msra.mxu0 0.0
    %3309 = vmatprep.subr.mxu0 0.0
    %3310 = vmatpush1.msra.mxu0 0.0
    %3311 = vmatprep.subr.mxu0 0.0
    %3312 = vmatpush1.msra.mxu0 0.0
    %3313 = vmatprep.mubr.f32.mxu0 0.0
    %3314 = vmatmul.mubr.f32.gmra.mrb[0].mxu0 %v3177
    %v3315 = vpop.f32.mrb[0].mxu0
    %v3316 = vadd.f32 0.0, %v3315
    %v3317 = vpop.f32.mrb[0].mxu0
    %3318 = vdwg.mxu0
    %v3319 = vmax.f32 %v3316, 1.0
    %v3320 = vrcp.pop %v3319
    %3322 = vset.pattern.permute.xlu0 0
    %3323 = vperm.xlu0 %3322, %v3320
    %v3324 = vpop.permute.xlu0 %3323
    %v3326 = vmul.f32 %v3246, %v3324
    %v3327 = vld [vmem:[%s15] sm:$0xff]
    %v3328 = vld [vmem:[%s15 + $0x8] sm:$0xff]
    %v3329 = vld [vmem:[%s15 + $0x10] sm:$0xff]
    %v3330 = vld [vmem:[%s15 + $0x18] sm:$0xff]
    %v3331 = vld [vmem:[%s16] sm:$0x1]
    %v3333 = vlaneseq
    %v3334 = vshrl.u32 %v3333, 7
    %v3335 = vsub.s32 0, %v3334
    %v3336 = vrot.slane %v3331, %v3335
    %v3339 = vsel %vm207, %v3326, 0
    %3341 = vmatprep.subr.mxu0 0.0
    %3342 = vmatpush1.msra.mxu0 %v3327
    %3343 = vmatprep.subr.mxu0 0.0
    %3344 = vmatpush1.msra.mxu0 %v3328
    %3345 = vmatprep.subr.mxu0 0.0
    %3346 = vmatpush1.msra.mxu0 %v3329
    %3347 = vmatprep.subr.mxu0 0.0
    %3348 = vmatpush1.msra.mxu0 %v3330
    %3349 = vmatprep.subr.mxu0 0.0
    %3350 = vmatpush1.msra.mxu0 0.0
    %3351 = vmatprep.subr.mxu0 0.0
    %3352 = vmatpush1.msra.mxu0 0.0
    %3353 = vmatprep.subr.mxu0 0.0
    %3354 = vmatpush1.msra.mxu0 0.0
    %3355 = vmatprep.subr.mxu0 0.0
    %3356 = vmatpush1.msra.mxu0 0.0
    %3357 = vmatprep.subr.mxu0 0.0
    %3358 = vmatpush1.msra.mxu0 0.0
    %3359 = vmatprep.subr.mxu0 0.0
    %3360 = vmatpush1.msra.mxu0 0.0
    %3361 = vmatprep.subr.mxu0 0.0
    %3362 = vmatpush1.msra.mxu0 0.0
    %3363 = vmatprep.subr.mxu0 0.0
    %3364 = vmatpush1.msra.mxu0 0.0
    %3365 = vmatprep.subr.mxu0 0.0
    %3366 = vmatpush1.msra.mxu0 0.0
    %3367 = vmatprep.subr.mxu0 0.0
    %3368 = vmatpush1.msra.mxu0 0.0
    %3369 = vmatprep.subr.mxu0 0.0
    %3370 = vmatpush1.msra.mxu0 0.0
    %3371 = vmatprep.subr.mxu0 0.0
    %3372 = vmatpush1.msra.mxu0 0.0
    %3373 = vmatprep.subr.mxu0 0.0
    %3374 = vmatpush1.msra.mxu0 0.0
    %3375 = vmatprep.subr.mxu0 0.0
    %3376 = vmatpush1.msra.mxu0 0.0
    %3377 = vmatprep.subr.mxu0 0.0
    %3378 = vmatpush1.msra.mxu0 0.0
    %3379 = vmatprep.subr.mxu0 0.0
    %3380 = vmatpush1.msra.mxu0 0.0
    %3381 = vmatprep.subr.mxu0 0.0
    %3382 = vmatpush1.msra.mxu0 0.0
    %3383 = vmatprep.subr.mxu0 0.0
    %3384 = vmatpush1.msra.mxu0 0.0
    %3385 = vmatprep.subr.mxu0 0.0
    %3386 = vmatpush1.msra.mxu0 0.0
    %3387 = vmatprep.subr.mxu0 0.0
    %3388 = vmatpush1.msra.mxu0 0.0
    %3389 = vmatprep.subr.mxu0 0.0
    %3390 = vmatpush1.msra.mxu0 0.0
    %3391 = vmatprep.subr.mxu0 0.0
    %3392 = vmatpush1.msra.mxu0 0.0
    %3393 = vmatprep.subr.mxu0 0.0
    %3394 = vmatpush1.msra.mxu0 0.0
    %3395 = vmatprep.subr.mxu0 0.0
    %3396 = vmatpush1.msra.mxu0 0.0
    %3397 = vmatprep.subr.mxu0 0.0
    %3398 = vmatpush1.msra.mxu0 0.0
    %3399 = vmatprep.subr.mxu0 0.0
    %3400 = vmatpush1.msra.mxu0 0.0
    %3401 = vmatprep.subr.mxu0 0.0
    %3402 = vmatpush1.msra.mxu0 0.0
    %3403 = vmatprep.subr.mxu0 0.0
    %3404 = vmatpush1.msra.mxu0 0.0
    %3405 = vmatprep.mubr.f32.mxu0 0.0
    %3406 = vmatmul.mubr.f32.gmra.mrb[0].mxu0 %v3339
    %v3407 = vpop.f32.mrb[0].mxu0
    %v3408 = vadd.f32 %v3336, %v3407
    %v3409 = vpop.f32.mrb[0].mxu0
    %3410 = vdwg.mxu0
    %vm3411 = vcmask 17408
    %3412 = vst.msk [vmem:[#allocation16] sm:$0x3] %vm3411, %v3408
    // Predicated region
    $region94: #{tpu_custom_call.1} parent=1 // pred_check
      _
    $region95: #{tpu_custom_call.1} parent=1 // pred_check_branch
      %3414 = sbr.rel (0) target = $region97
    $region96: #{tpu_custom_call.1} parent=1 // pred_region
      %s3416 = ssub.s32 32, 32
      %3417 = vsyncadd [#allocation7], %s3416
      %s3419 = sshll.u32 [#allocation16], 4
      %s3420 = int_to_ptr.vmem [resolvable:$true] %s3419
      %3422 = dma.vmem_to_hbm [thread:$0]  %s3420, 32, %s17, [#allocation7]
    $region97: #{tpu_custom_call.1} parent=1 // pred_fallthru
      _
    // Predicated region
    $region98: #{tpu_custom_call.1} parent=1 // pred_check
      _
    $region99: #{tpu_custom_call.1} parent=1 // pred_check_branch
      %3424 = sbr.rel (0) target = $region101
    $region100: #{tpu_custom_call.1} parent=1 // pred_region
      %3425 = dma.done [#allocation7], 32
    $region101: #{tpu_custom_call.1} parent=1 // pred_fallthru
      _
    %3426 = vsyncpa [#allocation6], 1
    %3427 = vsyncpa [#allocation9], 1
    %3428 = vsyncpa [#allocation12], 1
    %3429 = vsyncpa [#allocation15], 1
    %3430 = vsyncpa [#allocation7], 1

</llo_original>
